<compile_context>
chip_gen: v7x
topology: tpu7x:2x2x1
jax: 0.10.0
libtpu: 0.0.40
codegen_flags: <defaults>
</compile_context>

<pallas_src>
import numpy as np
import jax
import jax.numpy as jnp
from jax.experimental import pallas as pl
from jax.experimental.pallas import tpu as pltpu

# --------------------------- model hyper-params (small) -----------------------
BATCH = 2
Z_DIM = 32
HIDDEN = 32
ADJ_SIZE = (8, 8)                 # generator1 image size
ROLL_SIZE = (2, 16, 16)           # discriminator input (C, H, W)
G2_INPUT_DIM = 16                 # BeatGenerator input_dim
G2_OUTPUT_DIM = 8                 # BeatGenerator output_dim
DISC_HIDDEN = 16
IM_CHAN = 1
BN_EPS = 1e-5
KSIZE, STRIDE, PADDING = 4, 2, 1

H1, W1 = ROLL_SIZE[1] // 2, ROLL_SIZE[2] // 2      # conv1 output spatial (8, 8)
H2, W2 = H1 // 2, W1 // 2                          # conv2 output spatial (4, 4)
C1 = DISC_HIDDEN                                   # conv1 out channels (16)
C2 = DISC_HIDDEN * 2                               # conv2 out channels (32)
G1_OUT_DIM = IM_CHAN * ADJ_SIZE[0] * ADJ_SIZE[1]   # 64
FINAL_SIZE = C2 * H2 * W2                          # 512
PAD = 128                                          # lane-dense width of gen MLP slabs
N_GEN_LAYERS = 8                                   # 4 per generator

GEN1_DIMS = [2 * Z_DIM, HIDDEN * 4, HIDDEN * 2, HIDDEN, G1_OUT_DIM]
GEN2_DIMS = [Z_DIM + G2_INPUT_DIM, HIDDEN * 4, HIDDEN * 2, HIDDEN, G2_OUTPUT_DIM]


def _vmem():
    return pl.BlockSpec(memory_space=pltpu.MemorySpace.VMEM)


# ------------------------------ fused Pallas kernel ---------------------------
def _mmgan_kernel(g1_in_ref, g2_in_ref, gen_w_ref, gen_p_ref,
                  dw1_ref, db1_ref, dw2_ref, daux_ref, out_ref):
    def gen_block(x, li):
        # Linear (bias dropped: zero-init and cancelled by BN mean subtraction)
        # -> BatchNorm1d (training-mode biased batch stats) -> Sigmoid.
        w = gen_w_ref[li]                               # (128, 128), zero-padded
        p = gen_p_ref[li]                               # (2, 128): [gamma; beta]
        h = jnp.dot(x, w, preferred_element_type=jnp.float32)
        # independent sublane reductions (shorter latency chain than mean->(h-m)^2)
        mean = jnp.mean(h, axis=0, keepdims=True)
        msq = jnp.mean(h * h, axis=0, keepdims=True)
        var = jnp.maximum(msq - mean * mean, 0.0)       # clamp fp cancellation
        y = (h - mean) * jax.lax.rsqrt(var + BN_EPS) * p[0:1, :] + p[1:2, :]
        # sigmoid(y) == 0.5*(tanh(y/2)+1): runs on the EUP slot.
        return 0.5 * (jnp.tanh(0.5 * y) + 1.0)

    # --- both generators, lane-dense 128-wide (padded lanes hold sigmoid(0)=0.5,
    #     annihilated by the zero-padded weight rows of the next layer) ---------
    x1 = g1_in_ref[...]
    x2 = g2_in_ref[...]
    for li in range(4):
        x1 = gen_block(x1, li)
        x2 = gen_block(x2, 4 + li)
    g1 = x1[:, :G1_OUT_DIM]                             # (B, 64) valid lanes
    g2 = x2[:, :G2_OUTPUT_DIM]                          # (B, 8)  valid lanes

    # --- discriminator in batch-rows (B, features) layout ---------------------
    # conv1 (+ placeholder roll + zero-pad + im2col) folded into dw1;
    # output columns ordered (p1, c1) = (h1*W1 + w1)*C1 + c1.
    y1 = (jnp.dot(g1, dw1_ref[0:G1_OUT_DIM, :], preferred_element_type=jnp.float32)
          + jnp.dot(g2, dw1_ref[G1_OUT_DIM:G1_OUT_DIM + G2_OUTPUT_DIM, :],
                    preferred_element_type=jnp.float32)
          + db1_ref[...])
    y1 = jnp.where(y1 > 0, y1, 0.2 * y1)                # LeakyReLU(0.2), (B, 1024)

    aux = daux_ref[...]                                 # (3, 512): [conv2 bias; fc w; fc b]
    # conv2 folded into ONE dense lane-dense matmul; columns (p2, o2).
    y2 = jnp.dot(y1, dw2_ref[...], preferred_element_type=jnp.float32) + aux[0:1, :]
    y2 = jnp.where(y2 > 0, y2, 0.2 * y2)                # (B, 512)

    # final FC over torch x.view(B,-1) order: fc weight pre-permuted to (p2, o2).
    dots = jnp.sum(y2 * aux[1:2, :], axis=1, keepdims=True)      # (B, 1)
    out_ref[...] = dots + aux[2:3, 0:1]


def mmgan_pallas_call(g1_in, g2_in, packed):
    B = g1_in.shape[0]
    args = (g1_in, g2_in, packed["gen_w"], packed["gen_p"],
            packed["dw1"], packed["db1"], packed["dw2"], packed["daux"])
    nbytes = 4 * (sum(int(a.size) for a in args) + B)
    flops = (N_GEN_LAYERS * 2 * B * PAD * PAD
             + 2 * B * G1_OUT_DIM * H1 * W1 * C1
             + 2 * B * G2_OUTPUT_DIM * H1 * W1 * C1
             + 2 * B * H1 * W1 * C1 * FINAL_SIZE
             + 4 * B * FINAL_SIZE)
    trans = N_GEN_LAYERS * (B + 1) * PAD
    return pl.pallas_call(
        _mmgan_kernel,
        out_shape=jax.ShapeDtypeStruct((B, 1), jnp.float32),
        in_specs=[_vmem() for _ in args],
        out_specs=_vmem(),
        cost_estimate=pl.CostEstimate(flops=int(flops), transcendentals=int(trans),
                                      bytes_accessed=int(nbytes)),
    )(*args)


# ------------------------------- forward --------------------------------------
def multimodal_gan_forward(packed, noise1, noise2, input_tensor, rand_key):
    B = noise1.shape[0]
    # generator1's input_tensor is None in the reference -> torch.randn stand-in.
    it1 = jax.random.normal(rand_key, (B, Z_DIM), jnp.float32)
    g1_cat = jnp.concatenate([noise1, it1], axis=1)               # (B, 64)
    g2_cat = jnp.concatenate([noise2, input_tensor], axis=1)      # (B, 48)
    g1_in = jnp.pad(g1_cat, ((0, 0), (0, PAD - g1_cat.shape[1])))
    g2_in = jnp.pad(g2_cat, ((0, 0), (0, PAD - g2_cat.shape[1])))
    disc_out = mmgan_pallas_call(g1_in, g2_in, packed)            # (B, 1)
    failed_sim_count = jnp.int32(0)
    return disc_out, failed_sim_count


# --------------------------- deterministic raw params -------------------------
def _xavier(key, shape):
    fan_in, fan_out = shape
    std = (2.0 / (fan_in + fan_out)) ** 0.5
    return std * jax.random.normal(key, shape, jnp.float32)


def make_raw_params(key):
    ks = jax.random.split(key, 6)

    def mlp(k, dims):
        layers = []
        for din, dout in zip(dims[:-1], dims[1:]):
            k, kw = jax.random.split(k)
            layers.append({"w": _xavier(kw, (din, dout)),          # stored (din, dout)
                           "gamma": jnp.ones((dout,), jnp.float32),
                           "beta": jnp.zeros((dout,), jnp.float32)})
        return layers

    return {
        "gen1": mlp(ks[0], GEN1_DIMS),
        "gen2": mlp(ks[1], GEN2_DIMS),
        # Conv weights kept in the torch Conv2d layout (Cout, Cin, KH, KW);
        # weights_init uses normal(mean=0, std=1) for Conv2d weights.
        "conv1_w": jax.random.normal(ks[2], (C1, ROLL_SIZE[0], KSIZE, KSIZE), jnp.float32),
        "conv1_b": jnp.zeros((C1,), jnp.float32),
        "conv2_w": jax.random.normal(ks[3], (C2, C1, KSIZE, KSIZE), jnp.float32),
        "conv2_b": jnp.zeros((C2,), jnp.float32),
        # fc weight in torch x.view(B,-1) order: index = o2*(H2*W2) + h2*W2 + w2
        "fc_w": _xavier(ks[4], (FINAL_SIZE, 1))[:, 0],
        "fc_b": jnp.zeros((), jnp.float32),
    }


# ------------- one-time host-side parameter packing / composition -------------
def pack_params(raw):
    """Runs once on the host (numpy) outside the jitted forward."""
    # generator slabs: zero-padded (REQUIRED: padded activation lanes hold 0.5).
    gen_layers = raw["gen1"] + raw["gen2"]
    gen_w = np.zeros((N_GEN_LAYERS, PAD, PAD), np.float32)
    gen_p = np.zeros((N_GEN_LAYERS, 2, PAD), np.float32)
    for i, layer in enumerate(gen_layers):
        w = np.asarray(layer["w"], np.float32)
        din, dout = w.shape
        gen_w[i, :din, :dout] = w
        gen_p[i, 0, :dout] = np.asarray(layer["gamma"], np.float32)
        gen_p[i, 1, :dout] = np.asarray(layer["beta"], np.float32)

    w1 = np.asarray(raw["conv1_w"], np.float32)       # (16, 2, 4, 4)
    b1 = np.asarray(raw["conv1_b"], np.float32)
    w2 = np.asarray(raw["conv2_w"], np.float32)       # (32, 16, 4, 4)
    b2 = np.asarray(raw["conv2_b"], np.float32)
    fcw = np.asarray(raw["fc_w"], np.float32)         # (512,), torch view order
    fcb = float(raw["fc_b"])

    # dw1: composition of [placeholder roll from (g1_out, g2_out)] -> zero-pad ->
    #      conv1(k4, s2, p1).  Row f<64 <- g1_out[:, f]; row 64+f <- g2_out[:, f].
    #      roll ch0[h, w] = g1_out[(h%8)*8 + (w%8)]; roll ch1[h, w] = g2_out[w%8].
    dw1 = np.zeros((G1_OUT_DIM + G2_OUTPUT_DIM, H1 * W1 * C1), np.float32)
    for h1 in range(H1):
        for w1o in range(W1):
            p1 = h1 * W1 + w1o
            for kh in range(KSIZE):
                for kw in range(KSIZE):
                    hh = STRIDE * h1 - PADDING + kh
                    ww = STRIDE * w1o - PADDING + kw
                    if 0 <= hh < ROLL_SIZE[1] and 0 <= ww < ROLL_SIZE[2]:
                        f1 = (hh % ADJ_SIZE[0]) * ADJ_SIZE[1] + (ww % ADJ_SIZE[1])
                        f2 = ww % G2_OUTPUT_DIM
                        dw1[f1, p1 * C1:(p1 + 1) * C1] += w1[:, 0, kh, kw]
                        dw1[G1_OUT_DIM + f2, p1 * C1:(p1 + 1) * C1] += w1[:, 1, kh, kw]
    db1 = np.tile(b1, H1 * W1)[None, :]               # (1, 1024)

    # dw2: conv2(k4, s2, p1) as a dense (p1, c1) x (p2, o2) matrix
    #      (zero rows where the receptive field falls in the padding).
    dw2 = np.zeros((H1 * W1 * C1, H2 * W2 * C2), np.float32)
    for h2 in range(H2):
        for w2o in range(W2):
            p2 = h2 * W2 + w2o
            for kh in range(KSIZE):
                for kw in range(KSIZE):
                    hh = STRIDE * h2 - PADDING + kh
                    ww = STRIDE * w2o - PADDING + kw
                    if 0 <= hh < H1 and 0 <= ww < W1:
                        p1 = hh * W1 + ww
                        dw2[p1 * C1:(p1 + 1) * C1,
                            p2 * C2:(p2 + 1) * C2] += w2[:, :, kh, kw].T   # (c1, o2)

    daux = np.zeros((3, FINAL_SIZE), np.float32)
    daux[0] = np.tile(b2, H2 * W2)                              # conv2 bias in (p2, o2) order
    daux[1] = fcw.reshape(C2, H2 * W2).T.reshape(-1)            # fc w: (o2, p2) -> (p2, o2)
    daux[2, 0] = fcb

    packed = dict(gen_w=gen_w, gen_p=gen_p, dw1=dw1, db1=db1, dw2=dw2, daux=daux)
    return {k: jnp.asarray(v) for k, v in packed.items()}


# ----------------------------------- main --------------------------------------
if __name__ == "__main__":
    root = jax.random.PRNGKey(0)
    k_params, k_n1, k_n2, k_it, k_rand = jax.random.split(root, 5)

    raw_params = make_raw_params(k_params)
    packed = pack_params(raw_params)

    noise1 = jax.random.normal(k_n1, (BATCH, Z_DIM), jnp.float32)
    noise2 = jax.random.normal(k_n2, (BATCH, Z_DIM), jnp.float32)
    input_tensor = jax.random.normal(k_it, (BATCH, G2_INPUT_DIM), jnp.float32)

    fwd = jax.jit(multimodal_gan_forward)
    disc_out, failed = fwd(packed, noise1, noise2, input_tensor, k_rand)
    jax.block_until_ready(disc_out)

    assert disc_out.shape == (BATCH, 1)
    assert bool(jnp.all(jnp.isfinite(disc_out)))
    print("KERNEL_OK")
</pallas_src>

<mosaic_0001>
module attributes {stable_mosaic.version = 11 : i64} {
  func.func @_mmgan_kernel(%arg0: memref<2x128xf32, #tpu.memory_space<vmem>>, %arg1: memref<2x128xf32, #tpu.memory_space<vmem>>, %arg2: memref<8x128x128xf32, #tpu.memory_space<vmem>>, %arg3: memref<8x2x128xf32, #tpu.memory_space<vmem>>, %arg4: memref<72x1024xf32, #tpu.memory_space<vmem>>, %arg5: memref<1x1024xf32, #tpu.memory_space<vmem>>, %arg6: memref<1024x512xf32, #tpu.memory_space<vmem>>, %arg7: memref<3x512xf32, #tpu.memory_space<vmem>>, %arg8: memref<2x1xf32, #tpu.memory_space<vmem>>) attributes {dimension_semantics = [], scalar_prefetch = 0 : i64, scratch_operands = 0 : i64, tpu.core_type = #tpu.core_type<tc>} {
    %c0 = arith.constant 0 : index
    %c0_0 = arith.constant 0 : index
    %0 = vector.load %arg0[%c0, %c0_0] : memref<2x128xf32, #tpu.memory_space<vmem>>, vector<2x128xf32>
    %c0_1 = arith.constant 0 : index
    %c0_2 = arith.constant 0 : index
    %1 = vector.load %arg1[%c0_1, %c0_2] : memref<2x128xf32, #tpu.memory_space<vmem>>, vector<2x128xf32>
    %c0_3 = arith.constant 0 : index
    %c0_4 = arith.constant 0 : index
    %c0_5 = arith.constant 0 : index
    %2 = vector.load %arg2[%c0_3, %c0_4, %c0_5] : memref<8x128x128xf32, #tpu.memory_space<vmem>>, vector<1x128x128xf32>
    %3 = vector.shape_cast %2 : vector<1x128x128xf32> to vector<128x128xf32>
    %c0_6 = arith.constant 0 : index
    %c0_7 = arith.constant 0 : index
    %c0_8 = arith.constant 0 : index
    %4 = vector.load %arg3[%c0_6, %c0_7, %c0_8] : memref<8x2x128xf32, #tpu.memory_space<vmem>>, vector<1x2x128xf32>
    %5 = vector.shape_cast %4 : vector<1x2x128xf32> to vector<2x128xf32>
    %cst = arith.constant dense<0.000000e+00> : vector<2x128xf32>
    %6 = tpu.matmul %0, %3, %cst {dimension_numbers = #tpu.dot_dimension_numbers<[1], [0], [0], [1], [0, 0, 1, 1], [], []>} : vector<2x128xf32>, vector<128x128xf32>, vector<2x128xf32> -> vector<2x128xf32>
    %cst_9 = arith.constant dense<0.000000e+00> : vector<128xf32>
    %7 = vector.multi_reduction <add>, %6, %cst_9 [0] : vector<2x128xf32> to vector<128xf32>
    %8 = vector.shape_cast %7 : vector<128xf32> to vector<1x128xf32>
    %cst_10 = arith.constant 2.000000e+00 : f32
    %9 = vector.broadcast %cst_10 : f32 to vector<1x128xf32>
    %10 = arith.divf %8, %9 : vector<1x128xf32>
    %11 = arith.mulf %6, %6 : vector<2x128xf32>
    %cst_11 = arith.constant dense<0.000000e+00> : vector<128xf32>
    %12 = vector.multi_reduction <add>, %11, %cst_11 [0] : vector<2x128xf32> to vector<128xf32>
    %13 = vector.shape_cast %12 : vector<128xf32> to vector<1x128xf32>
    %cst_12 = arith.constant 2.000000e+00 : f32
    %14 = vector.broadcast %cst_12 : f32 to vector<1x128xf32>
    %15 = arith.divf %13, %14 : vector<1x128xf32>
    %16 = arith.mulf %10, %10 : vector<1x128xf32>
    %17 = arith.subf %15, %16 : vector<1x128xf32>
    %cst_13 = arith.constant 0.000000e+00 : f32
    %18 = vector.broadcast %cst_13 : f32 to vector<1x128xf32>
    %19 = arith.maximumf %17, %18 : vector<1x128xf32>
    %20 = vector.broadcast %10 : vector<1x128xf32> to vector<2x128xf32>
    %21 = arith.subf %6, %20 : vector<2x128xf32>
    %cst_14 = arith.constant 9.99999974E-6 : f32
    %22 = vector.broadcast %cst_14 : f32 to vector<1x128xf32>
    %23 = arith.addf %19, %22 : vector<1x128xf32>
    %24 = math.rsqrt %23 : vector<1x128xf32>
    %25 = vector.broadcast %24 : vector<1x128xf32> to vector<2x128xf32>
    %26 = arith.mulf %21, %25 : vector<2x128xf32>
    %27 = vector.extract_strided_slice %5 {offsets = [0, 0], sizes = [1, 128], strides = [1, 1]} : vector<2x128xf32> to vector<1x128xf32>
    %28 = vector.broadcast %27 : vector<1x128xf32> to vector<2x128xf32>
    %29 = arith.mulf %26, %28 : vector<2x128xf32>
    %30 = vector.extract_strided_slice %5 {offsets = [1, 0], sizes = [1, 128], strides = [1, 1]} : vector<2x128xf32> to vector<1x128xf32>
    %31 = vector.broadcast %30 : vector<1x128xf32> to vector<2x128xf32>
    %32 = arith.addf %29, %31 : vector<2x128xf32>
    %cst_15 = arith.constant 5.000000e-01 : f32
    %33 = vector.broadcast %cst_15 : f32 to vector<2x128xf32>
    %34 = arith.mulf %33, %32 : vector<2x128xf32>
    %35 = math.tanh %34 : vector<2x128xf32>
    %cst_16 = arith.constant 1.000000e+00 : f32
    %36 = vector.broadcast %cst_16 : f32 to vector<2x128xf32>
    %37 = arith.addf %35, %36 : vector<2x128xf32>
    %cst_17 = arith.constant 5.000000e-01 : f32
    %38 = vector.broadcast %cst_17 : f32 to vector<2x128xf32>
    %39 = arith.mulf %38, %37 : vector<2x128xf32>
    %c4 = arith.constant 4 : index
    %c0_18 = arith.constant 0 : index
    %c0_19 = arith.constant 0 : index
    %40 = vector.load %arg2[%c4, %c0_18, %c0_19] : memref<8x128x128xf32, #tpu.memory_space<vmem>>, vector<1x128x128xf32>
    %41 = vector.shape_cast %40 : vector<1x128x128xf32> to vector<128x128xf32>
    %c4_20 = arith.constant 4 : index
    %c0_21 = arith.constant 0 : index
    %c0_22 = arith.constant 0 : index
    %42 = vector.load %arg3[%c4_20, %c0_21, %c0_22] : memref<8x2x128xf32, #tpu.memory_space<vmem>>, vector<1x2x128xf32>
    %43 = vector.shape_cast %42 : vector<1x2x128xf32> to vector<2x128xf32>
    %cst_23 = arith.constant dense<0.000000e+00> : vector<2x128xf32>
    %44 = tpu.matmul %1, %41, %cst_23 {dimension_numbers = #tpu.dot_dimension_numbers<[1], [0], [0], [1], [0, 0, 1, 1], [], []>} : vector<2x128xf32>, vector<128x128xf32>, vector<2x128xf32> -> vector<2x128xf32>
    %cst_24 = arith.constant dense<0.000000e+00> : vector<128xf32>
    %45 = vector.multi_reduction <add>, %44, %cst_24 [0] : vector<2x128xf32> to vector<128xf32>
    %46 = vector.shape_cast %45 : vector<128xf32> to vector<1x128xf32>
    %cst_25 = arith.constant 2.000000e+00 : f32
    %47 = vector.broadcast %cst_25 : f32 to vector<1x128xf32>
    %48 = arith.divf %46, %47 : vector<1x128xf32>
    %49 = arith.mulf %44, %44 : vector<2x128xf32>
    %cst_26 = arith.constant dense<0.000000e+00> : vector<128xf32>
    %50 = vector.multi_reduction <add>, %49, %cst_26 [0] : vector<2x128xf32> to vector<128xf32>
    %51 = vector.shape_cast %50 : vector<128xf32> to vector<1x128xf32>
    %cst_27 = arith.constant 2.000000e+00 : f32
    %52 = vector.broadcast %cst_27 : f32 to vector<1x128xf32>
    %53 = arith.divf %51, %52 : vector<1x128xf32>
    %54 = arith.mulf %48, %48 : vector<1x128xf32>
    %55 = arith.subf %53, %54 : vector<1x128xf32>
    %cst_28 = arith.constant 0.000000e+00 : f32
    %56 = vector.broadcast %cst_28 : f32 to vector<1x128xf32>
    %57 = arith.maximumf %55, %56 : vector<1x128xf32>
    %58 = vector.broadcast %48 : vector<1x128xf32> to vector<2x128xf32>
    %59 = arith.subf %44, %58 : vector<2x128xf32>
    %cst_29 = arith.constant 9.99999974E-6 : f32
    %60 = vector.broadcast %cst_29 : f32 to vector<1x128xf32>
    %61 = arith.addf %57, %60 : vector<1x128xf32>
    %62 = math.rsqrt %61 : vector<1x128xf32>
    %63 = vector.broadcast %62 : vector<1x128xf32> to vector<2x128xf32>
    %64 = arith.mulf %59, %63 : vector<2x128xf32>
    %65 = vector.extract_strided_slice %43 {offsets = [0, 0], sizes = [1, 128], strides = [1, 1]} : vector<2x128xf32> to vector<1x128xf32>
    %66 = vector.broadcast %65 : vector<1x128xf32> to vector<2x128xf32>
    %67 = arith.mulf %64, %66 : vector<2x128xf32>
    %68 = vector.extract_strided_slice %43 {offsets = [1, 0], sizes = [1, 128], strides = [1, 1]} : vector<2x128xf32> to vector<1x128xf32>
    %69 = vector.broadcast %68 : vector<1x128xf32> to vector<2x128xf32>
    %70 = arith.addf %67, %69 : vector<2x128xf32>
    %cst_30 = arith.constant 5.000000e-01 : f32
    %71 = vector.broadcast %cst_30 : f32 to vector<2x128xf32>
    %72 = arith.mulf %71, %70 : vector<2x128xf32>
    %73 = math.tanh %72 : vector<2x128xf32>
    %cst_31 = arith.constant 1.000000e+00 : f32
    %74 = vector.broadcast %cst_31 : f32 to vector<2x128xf32>
    %75 = arith.addf %73, %74 : vector<2x128xf32>
    %cst_32 = arith.constant 5.000000e-01 : f32
    %76 = vector.broadcast %cst_32 : f32 to vector<2x128xf32>
    %77 = arith.mulf %76, %75 : vector<2x128xf32>
    %c1 = arith.constant 1 : index
    %c0_33 = arith.constant 0 : index
    %c0_34 = arith.constant 0 : index
    %78 = vector.load %arg2[%c1, %c0_33, %c0_34] : memref<8x128x128xf32, #tpu.memory_space<vmem>>, vector<1x128x128xf32>
    %79 = vector.shape_cast %78 : vector<1x128x128xf32> to vector<128x128xf32>
    %c1_35 = arith.constant 1 : index
    %c0_36 = arith.constant 0 : index
    %c0_37 = arith.constant 0 : index
    %80 = vector.load %arg3[%c1_35, %c0_36, %c0_37] : memref<8x2x128xf32, #tpu.memory_space<vmem>>, vector<1x2x128xf32>
    %81 = vector.shape_cast %80 : vector<1x2x128xf32> to vector<2x128xf32>
    %cst_38 = arith.constant dense<0.000000e+00> : vector<2x128xf32>
    %82 = tpu.matmul %39, %79, %cst_38 {dimension_numbers = #tpu.dot_dimension_numbers<[1], [0], [0], [1], [0, 0, 1, 1], [], []>} : vector<2x128xf32>, vector<128x128xf32>, vector<2x128xf32> -> vector<2x128xf32>
    %cst_39 = arith.constant dense<0.000000e+00> : vector<128xf32>
    %83 = vector.multi_reduction <add>, %82, %cst_39 [0] : vector<2x128xf32> to vector<128xf32>
    %84 = vector.shape_cast %83 : vector<128xf32> to vector<1x128xf32>
    %cst_40 = arith.constant 2.000000e+00 : f32
    %85 = vector.broadcast %cst_40 : f32 to vector<1x128xf32>
    %86 = arith.divf %84, %85 : vector<1x128xf32>
    %87 = arith.mulf %82, %82 : vector<2x128xf32>
    %cst_41 = arith.constant dense<0.000000e+00> : vector<128xf32>
    %88 = vector.multi_reduction <add>, %87, %cst_41 [0] : vector<2x128xf32> to vector<128xf32>
    %89 = vector.shape_cast %88 : vector<128xf32> to vector<1x128xf32>
    %cst_42 = arith.constant 2.000000e+00 : f32
    %90 = vector.broadcast %cst_42 : f32 to vector<1x128xf32>
    %91 = arith.divf %89, %90 : vector<1x128xf32>
    %92 = arith.mulf %86, %86 : vector<1x128xf32>
    %93 = arith.subf %91, %92 : vector<1x128xf32>
    %cst_43 = arith.constant 0.000000e+00 : f32
    %94 = vector.broadcast %cst_43 : f32 to vector<1x128xf32>
    %95 = arith.maximumf %93, %94 : vector<1x128xf32>
    %96 = vector.broadcast %86 : vector<1x128xf32> to vector<2x128xf32>
    %97 = arith.subf %82, %96 : vector<2x128xf32>
    %cst_44 = arith.constant 9.99999974E-6 : f32
    %98 = vector.broadcast %cst_44 : f32 to vector<1x128xf32>
    %99 = arith.addf %95, %98 : vector<1x128xf32>
    %100 = math.rsqrt %99 : vector<1x128xf32>
    %101 = vector.broadcast %100 : vector<1x128xf32> to vector<2x128xf32>
    %102 = arith.mulf %97, %101 : vector<2x128xf32>
    %103 = vector.extract_strided_slice %81 {offsets = [0, 0], sizes = [1, 128], strides = [1, 1]} : vector<2x128xf32> to vector<1x128xf32>
    %104 = vector.broadcast %103 : vector<1x128xf32> to vector<2x128xf32>
    %105 = arith.mulf %102, %104 : vector<2x128xf32>
    %106 = vector.extract_strided_slice %81 {offsets = [1, 0], sizes = [1, 128], strides = [1, 1]} : vector<2x128xf32> to vector<1x128xf32>
    %107 = vector.broadcast %106 : vector<1x128xf32> to vector<2x128xf32>
    %108 = arith.addf %105, %107 : vector<2x128xf32>
    %cst_45 = arith.constant 5.000000e-01 : f32
    %109 = vector.broadcast %cst_45 : f32 to vector<2x128xf32>
    %110 = arith.mulf %109, %108 : vector<2x128xf32>
    %111 = math.tanh %110 : vector<2x128xf32>
    %cst_46 = arith.constant 1.000000e+00 : f32
    %112 = vector.broadcast %cst_46 : f32 to vector<2x128xf32>
    %113 = arith.addf %111, %112 : vector<2x128xf32>
    %cst_47 = arith.constant 5.000000e-01 : f32
    %114 = vector.broadcast %cst_47 : f32 to vector<2x128xf32>
    %115 = arith.mulf %114, %113 : vector<2x128xf32>
    %c5 = arith.constant 5 : index
    %c0_48 = arith.constant 0 : index
    %c0_49 = arith.constant 0 : index
    %116 = vector.load %arg2[%c5, %c0_48, %c0_49] : memref<8x128x128xf32, #tpu.memory_space<vmem>>, vector<1x128x128xf32>
    %117 = vector.shape_cast %116 : vector<1x128x128xf32> to vector<128x128xf32>
    %c5_50 = arith.constant 5 : index
    %c0_51 = arith.constant 0 : index
    %c0_52 = arith.constant 0 : index
    %118 = vector.load %arg3[%c5_50, %c0_51, %c0_52] : memref<8x2x128xf32, #tpu.memory_space<vmem>>, vector<1x2x128xf32>
    %119 = vector.shape_cast %118 : vector<1x2x128xf32> to vector<2x128xf32>
    %cst_53 = arith.constant dense<0.000000e+00> : vector<2x128xf32>
    %120 = tpu.matmul %77, %117, %cst_53 {dimension_numbers = #tpu.dot_dimension_numbers<[1], [0], [0], [1], [0, 0, 1, 1], [], []>} : vector<2x128xf32>, vector<128x128xf32>, vector<2x128xf32> -> vector<2x128xf32>
    %cst_54 = arith.constant dense<0.000000e+00> : vector<128xf32>
    %121 = vector.multi_reduction <add>, %120, %cst_54 [0] : vector<2x128xf32> to vector<128xf32>
    %122 = vector.shape_cast %121 : vector<128xf32> to vector<1x128xf32>
    %cst_55 = arith.constant 2.000000e+00 : f32
    %123 = vector.broadcast %cst_55 : f32 to vector<1x128xf32>
    %124 = arith.divf %122, %123 : vector<1x128xf32>
    %125 = arith.mulf %120, %120 : vector<2x128xf32>
    %cst_56 = arith.constant dense<0.000000e+00> : vector<128xf32>
    %126 = vector.multi_reduction <add>, %125, %cst_56 [0] : vector<2x128xf32> to vector<128xf32>
    %127 = vector.shape_cast %126 : vector<128xf32> to vector<1x128xf32>
    %cst_57 = arith.constant 2.000000e+00 : f32
    %128 = vector.broadcast %cst_57 : f32 to vector<1x128xf32>
    %129 = arith.divf %127, %128 : vector<1x128xf32>
    %130 = arith.mulf %124, %124 : vector<1x128xf32>
    %131 = arith.subf %129, %130 : vector<1x128xf32>
    %cst_58 = arith.constant 0.000000e+00 : f32
    %132 = vector.broadcast %cst_58 : f32 to vector<1x128xf32>
    %133 = arith.maximumf %131, %132 : vector<1x128xf32>
    %134 = vector.broadcast %124 : vector<1x128xf32> to vector<2x128xf32>
    %135 = arith.subf %120, %134 : vector<2x128xf32>
    %cst_59 = arith.constant 9.99999974E-6 : f32
    %136 = vector.broadcast %cst_59 : f32 to vector<1x128xf32>
    %137 = arith.addf %133, %136 : vector<1x128xf32>
    %138 = math.rsqrt %137 : vector<1x128xf32>
    %139 = vector.broadcast %138 : vector<1x128xf32> to vector<2x128xf32>
    %140 = arith.mulf %135, %139 : vector<2x128xf32>
    %141 = vector.extract_strided_slice %119 {offsets = [0, 0], sizes = [1, 128], strides = [1, 1]} : vector<2x128xf32> to vector<1x128xf32>
    %142 = vector.broadcast %141 : vector<1x128xf32> to vector<2x128xf32>
    %143 = arith.mulf %140, %142 : vector<2x128xf32>
    %144 = vector.extract_strided_slice %119 {offsets = [1, 0], sizes = [1, 128], strides = [1, 1]} : vector<2x128xf32> to vector<1x128xf32>
    %145 = vector.broadcast %144 : vector<1x128xf32> to vector<2x128xf32>
    %146 = arith.addf %143, %145 : vector<2x128xf32>
    %cst_60 = arith.constant 5.000000e-01 : f32
    %147 = vector.broadcast %cst_60 : f32 to vector<2x128xf32>
    %148 = arith.mulf %147, %146 : vector<2x128xf32>
    %149 = math.tanh %148 : vector<2x128xf32>
    %cst_61 = arith.constant 1.000000e+00 : f32
    %150 = vector.broadcast %cst_61 : f32 to vector<2x128xf32>
    %151 = arith.addf %149, %150 : vector<2x128xf32>
    %cst_62 = arith.constant 5.000000e-01 : f32
    %152 = vector.broadcast %cst_62 : f32 to vector<2x128xf32>
    %153 = arith.mulf %152, %151 : vector<2x128xf32>
    %c2 = arith.constant 2 : index
    %c0_63 = arith.constant 0 : index
    %c0_64 = arith.constant 0 : index
    %154 = vector.load %arg2[%c2, %c0_63, %c0_64] : memref<8x128x128xf32, #tpu.memory_space<vmem>>, vector<1x128x128xf32>
    %155 = vector.shape_cast %154 : vector<1x128x128xf32> to vector<128x128xf32>
    %c2_65 = arith.constant 2 : index
    %c0_66 = arith.constant 0 : index
    %c0_67 = arith.constant 0 : index
    %156 = vector.load %arg3[%c2_65, %c0_66, %c0_67] : memref<8x2x128xf32, #tpu.memory_space<vmem>>, vector<1x2x128xf32>
    %157 = vector.shape_cast %156 : vector<1x2x128xf32> to vector<2x128xf32>
    %cst_68 = arith.constant dense<0.000000e+00> : vector<2x128xf32>
    %158 = tpu.matmul %115, %155, %cst_68 {dimension_numbers = #tpu.dot_dimension_numbers<[1], [0], [0], [1], [0, 0, 1, 1], [], []>} : vector<2x128xf32>, vector<128x128xf32>, vector<2x128xf32> -> vector<2x128xf32>
    %cst_69 = arith.constant dense<0.000000e+00> : vector<128xf32>
    %159 = vector.multi_reduction <add>, %158, %cst_69 [0] : vector<2x128xf32> to vector<128xf32>
    %160 = vector.shape_cast %159 : vector<128xf32> to vector<1x128xf32>
    %cst_70 = arith.constant 2.000000e+00 : f32
    %161 = vector.broadcast %cst_70 : f32 to vector<1x128xf32>
    %162 = arith.divf %160, %161 : vector<1x128xf32>
    %163 = arith.mulf %158, %158 : vector<2x128xf32>
    %cst_71 = arith.constant dense<0.000000e+00> : vector<128xf32>
    %164 = vector.multi_reduction <add>, %163, %cst_71 [0] : vector<2x128xf32> to vector<128xf32>
    %165 = vector.shape_cast %164 : vector<128xf32> to vector<1x128xf32>
    %cst_72 = arith.constant 2.000000e+00 : f32
    %166 = vector.broadcast %cst_72 : f32 to vector<1x128xf32>
    %167 = arith.divf %165, %166 : vector<1x128xf32>
    %168 = arith.mulf %162, %162 : vector<1x128xf32>
    %169 = arith.subf %167, %168 : vector<1x128xf32>
    %cst_73 = arith.constant 0.000000e+00 : f32
    %170 = vector.broadcast %cst_73 : f32 to vector<1x128xf32>
    %171 = arith.maximumf %169, %170 : vector<1x128xf32>
    %172 = vector.broadcast %162 : vector<1x128xf32> to vector<2x128xf32>
    %173 = arith.subf %158, %172 : vector<2x128xf32>
    %cst_74 = arith.constant 9.99999974E-6 : f32
    %174 = vector.broadcast %cst_74 : f32 to vector<1x128xf32>
    %175 = arith.addf %171, %174 : vector<1x128xf32>
    %176 = math.rsqrt %175 : vector<1x128xf32>
    %177 = vector.broadcast %176 : vector<1x128xf32> to vector<2x128xf32>
    %178 = arith.mulf %173, %177 : vector<2x128xf32>
    %179 = vector.extract_strided_slice %157 {offsets = [0, 0], sizes = [1, 128], strides = [1, 1]} : vector<2x128xf32> to vector<1x128xf32>
    %180 = vector.broadcast %179 : vector<1x128xf32> to vector<2x128xf32>
    %181 = arith.mulf %178, %180 : vector<2x128xf32>
    %182 = vector.extract_strided_slice %157 {offsets = [1, 0], sizes = [1, 128], strides = [1, 1]} : vector<2x128xf32> to vector<1x128xf32>
    %183 = vector.broadcast %182 : vector<1x128xf32> to vector<2x128xf32>
    %184 = arith.addf %181, %183 : vector<2x128xf32>
    %cst_75 = arith.constant 5.000000e-01 : f32
    %185 = vector.broadcast %cst_75 : f32 to vector<2x128xf32>
    %186 = arith.mulf %185, %184 : vector<2x128xf32>
    %187 = math.tanh %186 : vector<2x128xf32>
    %cst_76 = arith.constant 1.000000e+00 : f32
    %188 = vector.broadcast %cst_76 : f32 to vector<2x128xf32>
    %189 = arith.addf %187, %188 : vector<2x128xf32>
    %cst_77 = arith.constant 5.000000e-01 : f32
    %190 = vector.broadcast %cst_77 : f32 to vector<2x128xf32>
    %191 = arith.mulf %190, %189 : vector<2x128xf32>
    %c6 = arith.constant 6 : index
    %c0_78 = arith.constant 0 : index
    %c0_79 = arith.constant 0 : index
    %192 = vector.load %arg2[%c6, %c0_78, %c0_79] : memref<8x128x128xf32, #tpu.memory_space<vmem>>, vector<1x128x128xf32>
    %193 = vector.shape_cast %192 : vector<1x128x128xf32> to vector<128x128xf32>
    %c6_80 = arith.constant 6 : index
    %c0_81 = arith.constant 0 : index
    %c0_82 = arith.constant 0 : index
    %194 = vector.load %arg3[%c6_80, %c0_81, %c0_82] : memref<8x2x128xf32, #tpu.memory_space<vmem>>, vector<1x2x128xf32>
    %195 = vector.shape_cast %194 : vector<1x2x128xf32> to vector<2x128xf32>
    %cst_83 = arith.constant dense<0.000000e+00> : vector<2x128xf32>
    %196 = tpu.matmul %153, %193, %cst_83 {dimension_numbers = #tpu.dot_dimension_numbers<[1], [0], [0], [1], [0, 0, 1, 1], [], []>} : vector<2x128xf32>, vector<128x128xf32>, vector<2x128xf32> -> vector<2x128xf32>
    %cst_84 = arith.constant dense<0.000000e+00> : vector<128xf32>
    %197 = vector.multi_reduction <add>, %196, %cst_84 [0] : vector<2x128xf32> to vector<128xf32>
    %198 = vector.shape_cast %197 : vector<128xf32> to vector<1x128xf32>
    %cst_85 = arith.constant 2.000000e+00 : f32
    %199 = vector.broadcast %cst_85 : f32 to vector<1x128xf32>
    %200 = arith.divf %198, %199 : vector<1x128xf32>
    %201 = arith.mulf %196, %196 : vector<2x128xf32>
    %cst_86 = arith.constant dense<0.000000e+00> : vector<128xf32>
    %202 = vector.multi_reduction <add>, %201, %cst_86 [0] : vector<2x128xf32> to vector<128xf32>
    %203 = vector.shape_cast %202 : vector<128xf32> to vector<1x128xf32>
    %cst_87 = arith.constant 2.000000e+00 : f32
    %204 = vector.broadcast %cst_87 : f32 to vector<1x128xf32>
    %205 = arith.divf %203, %204 : vector<1x128xf32>
    %206 = arith.mulf %200, %200 : vector<1x128xf32>
    %207 = arith.subf %205, %206 : vector<1x128xf32>
    %cst_88 = arith.constant 0.000000e+00 : f32
    %208 = vector.broadcast %cst_88 : f32 to vector<1x128xf32>
    %209 = arith.maximumf %207, %208 : vector<1x128xf32>
    %210 = vector.broadcast %200 : vector<1x128xf32> to vector<2x128xf32>
    %211 = arith.subf %196, %210 : vector<2x128xf32>
    %cst_89 = arith.constant 9.99999974E-6 : f32
    %212 = vector.broadcast %cst_89 : f32 to vector<1x128xf32>
    %213 = arith.addf %209, %212 : vector<1x128xf32>
    %214 = math.rsqrt %213 : vector<1x128xf32>
    %215 = vector.broadcast %214 : vector<1x128xf32> to vector<2x128xf32>
    %216 = arith.mulf %211, %215 : vector<2x128xf32>
    %217 = vector.extract_strided_slice %195 {offsets = [0, 0], sizes = [1, 128], strides = [1, 1]} : vector<2x128xf32> to vector<1x128xf32>
    %218 = vector.broadcast %217 : vector<1x128xf32> to vector<2x128xf32>
    %219 = arith.mulf %216, %218 : vector<2x128xf32>
    %220 = vector.extract_strided_slice %195 {offsets = [1, 0], sizes = [1, 128], strides = [1, 1]} : vector<2x128xf32> to vector<1x128xf32>
    %221 = vector.broadcast %220 : vector<1x128xf32> to vector<2x128xf32>
    %222 = arith.addf %219, %221 : vector<2x128xf32>
    %cst_90 = arith.constant 5.000000e-01 : f32
    %223 = vector.broadcast %cst_90 : f32 to vector<2x128xf32>
    %224 = arith.mulf %223, %222 : vector<2x128xf32>
    %225 = math.tanh %224 : vector<2x128xf32>
    %cst_91 = arith.constant 1.000000e+00 : f32
    %226 = vector.broadcast %cst_91 : f32 to vector<2x128xf32>
    %227 = arith.addf %225, %226 : vector<2x128xf32>
    %cst_92 = arith.constant 5.000000e-01 : f32
    %228 = vector.broadcast %cst_92 : f32 to vector<2x128xf32>
    %229 = arith.mulf %228, %227 : vector<2x128xf32>
    %c3 = arith.constant 3 : index
    %c0_93 = arith.constant 0 : index
    %c0_94 = arith.constant 0 : index
    %230 = vector.load %arg2[%c3, %c0_93, %c0_94] : memref<8x128x128xf32, #tpu.memory_space<vmem>>, vector<1x128x128xf32>
    %231 = vector.shape_cast %230 : vector<1x128x128xf32> to vector<128x128xf32>
    %c3_95 = arith.constant 3 : index
    %c0_96 = arith.constant 0 : index
    %c0_97 = arith.constant 0 : index
    %232 = vector.load %arg3[%c3_95, %c0_96, %c0_97] : memref<8x2x128xf32, #tpu.memory_space<vmem>>, vector<1x2x128xf32>
    %233 = vector.shape_cast %232 : vector<1x2x128xf32> to vector<2x128xf32>
    %cst_98 = arith.constant dense<0.000000e+00> : vector<2x128xf32>
    %234 = tpu.matmul %191, %231, %cst_98 {dimension_numbers = #tpu.dot_dimension_numbers<[1], [0], [0], [1], [0, 0, 1, 1], [], []>} : vector<2x128xf32>, vector<128x128xf32>, vector<2x128xf32> -> vector<2x128xf32>
    %cst_99 = arith.constant dense<0.000000e+00> : vector<128xf32>
    %235 = vector.multi_reduction <add>, %234, %cst_99 [0] : vector<2x128xf32> to vector<128xf32>
    %236 = vector.shape_cast %235 : vector<128xf32> to vector<1x128xf32>
    %cst_100 = arith.constant 2.000000e+00 : f32
    %237 = vector.broadcast %cst_100 : f32 to vector<1x128xf32>
    %238 = arith.divf %236, %237 : vector<1x128xf32>
    %239 = arith.mulf %234, %234 : vector<2x128xf32>
    %cst_101 = arith.constant dense<0.000000e+00> : vector<128xf32>
    %240 = vector.multi_reduction <add>, %239, %cst_101 [0] : vector<2x128xf32> to vector<128xf32>
    %241 = vector.shape_cast %240 : vector<128xf32> to vector<1x128xf32>
    %cst_102 = arith.constant 2.000000e+00 : f32
    %242 = vector.broadcast %cst_102 : f32 to vector<1x128xf32>
    %243 = arith.divf %241, %242 : vector<1x128xf32>
    %244 = arith.mulf %238, %238 : vector<1x128xf32>
    %245 = arith.subf %243, %244 : vector<1x128xf32>
    %cst_103 = arith.constant 0.000000e+00 : f32
    %246 = vector.broadcast %cst_103 : f32 to vector<1x128xf32>
    %247 = arith.maximumf %245, %246 : vector<1x128xf32>
    %248 = vector.broadcast %238 : vector<1x128xf32> to vector<2x128xf32>
    %249 = arith.subf %234, %248 : vector<2x128xf32>
    %cst_104 = arith.constant 9.99999974E-6 : f32
    %250 = vector.broadcast %cst_104 : f32 to vector<1x128xf32>
    %251 = arith.addf %247, %250 : vector<1x128xf32>
    %252 = math.rsqrt %251 : vector<1x128xf32>
    %253 = vector.broadcast %252 : vector<1x128xf32> to vector<2x128xf32>
    %254 = arith.mulf %249, %253 : vector<2x128xf32>
    %255 = vector.extract_strided_slice %233 {offsets = [0, 0], sizes = [1, 128], strides = [1, 1]} : vector<2x128xf32> to vector<1x128xf32>
    %256 = vector.broadcast %255 : vector<1x128xf32> to vector<2x128xf32>
    %257 = arith.mulf %254, %256 : vector<2x128xf32>
    %258 = vector.extract_strided_slice %233 {offsets = [1, 0], sizes = [1, 128], strides = [1, 1]} : vector<2x128xf32> to vector<1x128xf32>
    %259 = vector.broadcast %258 : vector<1x128xf32> to vector<2x128xf32>
    %260 = arith.addf %257, %259 : vector<2x128xf32>
    %cst_105 = arith.constant 5.000000e-01 : f32
    %261 = vector.broadcast %cst_105 : f32 to vector<2x128xf32>
    %262 = arith.mulf %261, %260 : vector<2x128xf32>
    %263 = math.tanh %262 : vector<2x128xf32>
    %cst_106 = arith.constant 1.000000e+00 : f32
    %264 = vector.broadcast %cst_106 : f32 to vector<2x128xf32>
    %265 = arith.addf %263, %264 : vector<2x128xf32>
    %cst_107 = arith.constant 5.000000e-01 : f32
    %266 = vector.broadcast %cst_107 : f32 to vector<2x128xf32>
    %267 = arith.mulf %266, %265 : vector<2x128xf32>
    %c7 = arith.constant 7 : index
    %c0_108 = arith.constant 0 : index
    %c0_109 = arith.constant 0 : index
    %268 = vector.load %arg2[%c7, %c0_108, %c0_109] : memref<8x128x128xf32, #tpu.memory_space<vmem>>, vector<1x128x128xf32>
    %269 = vector.shape_cast %268 : vector<1x128x128xf32> to vector<128x128xf32>
    %c7_110 = arith.constant 7 : index
    %c0_111 = arith.constant 0 : index
    %c0_112 = arith.constant 0 : index
    %270 = vector.load %arg3[%c7_110, %c0_111, %c0_112] : memref<8x2x128xf32, #tpu.memory_space<vmem>>, vector<1x2x128xf32>
    %271 = vector.shape_cast %270 : vector<1x2x128xf32> to vector<2x128xf32>
    %cst_113 = arith.constant dense<0.000000e+00> : vector<2x128xf32>
    %272 = tpu.matmul %229, %269, %cst_113 {dimension_numbers = #tpu.dot_dimension_numbers<[1], [0], [0], [1], [0, 0, 1, 1], [], []>} : vector<2x128xf32>, vector<128x128xf32>, vector<2x128xf32> -> vector<2x128xf32>
    %cst_114 = arith.constant dense<0.000000e+00> : vector<128xf32>
    %273 = vector.multi_reduction <add>, %272, %cst_114 [0] : vector<2x128xf32> to vector<128xf32>
    %274 = vector.shape_cast %273 : vector<128xf32> to vector<1x128xf32>
    %cst_115 = arith.constant 2.000000e+00 : f32
    %275 = vector.broadcast %cst_115 : f32 to vector<1x128xf32>
    %276 = arith.divf %274, %275 : vector<1x128xf32>
    %277 = arith.mulf %272, %272 : vector<2x128xf32>
    %cst_116 = arith.constant dense<0.000000e+00> : vector<128xf32>
    %278 = vector.multi_reduction <add>, %277, %cst_116 [0] : vector<2x128xf32> to vector<128xf32>
    %279 = vector.shape_cast %278 : vector<128xf32> to vector<1x128xf32>
    %cst_117 = arith.constant 2.000000e+00 : f32
    %280 = vector.broadcast %cst_117 : f32 to vector<1x128xf32>
    %281 = arith.divf %279, %280 : vector<1x128xf32>
    %282 = arith.mulf %276, %276 : vector<1x128xf32>
    %283 = arith.subf %281, %282 : vector<1x128xf32>
    %cst_118 = arith.constant 0.000000e+00 : f32
    %284 = vector.broadcast %cst_118 : f32 to vector<1x128xf32>
    %285 = arith.maximumf %283, %284 : vector<1x128xf32>
    %286 = vector.broadcast %276 : vector<1x128xf32> to vector<2x128xf32>
    %287 = arith.subf %272, %286 : vector<2x128xf32>
    %cst_119 = arith.constant 9.99999974E-6 : f32
    %288 = vector.broadcast %cst_119 : f32 to vector<1x128xf32>
    %289 = arith.addf %285, %288 : vector<1x128xf32>
    %290 = math.rsqrt %289 : vector<1x128xf32>
    %291 = vector.broadcast %290 : vector<1x128xf32> to vector<2x128xf32>
    %292 = arith.mulf %287, %291 : vector<2x128xf32>
    %293 = vector.extract_strided_slice %271 {offsets = [0, 0], sizes = [1, 128], strides = [1, 1]} : vector<2x128xf32> to vector<1x128xf32>
    %294 = vector.broadcast %293 : vector<1x128xf32> to vector<2x128xf32>
    %295 = arith.mulf %292, %294 : vector<2x128xf32>
    %296 = vector.extract_strided_slice %271 {offsets = [1, 0], sizes = [1, 128], strides = [1, 1]} : vector<2x128xf32> to vector<1x128xf32>
    %297 = vector.broadcast %296 : vector<1x128xf32> to vector<2x128xf32>
    %298 = arith.addf %295, %297 : vector<2x128xf32>
    %cst_120 = arith.constant 5.000000e-01 : f32
    %299 = vector.broadcast %cst_120 : f32 to vector<2x128xf32>
    %300 = arith.mulf %299, %298 : vector<2x128xf32>
    %301 = math.tanh %300 : vector<2x128xf32>
    %cst_121 = arith.constant 1.000000e+00 : f32
    %302 = vector.broadcast %cst_121 : f32 to vector<2x128xf32>
    %303 = arith.addf %301, %302 : vector<2x128xf32>
    %cst_122 = arith.constant 5.000000e-01 : f32
    %304 = vector.broadcast %cst_122 : f32 to vector<2x128xf32>
    %305 = arith.mulf %304, %303 : vector<2x128xf32>
    %306 = vector.extract_strided_slice %267 {offsets = [0, 0], sizes = [2, 64], strides = [1, 1]} : vector<2x128xf32> to vector<2x64xf32>
    %307 = vector.extract_strided_slice %305 {offsets = [0, 0], sizes = [2, 8], strides = [1, 1]} : vector<2x128xf32> to vector<2x8xf32>
    %c0_123 = arith.constant 0 : index
    %c0_124 = arith.constant 0 : index
    %308 = vector.load %arg4[%c0_123, %c0_124] : memref<72x1024xf32, #tpu.memory_space<vmem>>, vector<64x1024xf32>
    %cst_125 = arith.constant dense<0.000000e+00> : vector<2x1024xf32>
    %309 = tpu.matmul %306, %308, %cst_125 {dimension_numbers = #tpu.dot_dimension_numbers<[1], [0], [0], [1], [0, 0, 1, 1], [], []>} : vector<2x64xf32>, vector<64x1024xf32>, vector<2x1024xf32> -> vector<2x1024xf32>
    %c64 = arith.constant 64 : index
    %c0_126 = arith.constant 0 : index
    %310 = vector.load %arg4[%c64, %c0_126] : memref<72x1024xf32, #tpu.memory_space<vmem>>, vector<8x1024xf32>
    %cst_127 = arith.constant dense<0.000000e+00> : vector<2x1024xf32>
    %311 = tpu.matmul %307, %310, %cst_127 {dimension_numbers = #tpu.dot_dimension_numbers<[1], [0], [0], [1], [0, 0, 1, 1], [], []>} : vector<2x8xf32>, vector<8x1024xf32>, vector<2x1024xf32> -> vector<2x1024xf32>
    %312 = arith.addf %309, %311 : vector<2x1024xf32>
    %c0_128 = arith.constant 0 : index
    %c0_129 = arith.constant 0 : index
    %313 = vector.load %arg5[%c0_128, %c0_129] : memref<1x1024xf32, #tpu.memory_space<vmem>>, vector<1x1024xf32>
    %314 = vector.broadcast %313 : vector<1x1024xf32> to vector<2x1024xf32>
    %315 = arith.addf %312, %314 : vector<2x1024xf32>
    %cst_130 = arith.constant 0.000000e+00 : f32
    %316 = vector.broadcast %cst_130 : f32 to vector<2x1024xf32>
    %317 = arith.cmpf ogt, %315, %316 : vector<2x1024xf32>
    %cst_131 = arith.constant 2.000000e-01 : f32
    %318 = vector.broadcast %cst_131 : f32 to vector<2x1024xf32>
    %319 = arith.mulf %318, %315 : vector<2x1024xf32>
    %320 = arith.select %317, %315, %319 : vector<2x1024xi1>, vector<2x1024xf32>
    %c0_132 = arith.constant 0 : index
    %c0_133 = arith.constant 0 : index
    %321 = vector.load %arg7[%c0_132, %c0_133] : memref<3x512xf32, #tpu.memory_space<vmem>>, vector<3x512xf32>
    %c0_134 = arith.constant 0 : index
    %c0_135 = arith.constant 0 : index
    %322 = vector.load %arg6[%c0_134, %c0_135] : memref<1024x512xf32, #tpu.memory_space<vmem>>, vector<1024x512xf32>
    %cst_136 = arith.constant dense<0.000000e+00> : vector<2x512xf32>
    %323 = tpu.matmul %320, %322, %cst_136 {dimension_numbers = #tpu.dot_dimension_numbers<[1], [0], [0], [1], [0, 0, 1, 1], [], []>} : vector<2x1024xf32>, vector<1024x512xf32>, vector<2x512xf32> -> vector<2x512xf32>
    %324 = vector.extract_strided_slice %321 {offsets = [0, 0], sizes = [1, 512], strides = [1, 1]} : vector<3x512xf32> to vector<1x512xf32>
    %325 = vector.broadcast %324 : vector<1x512xf32> to vector<2x512xf32>
    %326 = arith.addf %323, %325 : vector<2x512xf32>
    %cst_137 = arith.constant 0.000000e+00 : f32
    %327 = vector.broadcast %cst_137 : f32 to vector<2x512xf32>
    %328 = arith.cmpf ogt, %326, %327 : vector<2x512xf32>
    %cst_138 = arith.constant 2.000000e-01 : f32
    %329 = vector.broadcast %cst_138 : f32 to vector<2x512xf32>
    %330 = arith.mulf %329, %326 : vector<2x512xf32>
    %331 = arith.select %328, %326, %330 : vector<2x512xi1>, vector<2x512xf32>
    %332 = vector.extract_strided_slice %321 {offsets = [1, 0], sizes = [1, 512], strides = [1, 1]} : vector<3x512xf32> to vector<1x512xf32>
    %333 = vector.broadcast %332 : vector<1x512xf32> to vector<2x512xf32>
    %334 = arith.mulf %331, %333 : vector<2x512xf32>
    %cst_139 = arith.constant dense<0.000000e+00> : vector<2xf32>
    %335 = vector.multi_reduction <add>, %334, %cst_139 [1] : vector<2x512xf32> to vector<2xf32>
    %336 = vector.shape_cast %335 : vector<2xf32> to vector<2x1xf32>
    %337 = vector.extract_strided_slice %321 {offsets = [2, 0], sizes = [1, 1], strides = [1, 1]} : vector<3x512xf32> to vector<1x1xf32>
    %338 = vector.broadcast %337 : vector<1x1xf32> to vector<2x1xf32>
    %339 = arith.addf %336, %338 : vector<2x1xf32>
    %c0_140 = arith.constant 0 : index
    %c0_141 = arith.constant 0 : index
    %340 = vector.load %arg8[%c0_140, %c0_141] : memref<2x1xf32, #tpu.memory_space<vmem>>, vector<2x1xf32>
    tpu.vector_store %arg8[%c0_140, %c0_141], %339 {strides = array<i32>} : memref<2x1xf32, #tpu.memory_space<vmem>>, vector<2x1xf32>,
    return
  }
}

</mosaic_0001>

<llo_original>
// kernel: multimodal_gan_forward.1
$region0: #{multimodal_gan_forward.1}
  #allocation0 [shape = 'u32[]', space=smem, size = 0x4, offset = 0x4, fixed_abs, tag = 'smem constant byte address 0x4 - core index']
  #allocation1 [shape = 'u32[144,128]{1,0:T(1,128)}', space=vmem, size = 0x12000, scoped, tag = 'internal scratch']
  %s0 = inlined_call_operand.vmem [shape: f32[2,128], index: 0, kind: input, shape index: {}]
  %s1 = inlined_call_operand.vmem [shape: f32[2,128], index: 1, kind: input, shape index: {}]
  %s2 = inlined_call_operand.hbm [shape: f32[8,128,128], index: 2, kind: input, shape index: {}]
  %s3 = inlined_call_operand.hbm [shape: f32[8,2,128], index: 3, kind: input, shape index: {}]
  %s4 = inlined_call_operand.hbm [shape: f32[72,1024], index: 4, kind: input, shape index: {}]
  %s5 = inlined_call_operand.hbm [shape: f32[1,1024], index: 5, kind: input, shape index: {}]
  %s6 = inlined_call_operand.hbm [shape: f32[1024,512], index: 6, kind: input, shape index: {}]
  %s7 = inlined_call_operand.hbm [shape: f32[3,512], index: 7, kind: input, shape index: {}]
  %s8 = inlined_call_operand.vmem [shape: f32[2,1], index: 8, kind: output, shape index: {}]
  %s9 = sld [smem:[#allocation0]]
  $region66: #{multimodal_gan_forward.1} parent=0
    _
  %s11 = ssub.s32 1, %s9
  %s12 = scalar_select 0, %s11, %s9
  $region1: #{multimodal_gan_forward.1} parent=0
    #allocation2 [shape = 'u8[524288]{0}', space=vmem, size = 0x80000, scoped, tag = 'input window, operand 2, single buffered']
    #allocation3 [shape = 's32[1]{0}', space=sflag, size = 0x4, scoped, tag = 'scoped memory for multimodal_gan_forward.1']
    #allocation4 [shape = 'u8[8192]{0}', space=vmem, size = 0x2000, scoped, tag = 'input window, operand 3, single buffered']
    #allocation5 [shape = 's32[1]{0}', space=sflag, size = 0x4, scoped, tag = 'scoped memory for multimodal_gan_forward.1']
    #allocation6 [shape = 'u8[294912]{0}', space=vmem, size = 0x48000, scoped, tag = 'input window, operand 4, single buffered']
    #allocation7 [shape = 'u8[4096]{0}', space=vmem, size = 0x1000, scoped, tag = 'input window, operand 5, single buffered']
    #allocation8 [shape = 's32[1]{0}', space=sflag, size = 0x4, scoped, tag = 'scoped memory for multimodal_gan_forward.1']
    #allocation9 [shape = 'u8[2097152]{0}', space=vmem, size = 0x200000, scoped, tag = 'input window, operand 6, single buffered']
    #allocation10 [shape = 'u8[8192]{0}', space=vmem, size = 0x2000, scoped, tag = 'input window, operand 7, single buffered']
    #allocation11 [shape = 's32[1]{0}', space=sflag, size = 0x4, scoped, tag = 'scoped memory for multimodal_gan_forward.1']
    %13 = vsyncpa [#allocation3], 0
    %14 = vsyncpa [#allocation5], 0
    %15 = vsyncpa [#allocation8], 0
    %16 = vsyncpa [#allocation11], 0
    // Predicated region
    $region2: #{multimodal_gan_forward.1} parent=1 // pred_check
      _
    $region3: #{multimodal_gan_forward.1} parent=1 // pred_check_branch
      %18 = sbr.rel (0) target = $region5
    $region4: #{multimodal_gan_forward.1} parent=1 // pred_region
      _
    $region5: #{multimodal_gan_forward.1} parent=1 // pred_fallthru
      _
    // Predicated region
    $region6: #{multimodal_gan_forward.1} parent=1 // pred_check
      _
    $region7: #{multimodal_gan_forward.1} parent=1 // pred_check_branch
      %20 = sbr.rel (0) target = $region9
    $region8: #{multimodal_gan_forward.1} parent=1 // pred_region
      _
    $region9: #{multimodal_gan_forward.1} parent=1 // pred_fallthru
      _
    // Predicated region
    $region10: #{multimodal_gan_forward.1} parent=1 // pred_check
      _
    $region11: #{multimodal_gan_forward.1} parent=1 // pred_check_branch
      %22 = sbr.rel (0) target = $region13
    $region12: #{multimodal_gan_forward.1} parent=1 // pred_region
      %s24 = ssub.s32 16384, 16384
      %25 = vsyncadd [#allocation3], %s24
      %s26 = sshll.u32 [#allocation2], 4
      %s27 = int_to_ptr.vmem [resolvable:$true] %s26
      %32 = dma.hbm_to_vmem [thread:$0]  %s2, 16384, %s27, [#allocation3], 128, 128, 8
    $region13: #{multimodal_gan_forward.1} parent=1 // pred_fallthru
      _
    // Predicated region
    $region14: #{multimodal_gan_forward.1} parent=1 // pred_check
      _
    $region15: #{multimodal_gan_forward.1} parent=1 // pred_check_branch
      %34 = sbr.rel (0) target = $region17
    $region16: #{multimodal_gan_forward.1} parent=1 // pred_region
      %s36 = ssub.s32 256, 256
      %37 = vsyncadd [#allocation5], %s36
      %s38 = sshll.u32 [#allocation4], 4
      %s39 = int_to_ptr.vmem [resolvable:$true] %s38
      %44 = dma.hbm_to_vmem [thread:$0]  %s3, 256, %s39, [#allocation5], 32, 32, 2
    $region17: #{multimodal_gan_forward.1} parent=1 // pred_fallthru
      _
    // Predicated region
    $region18: #{multimodal_gan_forward.1} parent=1 // pred_check
      _
    $region19: #{multimodal_gan_forward.1} parent=1 // pred_check_branch
      %46 = sbr.rel (0) target = $region21
    $region20: #{multimodal_gan_forward.1} parent=1 // pred_region
      %s48 = ssub.s32 9216, 9216
      %49 = vsyncadd [#allocation5], %s48
      %s50 = sshll.u32 [#allocation6], 4
      %s51 = int_to_ptr.vmem [resolvable:$true] %s50
      %56 = dma.hbm_to_vmem [thread:$0]  %s4, 9216, %s51, [#allocation5], 1024, 1024, 64
    $region21: #{multimodal_gan_forward.1} parent=1 // pred_fallthru
      _
    // Predicated region
    $region22: #{multimodal_gan_forward.1} parent=1 // pred_check
      _
    $region23: #{multimodal_gan_forward.1} parent=1 // pred_check_branch
      %58 = sbr.rel (0) target = $region25
    $region24: #{multimodal_gan_forward.1} parent=1 // pred_region
      %s60 = ssub.s32 128, 128
      %61 = vsyncadd [#allocation8], %s60
      %s63 = sshll.u32 [#allocation7], 4
      %s64 = int_to_ptr.vmem [resolvable:$true] %s63
      %66 = dma.hbm_to_vmem [thread:$0]  %s5, 128, %s64, [#allocation8]
    $region25: #{multimodal_gan_forward.1} parent=1 // pred_fallthru
      _
    // Predicated region
    $region26: #{multimodal_gan_forward.1} parent=1 // pred_check
      _
    $region27: #{multimodal_gan_forward.1} parent=1 // pred_check_branch
      %68 = sbr.rel (0) target = $region29
    $region28: #{multimodal_gan_forward.1} parent=1 // pred_region
      %s70 = ssub.s32 65536, 65536
      %71 = vsyncadd [#allocation8], %s70
      %s72 = sshll.u32 [#allocation9], 4
      %s73 = int_to_ptr.vmem [resolvable:$true] %s72
      %78 = dma.hbm_to_vmem [thread:$0]  %s6, 65536, %s73, [#allocation8], 512, 512, 32
    $region29: #{multimodal_gan_forward.1} parent=1 // pred_fallthru
      _
    // Predicated region
    $region30: #{multimodal_gan_forward.1} parent=1 // pred_check
      _
    $region31: #{multimodal_gan_forward.1} parent=1 // pred_check_branch
      %80 = sbr.rel (0) target = $region33
    $region32: #{multimodal_gan_forward.1} parent=1 // pred_region
      %s82 = ssub.s32 256, 256
      %83 = vsyncadd [#allocation11], %s82
      %s85 = sshll.u32 [#allocation10], 4
      %s86 = int_to_ptr.vmem [resolvable:$true] %s85
      %88 = dma.hbm_to_vmem [thread:$0]  %s7, 256, %s86, [#allocation11]
    $region33: #{multimodal_gan_forward.1} parent=1 // pred_fallthru
      _
    // Predicated region
    $region34: #{multimodal_gan_forward.1} parent=1 // pred_check
      _
    $region35: #{multimodal_gan_forward.1} parent=1 // pred_check_branch
      %90 = sbr.rel (0) target = $region37
    $region36: #{multimodal_gan_forward.1} parent=1 // pred_region
      %91 = dma.done [#allocation3], 16384
    $region37: #{multimodal_gan_forward.1} parent=1 // pred_fallthru
      _
    // Predicated region
    $region38: #{multimodal_gan_forward.1} parent=1 // pred_check
      _
    $region39: #{multimodal_gan_forward.1} parent=1 // pred_check_branch
      %93 = sbr.rel (0) target = $region41
    $region40: #{multimodal_gan_forward.1} parent=1 // pred_region
      %94 = dma.done [#allocation5], 256
    $region41: #{multimodal_gan_forward.1} parent=1 // pred_fallthru
      _
    // Predicated region
    $region42: #{multimodal_gan_forward.1} parent=1 // pred_check
      _
    $region43: #{multimodal_gan_forward.1} parent=1 // pred_check_branch
      %96 = sbr.rel (0) target = $region45
    $region44: #{multimodal_gan_forward.1} parent=1 // pred_region
      %97 = dma.done [#allocation5], 9216
    $region45: #{multimodal_gan_forward.1} parent=1 // pred_fallthru
      _
    // Predicated region
    $region46: #{multimodal_gan_forward.1} parent=1 // pred_check
      _
    $region47: #{multimodal_gan_forward.1} parent=1 // pred_check_branch
      %99 = sbr.rel (0) target = $region49
    $region48: #{multimodal_gan_forward.1} parent=1 // pred_region
      %100 = dma.done [#allocation8], 128
    $region49: #{multimodal_gan_forward.1} parent=1 // pred_fallthru
      _
    // Predicated region
    $region50: #{multimodal_gan_forward.1} parent=1 // pred_check
      _
    $region51: #{multimodal_gan_forward.1} parent=1 // pred_check_branch
      %102 = sbr.rel (0) target = $region53
    $region52: #{multimodal_gan_forward.1} parent=1 // pred_region
      %103 = dma.done [#allocation8], 65536
    $region53: #{multimodal_gan_forward.1} parent=1 // pred_fallthru
      _
    // Predicated region
    $region54: #{multimodal_gan_forward.1} parent=1 // pred_check
      _
    $region55: #{multimodal_gan_forward.1} parent=1 // pred_check_branch
      %105 = sbr.rel (0) target = $region57
    $region56: #{multimodal_gan_forward.1} parent=1 // pred_region
      %106 = dma.done [#allocation11], 256
    $region57: #{multimodal_gan_forward.1} parent=1 // pred_fallthru
      _
    %v107 = vld [vmem:[%s0] sm:$0x3]
    %v108 = vld [vmem:[%s1] sm:$0x3]
    %v109 = vld [vmem:[#allocation2] sm:$0xff]
    %v110 = vld [vmem:[#allocation2 + $0x8] sm:$0xff]
    %v111 = vld [vmem:[#allocation2 + $0x10] sm:$0xff]
    %v112 = vld [vmem:[#allocation2 + $0x18] sm:$0xff]
    %v113 = vld [vmem:[#allocation2 + $0x20] sm:$0xff]
    %v114 = vld [vmem:[#allocation2 + $0x28] sm:$0xff]
    %v115 = vld [vmem:[#allocation2 + $0x30] sm:$0xff]
    %v116 = vld [vmem:[#allocation2 + $0x38] sm:$0xff]
    %v117 = vld [vmem:[#allocation2 + $0x40] sm:$0xff]
    %v118 = vld [vmem:[#allocation2 + $0x48] sm:$0xff]
    %v119 = vld [vmem:[#allocation2 + $0x50] sm:$0xff]
    %v120 = vld [vmem:[#allocation2 + $0x58] sm:$0xff]
    %v121 = vld [vmem:[#allocation2 + $0x60] sm:$0xff]
    %v122 = vld [vmem:[#allocation2 + $0x68] sm:$0xff]
    %v123 = vld [vmem:[#allocation2 + $0x70] sm:$0xff]
    %v124 = vld [vmem:[#allocation2 + $0x78] sm:$0xff]
    %v125 = vld [vmem:[#allocation4] sm:$0x3]
    %126 = vmatprep.subr.mxu0 0.0
    %127 = vmatpush1.msra.mxu0 %v109
    %128 = vmatprep.subr.mxu0 0.0
    %129 = vmatpush1.msra.mxu0 %v110
    %130 = vmatprep.subr.mxu0 0.0
    %131 = vmatpush1.msra.mxu0 %v111
    %132 = vmatprep.subr.mxu0 0.0
    %133 = vmatpush1.msra.mxu0 %v112
    %134 = vmatprep.subr.mxu0 0.0
    %135 = vmatpush1.msra.mxu0 %v113
    %136 = vmatprep.subr.mxu0 0.0
    %137 = vmatpush1.msra.mxu0 %v114
    %138 = vmatprep.subr.mxu0 0.0
    %139 = vmatpush1.msra.mxu0 %v115
    %140 = vmatprep.subr.mxu0 0.0
    %141 = vmatpush1.msra.mxu0 %v116
    %142 = vmatprep.subr.mxu0 0.0
    %143 = vmatpush1.msra.mxu0 %v117
    %144 = vmatprep.subr.mxu0 0.0
    %145 = vmatpush1.msra.mxu0 %v118
    %146 = vmatprep.subr.mxu0 0.0
    %147 = vmatpush1.msra.mxu0 %v119
    %148 = vmatprep.subr.mxu0 0.0
    %149 = vmatpush1.msra.mxu0 %v120
    %150 = vmatprep.subr.mxu0 0.0
    %151 = vmatpush1.msra.mxu0 %v121
    %152 = vmatprep.subr.mxu0 0.0
    %153 = vmatpush1.msra.mxu0 %v122
    %154 = vmatprep.subr.mxu0 0.0
    %155 = vmatpush1.msra.mxu0 %v123
    %156 = vmatprep.subr.mxu0 0.0
    %157 = vmatpush1.msra.mxu0 %v124
    %158 = vmatprep.subr.mxu0 0.0
    %159 = vmatpush1.msra.mxu0 0.0
    %160 = vmatprep.subr.mxu0 0.0
    %161 = vmatpush1.msra.mxu0 0.0
    %162 = vmatprep.subr.mxu0 0.0
    %163 = vmatpush1.msra.mxu0 0.0
    %164 = vmatprep.subr.mxu0 0.0
    %165 = vmatpush1.msra.mxu0 0.0
    %166 = vmatprep.subr.mxu0 0.0
    %167 = vmatpush1.msra.mxu0 0.0
    %168 = vmatprep.subr.mxu0 0.0
    %169 = vmatpush1.msra.mxu0 0.0
    %170 = vmatprep.subr.mxu0 0.0
    %171 = vmatpush1.msra.mxu0 0.0
    %172 = vmatprep.subr.mxu0 0.0
    %173 = vmatpush1.msra.mxu0 0.0
    %174 = vmatprep.subr.mxu0 0.0
    %175 = vmatpush1.msra.mxu0 0.0
    %176 = vmatprep.subr.mxu0 0.0
    %177 = vmatpush1.msra.mxu0 0.0
    %178 = vmatprep.subr.mxu0 0.0
    %179 = vmatpush1.msra.mxu0 0.0
    %180 = vmatprep.subr.mxu0 0.0
    %181 = vmatpush1.msra.mxu0 0.0
    %182 = vmatprep.subr.mxu0 0.0
    %183 = vmatpush1.msra.mxu0 0.0
    %184 = vmatprep.subr.mxu0 0.0
    %185 = vmatpush1.msra.mxu0 0.0
    %186 = vmatprep.subr.mxu0 0.0
    %187 = vmatpush1.msra.mxu0 0.0
    %188 = vmatprep.subr.mxu0 0.0
    %189 = vmatpush1.msra.mxu0 0.0
    %190 = vmatprep.mubr.f32.mxu0 0.0
    %191 = vmatmul.mubr.f32.gmra.mrb[0].mxu0 %v107
    %v192 = vpop.f32.mrb[0].mxu0
    %v193 = vadd.f32 0.0, %v192
    %v194 = vpop.f32.mrb[0].mxu0
    %195 = vdwg.mxu0
    %vm196 = vcmask 1041408
    %v197 = vsel %vm196, %v193, 0.0
    %v198 = vrot.slane %v197, 4
    %v199 = vadd.f32 %v197, %v198
    %v200 = vrot.slane %v199, 2
    %v201 = vadd.f32 %v199, %v200
    %v202 = vrot.slane %v201, 1
    %v203 = vadd.f32 %v201, %v202
    %v204 = vrcp.pop 2.0
    %v205 = vmul.f32 %v203, %v204
    %v206 = vmul.f32 %v193, %v193
    %v207 = vsel %vm196, %v206, 0.0
    %v208 = vrot.slane %v207, 4
    %v209 = vadd.f32 %v207, %v208
    %v210 = vrot.slane %v209, 2
    %v211 = vadd.f32 %v209, %v210
    %v212 = vrot.slane %v211, 1
    %v213 = vadd.f32 %v211, %v212
    %v214 = vmul.f32 %v213, %v204
    %v215 = vmul.f32 %v205, %v205
    %v216 = vsub.f32 %v214, %v215
    %v217 = vmax.f32 %v216, 0.0
    %v218 = vsub.f32 %v193, %v205
    %v219 = vadd.f32 %v217, 1e-05
    %v220 = vrsqrt.pop %v219
    %v221 = vmul.f32 %v218, %v220
    %v222 = vlaneseq
    %v223 = vshrl.u32 %v222, 7
    %v224 = vsub.s32 0, %v223
    %v225 = vrot.slane %v125, %v224
    %v226 = vmul.f32 %v221, %v225
    %v227 = vlaneseq
    %v228 = vshrl.u32 %v227, 7
    %v229 = vsub.s32 1, %v228
    %v230 = vrot.slane %v125, %v229
    %v231 = vadd.f32 %v226, %v230
    %v232 = vmul.f32 %v231, 0.5
    %v233 = vtanh.pop %v232
    %v234 = vadd.f32 %v233, 1.0
    %v235 = vmul.f32 %v234, 0.5
    %s236 = scalar_lea.vmem [#allocation2], 512
    %v237 = vld [vmem:[%s236] sm:$0xff]
    %v238 = vld [vmem:[%s236 + $0x8] sm:$0xff]
    %v239 = vld [vmem:[%s236 + $0x10] sm:$0xff]
    %v240 = vld [vmem:[%s236 + $0x18] sm:$0xff]
    %v241 = vld [vmem:[%s236 + $0x20] sm:$0xff]
    %v242 = vld [vmem:[%s236 + $0x28] sm:$0xff]
    %v243 = vld [vmem:[%s236 + $0x30] sm:$0xff]
    %v244 = vld [vmem:[%s236 + $0x38] sm:$0xff]
    %v245 = vld [vmem:[%s236 + $0x40] sm:$0xff]
    %v246 = vld [vmem:[%s236 + $0x48] sm:$0xff]
    %v247 = vld [vmem:[%s236 + $0x50] sm:$0xff]
    %v248 = vld [vmem:[%s236 + $0x58] sm:$0xff]
    %v249 = vld [vmem:[%s236 + $0x60] sm:$0xff]
    %v250 = vld [vmem:[%s236 + $0x68] sm:$0xff]
    %v251 = vld [vmem:[%s236 + $0x70] sm:$0xff]
    %v252 = vld [vmem:[%s236 + $0x78] sm:$0xff]
    %s253 = scalar_lea.vmem [#allocation4], 8
    %v254 = vld [vmem:[%s253] sm:$0x3]
    %255 = vmatprep.subr.mxu0 0.0
    %256 = vmatpush1.msra.mxu0 %v237
    %257 = vmatprep.subr.mxu0 0.0
    %258 = vmatpush1.msra.mxu0 %v238
    %259 = vmatprep.subr.mxu0 0.0
    %260 = vmatpush1.msra.mxu0 %v239
    %261 = vmatprep.subr.mxu0 0.0
    %262 = vmatpush1.msra.mxu0 %v240
    %263 = vmatprep.subr.mxu0 0.0
    %264 = vmatpush1.msra.mxu0 %v241
    %265 = vmatprep.subr.mxu0 0.0
    %266 = vmatpush1.msra.mxu0 %v242
    %267 = vmatprep.subr.mxu0 0.0
    %268 = vmatpush1.msra.mxu0 %v243
    %269 = vmatprep.subr.mxu0 0.0
    %270 = vmatpush1.msra.mxu0 %v244
    %271 = vmatprep.subr.mxu0 0.0
    %272 = vmatpush1.msra.mxu0 %v245
    %273 = vmatprep.subr.mxu0 0.0
    %274 = vmatpush1.msra.mxu0 %v246
    %275 = vmatprep.subr.mxu0 0.0
    %276 = vmatpush1.msra.mxu0 %v247
    %277 = vmatprep.subr.mxu0 0.0
    %278 = vmatpush1.msra.mxu0 %v248
    %279 = vmatprep.subr.mxu0 0.0
    %280 = vmatpush1.msra.mxu0 %v249
    %281 = vmatprep.subr.mxu0 0.0
    %282 = vmatpush1.msra.mxu0 %v250
    %283 = vmatprep.subr.mxu0 0.0
    %284 = vmatpush1.msra.mxu0 %v251
    %285 = vmatprep.subr.mxu0 0.0
    %286 = vmatpush1.msra.mxu0 %v252
    %287 = vmatprep.subr.mxu0 0.0
    %288 = vmatpush1.msra.mxu0 0.0
    %289 = vmatprep.subr.mxu0 0.0
    %290 = vmatpush1.msra.mxu0 0.0
    %291 = vmatprep.subr.mxu0 0.0
    %292 = vmatpush1.msra.mxu0 0.0
    %293 = vmatprep.subr.mxu0 0.0
    %294 = vmatpush1.msra.mxu0 0.0
    %295 = vmatprep.subr.mxu0 0.0
    %296 = vmatpush1.msra.mxu0 0.0
    %297 = vmatprep.subr.mxu0 0.0
    %298 = vmatpush1.msra.mxu0 0.0
    %299 = vmatprep.subr.mxu0 0.0
    %300 = vmatpush1.msra.mxu0 0.0
    %301 = vmatprep.subr.mxu0 0.0
    %302 = vmatpush1.msra.mxu0 0.0
    %303 = vmatprep.subr.mxu0 0.0
    %304 = vmatpush1.msra.mxu0 0.0
    %305 = vmatprep.subr.mxu0 0.0
    %306 = vmatpush1.msra.mxu0 0.0
    %307 = vmatprep.subr.mxu0 0.0
    %308 = vmatpush1.msra.mxu0 0.0
    %309 = vmatprep.subr.mxu0 0.0
    %310 = vmatpush1.msra.mxu0 0.0
    %311 = vmatprep.subr.mxu0 0.0
    %312 = vmatpush1.msra.mxu0 0.0
    %313 = vmatprep.subr.mxu0 0.0
    %314 = vmatpush1.msra.mxu0 0.0
    %315 = vmatprep.subr.mxu0 0.0
    %316 = vmatpush1.msra.mxu0 0.0
    %317 = vmatprep.subr.mxu0 0.0
    %318 = vmatpush1.msra.mxu0 0.0
    %319 = vmatprep.mubr.f32.mxu0 0.0
    %320 = vmatmul.mubr.f32.gmra.mrb[0].mxu0 %v108
    %v321 = vpop.f32.mrb[0].mxu0
    %v322 = vadd.f32 0.0, %v321
    %v323 = vpop.f32.mrb[0].mxu0
    %324 = vdwg.mxu0
    %v325 = vsel %vm196, %v322, 0.0
    %v326 = vrot.slane %v325, 4
    %v327 = vadd.f32 %v325, %v326
    %v328 = vrot.slane %v327, 2
    %v329 = vadd.f32 %v327, %v328
    %v330 = vrot.slane %v329, 1
    %v331 = vadd.f32 %v329, %v330
    %v332 = vmul.f32 %v331, %v204
    %v333 = vmul.f32 %v322, %v322
    %v334 = vsel %vm196, %v333, 0.0
    %v335 = vrot.slane %v334, 4
    %v336 = vadd.f32 %v334, %v335
    %v337 = vrot.slane %v336, 2
    %v338 = vadd.f32 %v336, %v337
    %v339 = vrot.slane %v338, 1
    %v340 = vadd.f32 %v338, %v339
    %v341 = vmul.f32 %v340, %v204
    %v342 = vmul.f32 %v332, %v332
    %v343 = vsub.f32 %v341, %v342
    %v344 = vmax.f32 %v343, 0.0
    %v345 = vsub.f32 %v322, %v332
    %v346 = vadd.f32 %v344, 1e-05
    %v347 = vrsqrt.pop %v346
    %v348 = vmul.f32 %v345, %v347
    %v349 = vlaneseq
    %v350 = vshrl.u32 %v349, 7
    %v351 = vsub.s32 0, %v350
    %v352 = vrot.slane %v254, %v351
    %v353 = vmul.f32 %v348, %v352
    %v354 = vlaneseq
    %v355 = vshrl.u32 %v354, 7
    %v356 = vsub.s32 1, %v355
    %v357 = vrot.slane %v254, %v356
    %v358 = vadd.f32 %v353, %v357
    %v359 = vmul.f32 %v358, 0.5
    %v360 = vtanh.pop %v359
    %v361 = vadd.f32 %v360, 1.0
    %v362 = vmul.f32 %v361, 0.5
    %s363 = scalar_lea.vmem [#allocation2], 128
    %v364 = vld [vmem:[%s363] sm:$0xff]
    %v365 = vld [vmem:[%s363 + $0x8] sm:$0xff]
    %v366 = vld [vmem:[%s363 + $0x10] sm:$0xff]
    %v367 = vld [vmem:[%s363 + $0x18] sm:$0xff]
    %v368 = vld [vmem:[%s363 + $0x20] sm:$0xff]
    %v369 = vld [vmem:[%s363 + $0x28] sm:$0xff]
    %v370 = vld [vmem:[%s363 + $0x30] sm:$0xff]
    %v371 = vld [vmem:[%s363 + $0x38] sm:$0xff]
    %v372 = vld [vmem:[%s363 + $0x40] sm:$0xff]
    %v373 = vld [vmem:[%s363 + $0x48] sm:$0xff]
    %v374 = vld [vmem:[%s363 + $0x50] sm:$0xff]
    %v375 = vld [vmem:[%s363 + $0x58] sm:$0xff]
    %v376 = vld [vmem:[%s363 + $0x60] sm:$0xff]
    %v377 = vld [vmem:[%s363 + $0x68] sm:$0xff]
    %v378 = vld [vmem:[%s363 + $0x70] sm:$0xff]
    %v379 = vld [vmem:[%s363 + $0x78] sm:$0xff]
    %s380 = scalar_lea.vmem [#allocation4], 2
    %v381 = vld [vmem:[%s380] sm:$0x3]
    %382 = vmatprep.subr.mxu0 0.0
    %383 = vmatpush1.msra.mxu0 %v364
    %384 = vmatprep.subr.mxu0 0.0
    %385 = vmatpush1.msra.mxu0 %v365
    %386 = vmatprep.subr.mxu0 0.0
    %387 = vmatpush1.msra.mxu0 %v366
    %388 = vmatprep.subr.mxu0 0.0
    %389 = vmatpush1.msra.mxu0 %v367
    %390 = vmatprep.subr.mxu0 0.0
    %391 = vmatpush1.msra.mxu0 %v368
    %392 = vmatprep.subr.mxu0 0.0
    %393 = vmatpush1.msra.mxu0 %v369
    %394 = vmatprep.subr.mxu0 0.0
    %395 = vmatpush1.msra.mxu0 %v370
    %396 = vmatprep.subr.mxu0 0.0
    %397 = vmatpush1.msra.mxu0 %v371
    %398 = vmatprep.subr.mxu0 0.0
    %399 = vmatpush1.msra.mxu0 %v372
    %400 = vmatprep.subr.mxu0 0.0
    %401 = vmatpush1.msra.mxu0 %v373
    %402 = vmatprep.subr.mxu0 0.0
    %403 = vmatpush1.msra.mxu0 %v374
    %404 = vmatprep.subr.mxu0 0.0
    %405 = vmatpush1.msra.mxu0 %v375
    %406 = vmatprep.subr.mxu0 0.0
    %407 = vmatpush1.msra.mxu0 %v376
    %408 = vmatprep.subr.mxu0 0.0
    %409 = vmatpush1.msra.mxu0 %v377
    %410 = vmatprep.subr.mxu0 0.0
    %411 = vmatpush1.msra.mxu0 %v378
    %412 = vmatprep.subr.mxu0 0.0
    %413 = vmatpush1.msra.mxu0 %v379
    %414 = vmatprep.subr.mxu0 0.0
    %415 = vmatpush1.msra.mxu0 0.0
    %416 = vmatprep.subr.mxu0 0.0
    %417 = vmatpush1.msra.mxu0 0.0
    %418 = vmatprep.subr.mxu0 0.0
    %419 = vmatpush1.msra.mxu0 0.0
    %420 = vmatprep.subr.mxu0 0.0
    %421 = vmatpush1.msra.mxu0 0.0
    %422 = vmatprep.subr.mxu0 0.0
    %423 = vmatpush1.msra.mxu0 0.0
    %424 = vmatprep.subr.mxu0 0.0
    %425 = vmatpush1.msra.mxu0 0.0
    %426 = vmatprep.subr.mxu0 0.0
    %427 = vmatpush1.msra.mxu0 0.0
    %428 = vmatprep.subr.mxu0 0.0
    %429 = vmatpush1.msra.mxu0 0.0
    %430 = vmatprep.subr.mxu0 0.0
    %431 = vmatpush1.msra.mxu0 0.0
    %432 = vmatprep.subr.mxu0 0.0
    %433 = vmatpush1.msra.mxu0 0.0
    %434 = vmatprep.subr.mxu0 0.0
    %435 = vmatpush1.msra.mxu0 0.0
    %436 = vmatprep.subr.mxu0 0.0
    %437 = vmatpush1.msra.mxu0 0.0
    %438 = vmatprep.subr.mxu0 0.0
    %439 = vmatpush1.msra.mxu0 0.0
    %440 = vmatprep.subr.mxu0 0.0
    %441 = vmatpush1.msra.mxu0 0.0
    %442 = vmatprep.subr.mxu0 0.0
    %443 = vmatpush1.msra.mxu0 0.0
    %444 = vmatprep.subr.mxu0 0.0
    %445 = vmatpush1.msra.mxu0 0.0
    %446 = vmatprep.mubr.f32.mxu0 0.0
    %447 = vmatmul.mubr.f32.gmra.mrb[0].mxu0 %v235
    %v448 = vpop.f32.mrb[0].mxu0
    %v449 = vadd.f32 0.0, %v448
    %v450 = vpop.f32.mrb[0].mxu0
    %451 = vdwg.mxu0
    %v452 = vsel %vm196, %v449, 0.0
    %v453 = vrot.slane %v452, 4
    %v454 = vadd.f32 %v452, %v453
    %v455 = vrot.slane %v454, 2
    %v456 = vadd.f32 %v454, %v455
    %v457 = vrot.slane %v456, 1
    %v458 = vadd.f32 %v456, %v457
    %v459 = vmul.f32 %v458, %v204
    %v460 = vmul.f32 %v449, %v449
    %v461 = vsel %vm196, %v460, 0.0
    %v462 = vrot.slane %v461, 4
    %v463 = vadd.f32 %v461, %v462
    %v464 = vrot.slane %v463, 2
    %v465 = vadd.f32 %v463, %v464
    %v466 = vrot.slane %v465, 1
    %v467 = vadd.f32 %v465, %v466
    %v468 = vmul.f32 %v467, %v204
    %v469 = vmul.f32 %v459, %v459
    %v470 = vsub.f32 %v468, %v469
    %v471 = vmax.f32 %v470, 0.0
    %v472 = vsub.f32 %v449, %v459
    %v473 = vadd.f32 %v471, 1e-05
    %v474 = vrsqrt.pop %v473
    %v475 = vmul.f32 %v472, %v474
    %v476 = vlaneseq
    %v477 = vshrl.u32 %v476, 7
    %v478 = vsub.s32 0, %v477
    %v479 = vrot.slane %v381, %v478
    %v480 = vmul.f32 %v475, %v479
    %v481 = vlaneseq
    %v482 = vshrl.u32 %v481, 7
    %v483 = vsub.s32 1, %v482
    %v484 = vrot.slane %v381, %v483
    %v485 = vadd.f32 %v480, %v484
    %v486 = vmul.f32 %v485, 0.5
    %v487 = vtanh.pop %v486
    %v488 = vadd.f32 %v487, 1.0
    %v489 = vmul.f32 %v488, 0.5
    %s490 = scalar_lea.vmem [#allocation2], 640
    %v491 = vld [vmem:[%s490] sm:$0xff]
    %v492 = vld [vmem:[%s490 + $0x8] sm:$0xff]
    %v493 = vld [vmem:[%s490 + $0x10] sm:$0xff]
    %v494 = vld [vmem:[%s490 + $0x18] sm:$0xff]
    %v495 = vld [vmem:[%s490 + $0x20] sm:$0xff]
    %v496 = vld [vmem:[%s490 + $0x28] sm:$0xff]
    %v497 = vld [vmem:[%s490 + $0x30] sm:$0xff]
    %v498 = vld [vmem:[%s490 + $0x38] sm:$0xff]
    %v499 = vld [vmem:[%s490 + $0x40] sm:$0xff]
    %v500 = vld [vmem:[%s490 + $0x48] sm:$0xff]
    %v501 = vld [vmem:[%s490 + $0x50] sm:$0xff]
    %v502 = vld [vmem:[%s490 + $0x58] sm:$0xff]
    %v503 = vld [vmem:[%s490 + $0x60] sm:$0xff]
    %v504 = vld [vmem:[%s490 + $0x68] sm:$0xff]
    %v505 = vld [vmem:[%s490 + $0x70] sm:$0xff]
    %v506 = vld [vmem:[%s490 + $0x78] sm:$0xff]
    %s507 = scalar_lea.vmem [#allocation4], 10
    %v508 = vld [vmem:[%s507] sm:$0x3]
    %509 = vmatprep.subr.mxu0 0.0
    %510 = vmatpush1.msra.mxu0 %v491
    %511 = vmatprep.subr.mxu0 0.0
    %512 = vmatpush1.msra.mxu0 %v492
    %513 = vmatprep.subr.mxu0 0.0
    %514 = vmatpush1.msra.mxu0 %v493
    %515 = vmatprep.subr.mxu0 0.0
    %516 = vmatpush1.msra.mxu0 %v494
    %517 = vmatprep.subr.mxu0 0.0
    %518 = vmatpush1.msra.mxu0 %v495
    %519 = vmatprep.subr.mxu0 0.0
    %520 = vmatpush1.msra.mxu0 %v496
    %521 = vmatprep.subr.mxu0 0.0
    %522 = vmatpush1.msra.mxu0 %v497
    %523 = vmatprep.subr.mxu0 0.0
    %524 = vmatpush1.msra.mxu0 %v498
    %525 = vmatprep.subr.mxu0 0.0
    %526 = vmatpush1.msra.mxu0 %v499
    %527 = vmatprep.subr.mxu0 0.0
    %528 = vmatpush1.msra.mxu0 %v500
    %529 = vmatprep.subr.mxu0 0.0
    %530 = vmatpush1.msra.mxu0 %v501
    %531 = vmatprep.subr.mxu0 0.0
    %532 = vmatpush1.msra.mxu0 %v502
    %533 = vmatprep.subr.mxu0 0.0
    %534 = vmatpush1.msra.mxu0 %v503
    %535 = vmatprep.subr.mxu0 0.0
    %536 = vmatpush1.msra.mxu0 %v504
    %537 = vmatprep.subr.mxu0 0.0
    %538 = vmatpush1.msra.mxu0 %v505
    %539 = vmatprep.subr.mxu0 0.0
    %540 = vmatpush1.msra.mxu0 %v506
    %541 = vmatprep.subr.mxu0 0.0
    %542 = vmatpush1.msra.mxu0 0.0
    %543 = vmatprep.subr.mxu0 0.0
    %544 = vmatpush1.msra.mxu0 0.0
    %545 = vmatprep.subr.mxu0 0.0
    %546 = vmatpush1.msra.mxu0 0.0
    %547 = vmatprep.subr.mxu0 0.0
    %548 = vmatpush1.msra.mxu0 0.0
    %549 = vmatprep.subr.mxu0 0.0
    %550 = vmatpush1.msra.mxu0 0.0
    %551 = vmatprep.subr.mxu0 0.0
    %552 = vmatpush1.msra.mxu0 0.0
    %553 = vmatprep.subr.mxu0 0.0
    %554 = vmatpush1.msra.mxu0 0.0
    %555 = vmatprep.subr.mxu0 0.0
    %556 = vmatpush1.msra.mxu0 0.0
    %557 = vmatprep.subr.mxu0 0.0
    %558 = vmatpush1.msra.mxu0 0.0
    %559 = vmatprep.subr.mxu0 0.0
    %560 = vmatpush1.msra.mxu0 0.0
    %561 = vmatprep.subr.mxu0 0.0
    %562 = vmatpush1.msra.mxu0 0.0
    %563 = vmatprep.subr.mxu0 0.0
    %564 = vmatpush1.msra.mxu0 0.0
    %565 = vmatprep.subr.mxu0 0.0
    %566 = vmatpush1.msra.mxu0 0.0
    %567 = vmatprep.subr.mxu0 0.0
    %568 = vmatpush1.msra.mxu0 0.0
    %569 = vmatprep.subr.mxu0 0.0
    %570 = vmatpush1.msra.mxu0 0.0
    %571 = vmatprep.subr.mxu0 0.0
    %572 = vmatpush1.msra.mxu0 0.0
    %573 = vmatprep.mubr.f32.mxu0 0.0
    %574 = vmatmul.mubr.f32.gmra.mrb[0].mxu0 %v362
    %v575 = vpop.f32.mrb[0].mxu0
    %v576 = vadd.f32 0.0, %v575
    %v577 = vpop.f32.mrb[0].mxu0
    %578 = vdwg.mxu0
    %v579 = vsel %vm196, %v576, 0.0
    %v580 = vrot.slane %v579, 4
    %v581 = vadd.f32 %v579, %v580
    %v582 = vrot.slane %v581, 2
    %v583 = vadd.f32 %v581, %v582
    %v584 = vrot.slane %v583, 1
    %v585 = vadd.f32 %v583, %v584
    %v586 = vmul.f32 %v585, %v204
    %v587 = vmul.f32 %v576, %v576
    %v588 = vsel %vm196, %v587, 0.0
    %v589 = vrot.slane %v588, 4
    %v590 = vadd.f32 %v588, %v589
    %v591 = vrot.slane %v590, 2
    %v592 = vadd.f32 %v590, %v591
    %v593 = vrot.slane %v592, 1
    %v594 = vadd.f32 %v592, %v593
    %v595 = vmul.f32 %v594, %v204
    %v596 = vmul.f32 %v586, %v586
    %v597 = vsub.f32 %v595, %v596
    %v598 = vmax.f32 %v597, 0.0
    %v599 = vsub.f32 %v576, %v586
    %v600 = vadd.f32 %v598, 1e-05
    %v601 = vrsqrt.pop %v600
    %v602 = vmul.f32 %v599, %v601
    %v603 = vlaneseq
    %v604 = vshrl.u32 %v603, 7
    %v605 = vsub.s32 0, %v604
    %v606 = vrot.slane %v508, %v605
    %v607 = vmul.f32 %v602, %v606
    %v608 = vlaneseq
    %v609 = vshrl.u32 %v608, 7
    %v610 = vsub.s32 1, %v609
    %v611 = vrot.slane %v508, %v610
    %v612 = vadd.f32 %v607, %v611
    %v613 = vmul.f32 %v612, 0.5
    %v614 = vtanh.pop %v613
    %v615 = vadd.f32 %v614, 1.0
    %v616 = vmul.f32 %v615, 0.5
    %s617 = scalar_lea.vmem [#allocation2], 256
    %v618 = vld [vmem:[%s617] sm:$0xff]
    %v619 = vld [vmem:[%s617 + $0x8] sm:$0xff]
    %v620 = vld [vmem:[%s617 + $0x10] sm:$0xff]
    %v621 = vld [vmem:[%s617 + $0x18] sm:$0xff]
    %v622 = vld [vmem:[%s617 + $0x20] sm:$0xff]
    %v623 = vld [vmem:[%s617 + $0x28] sm:$0xff]
    %v624 = vld [vmem:[%s617 + $0x30] sm:$0xff]
    %v625 = vld [vmem:[%s617 + $0x38] sm:$0xff]
    %v626 = vld [vmem:[%s617 + $0x40] sm:$0xff]
    %v627 = vld [vmem:[%s617 + $0x48] sm:$0xff]
    %v628 = vld [vmem:[%s617 + $0x50] sm:$0xff]
    %v629 = vld [vmem:[%s617 + $0x58] sm:$0xff]
    %v630 = vld [vmem:[%s617 + $0x60] sm:$0xff]
    %v631 = vld [vmem:[%s617 + $0x68] sm:$0xff]
    %v632 = vld [vmem:[%s617 + $0x70] sm:$0xff]
    %v633 = vld [vmem:[%s617 + $0x78] sm:$0xff]
    %s634 = scalar_lea.vmem [#allocation4], 4
    %v635 = vld [vmem:[%s634] sm:$0x3]
    %636 = vmatprep.subr.mxu0 0.0
    %637 = vmatpush1.msra.mxu0 %v618
    %638 = vmatprep.subr.mxu0 0.0
    %639 = vmatpush1.msra.mxu0 %v619
    %640 = vmatprep.subr.mxu0 0.0
    %641 = vmatpush1.msra.mxu0 %v620
    %642 = vmatprep.subr.mxu0 0.0
    %643 = vmatpush1.msra.mxu0 %v621
    %644 = vmatprep.subr.mxu0 0.0
    %645 = vmatpush1.msra.mxu0 %v622
    %646 = vmatprep.subr.mxu0 0.0
    %647 = vmatpush1.msra.mxu0 %v623
    %648 = vmatprep.subr.mxu0 0.0
    %649 = vmatpush1.msra.mxu0 %v624
    %650 = vmatprep.subr.mxu0 0.0
    %651 = vmatpush1.msra.mxu0 %v625
    %652 = vmatprep.subr.mxu0 0.0
    %653 = vmatpush1.msra.mxu0 %v626
    %654 = vmatprep.subr.mxu0 0.0
    %655 = vmatpush1.msra.mxu0 %v627
    %656 = vmatprep.subr.mxu0 0.0
    %657 = vmatpush1.msra.mxu0 %v628
    %658 = vmatprep.subr.mxu0 0.0
    %659 = vmatpush1.msra.mxu0 %v629
    %660 = vmatprep.subr.mxu0 0.0
    %661 = vmatpush1.msra.mxu0 %v630
    %662 = vmatprep.subr.mxu0 0.0
    %663 = vmatpush1.msra.mxu0 %v631
    %664 = vmatprep.subr.mxu0 0.0
    %665 = vmatpush1.msra.mxu0 %v632
    %666 = vmatprep.subr.mxu0 0.0
    %667 = vmatpush1.msra.mxu0 %v633
    %668 = vmatprep.subr.mxu0 0.0
    %669 = vmatpush1.msra.mxu0 0.0
    %670 = vmatprep.subr.mxu0 0.0
    %671 = vmatpush1.msra.mxu0 0.0
    %672 = vmatprep.subr.mxu0 0.0
    %673 = vmatpush1.msra.mxu0 0.0
    %674 = vmatprep.subr.mxu0 0.0
    %675 = vmatpush1.msra.mxu0 0.0
    %676 = vmatprep.subr.mxu0 0.0
    %677 = vmatpush1.msra.mxu0 0.0
    %678 = vmatprep.subr.mxu0 0.0
    %679 = vmatpush1.msra.mxu0 0.0
    %680 = vmatprep.subr.mxu0 0.0
    %681 = vmatpush1.msra.mxu0 0.0
    %682 = vmatprep.subr.mxu0 0.0
    %683 = vmatpush1.msra.mxu0 0.0
    %684 = vmatprep.subr.mxu0 0.0
    %685 = vmatpush1.msra.mxu0 0.0
    %686 = vmatprep.subr.mxu0 0.0
    %687 = vmatpush1.msra.mxu0 0.0
    %688 = vmatprep.subr.mxu0 0.0
    %689 = vmatpush1.msra.mxu0 0.0
    %690 = vmatprep.subr.mxu0 0.0
    %691 = vmatpush1.msra.mxu0 0.0
    %692 = vmatprep.subr.mxu0 0.0
    %693 = vmatpush1.msra.mxu0 0.0
    %694 = vmatprep.subr.mxu0 0.0
    %695 = vmatpush1.msra.mxu0 0.0
    %696 = vmatprep.subr.mxu0 0.0
    %697 = vmatpush1.msra.mxu0 0.0
    %698 = vmatprep.subr.mxu0 0.0
    %699 = vmatpush1.msra.mxu0 0.0
    %700 = vmatprep.mubr.f32.mxu0 0.0
    %701 = vmatmul.mubr.f32.gmra.mrb[0].mxu0 %v489
    %v702 = vpop.f32.mrb[0].mxu0
    %v703 = vadd.f32 0.0, %v702
    %v704 = vpop.f32.mrb[0].mxu0
    %705 = vdwg.mxu0
    %v706 = vsel %vm196, %v703, 0.0
    %v707 = vrot.slane %v706, 4
    %v708 = vadd.f32 %v706, %v707
    %v709 = vrot.slane %v708, 2
    %v710 = vadd.f32 %v708, %v709
    %v711 = vrot.slane %v710, 1
    %v712 = vadd.f32 %v710, %v711
    %v713 = vmul.f32 %v712, %v204
    %v714 = vmul.f32 %v703, %v703
    %v715 = vsel %vm196, %v714, 0.0
    %v716 = vrot.slane %v715, 4
    %v717 = vadd.f32 %v715, %v716
    %v718 = vrot.slane %v717, 2
    %v719 = vadd.f32 %v717, %v718
    %v720 = vrot.slane %v719, 1
    %v721 = vadd.f32 %v719, %v720
    %v722 = vmul.f32 %v721, %v204
    %v723 = vmul.f32 %v713, %v713
    %v724 = vsub.f32 %v722, %v723
    %v725 = vmax.f32 %v724, 0.0
    %v726 = vsub.f32 %v703, %v713
    %v727 = vadd.f32 %v725, 1e-05
    %v728 = vrsqrt.pop %v727
    %v729 = vmul.f32 %v726, %v728
    %v730 = vlaneseq
    %v731 = vshrl.u32 %v730, 7
    %v732 = vsub.s32 0, %v731
    %v733 = vrot.slane %v635, %v732
    %v734 = vmul.f32 %v729, %v733
    %v735 = vlaneseq
    %v736 = vshrl.u32 %v735, 7
    %v737 = vsub.s32 1, %v736
    %v738 = vrot.slane %v635, %v737
    %v739 = vadd.f32 %v734, %v738
    %v740 = vmul.f32 %v739, 0.5
    %v741 = vtanh.pop %v740
    %v742 = vadd.f32 %v741, 1.0
    %v743 = vmul.f32 %v742, 0.5
    %s744 = scalar_lea.vmem [#allocation2], 768
    %v745 = vld [vmem:[%s744] sm:$0xff]
    %v746 = vld [vmem:[%s744 + $0x8] sm:$0xff]
    %v747 = vld [vmem:[%s744 + $0x10] sm:$0xff]
    %v748 = vld [vmem:[%s744 + $0x18] sm:$0xff]
    %v749 = vld [vmem:[%s744 + $0x20] sm:$0xff]
    %v750 = vld [vmem:[%s744 + $0x28] sm:$0xff]
    %v751 = vld [vmem:[%s744 + $0x30] sm:$0xff]
    %v752 = vld [vmem:[%s744 + $0x38] sm:$0xff]
    %v753 = vld [vmem:[%s744 + $0x40] sm:$0xff]
    %v754 = vld [vmem:[%s744 + $0x48] sm:$0xff]
    %v755 = vld [vmem:[%s744 + $0x50] sm:$0xff]
    %v756 = vld [vmem:[%s744 + $0x58] sm:$0xff]
    %v757 = vld [vmem:[%s744 + $0x60] sm:$0xff]
    %v758 = vld [vmem:[%s744 + $0x68] sm:$0xff]
    %v759 = vld [vmem:[%s744 + $0x70] sm:$0xff]
    %v760 = vld [vmem:[%s744 + $0x78] sm:$0xff]
    %s761 = scalar_lea.vmem [#allocation4], 12
    %v762 = vld [vmem:[%s761] sm:$0x3]
    %763 = vmatprep.subr.mxu0 0.0
    %764 = vmatpush1.msra.mxu0 %v745
    %765 = vmatprep.subr.mxu0 0.0
    %766 = vmatpush1.msra.mxu0 %v746
    %767 = vmatprep.subr.mxu0 0.0
    %768 = vmatpush1.msra.mxu0 %v747
    %769 = vmatprep.subr.mxu0 0.0
    %770 = vmatpush1.msra.mxu0 %v748
    %771 = vmatprep.subr.mxu0 0.0
    %772 = vmatpush1.msra.mxu0 %v749
    %773 = vmatprep.subr.mxu0 0.0
    %774 = vmatpush1.msra.mxu0 %v750
    %775 = vmatprep.subr.mxu0 0.0
    %776 = vmatpush1.msra.mxu0 %v751
    %777 = vmatprep.subr.mxu0 0.0
    %778 = vmatpush1.msra.mxu0 %v752
    %779 = vmatprep.subr.mxu0 0.0
    %780 = vmatpush1.msra.mxu0 %v753
    %781 = vmatprep.subr.mxu0 0.0
    %782 = vmatpush1.msra.mxu0 %v754
    %783 = vmatprep.subr.mxu0 0.0
    %784 = vmatpush1.msra.mxu0 %v755
    %785 = vmatprep.subr.mxu0 0.0
    %786 = vmatpush1.msra.mxu0 %v756
    %787 = vmatprep.subr.mxu0 0.0
    %788 = vmatpush1.msra.mxu0 %v757
    %789 = vmatprep.subr.mxu0 0.0
    %790 = vmatpush1.msra.mxu0 %v758
    %791 = vmatprep.subr.mxu0 0.0
    %792 = vmatpush1.msra.mxu0 %v759
    %793 = vmatprep.subr.mxu0 0.0
    %794 = vmatpush1.msra.mxu0 %v760
    %795 = vmatprep.subr.mxu0 0.0
    %796 = vmatpush1.msra.mxu0 0.0
    %797 = vmatprep.subr.mxu0 0.0
    %798 = vmatpush1.msra.mxu0 0.0
    %799 = vmatprep.subr.mxu0 0.0
    %800 = vmatpush1.msra.mxu0 0.0
    %801 = vmatprep.subr.mxu0 0.0
    %802 = vmatpush1.msra.mxu0 0.0
    %803 = vmatprep.subr.mxu0 0.0
    %804 = vmatpush1.msra.mxu0 0.0
    %805 = vmatprep.subr.mxu0 0.0
    %806 = vmatpush1.msra.mxu0 0.0
    %807 = vmatprep.subr.mxu0 0.0
    %808 = vmatpush1.msra.mxu0 0.0
    %809 = vmatprep.subr.mxu0 0.0
    %810 = vmatpush1.msra.mxu0 0.0
    %811 = vmatprep.subr.mxu0 0.0
    %812 = vmatpush1.msra.mxu0 0.0
    %813 = vmatprep.subr.mxu0 0.0
    %814 = vmatpush1.msra.mxu0 0.0
    %815 = vmatprep.subr.mxu0 0.0
    %816 = vmatpush1.msra.mxu0 0.0
    %817 = vmatprep.subr.mxu0 0.0
    %818 = vmatpush1.msra.mxu0 0.0
    %819 = vmatprep.subr.mxu0 0.0
    %820 = vmatpush1.msra.mxu0 0.0
    %821 = vmatprep.subr.mxu0 0.0
    %822 = vmatpush1.msra.mxu0 0.0
    %823 = vmatprep.subr.mxu0 0.0
    %824 = vmatpush1.msra.mxu0 0.0
    %825 = vmatprep.subr.mxu0 0.0
    %826 = vmatpush1.msra.mxu0 0.0
    %827 = vmatprep.mubr.f32.mxu0 0.0
    %828 = vmatmul.mubr.f32.gmra.mrb[0].mxu0 %v616
    %v829 = vpop.f32.mrb[0].mxu0
    %v830 = vadd.f32 0.0, %v829
    %v831 = vpop.f32.mrb[0].mxu0
    %832 = vdwg.mxu0
    %v833 = vsel %vm196, %v830, 0.0
    %v834 = vrot.slane %v833, 4
    %v835 = vadd.f32 %v833, %v834
    %v836 = vrot.slane %v835, 2
    %v837 = vadd.f32 %v835, %v836
    %v838 = vrot.slane %v837, 1
    %v839 = vadd.f32 %v837, %v838
    %v840 = vmul.f32 %v839, %v204
    %v841 = vmul.f32 %v830, %v830
    %v842 = vsel %vm196, %v841, 0.0
    %v843 = vrot.slane %v842, 4
    %v844 = vadd.f32 %v842, %v843
    %v845 = vrot.slane %v844, 2
    %v846 = vadd.f32 %v844, %v845
    %v847 = vrot.slane %v846, 1
    %v848 = vadd.f32 %v846, %v847
    %v849 = vmul.f32 %v848, %v204
    %v850 = vmul.f32 %v840, %v840
    %v851 = vsub.f32 %v849, %v850
    %v852 = vmax.f32 %v851, 0.0
    %v853 = vsub.f32 %v830, %v840
    %v854 = vadd.f32 %v852, 1e-05
    %v855 = vrsqrt.pop %v854
    %v856 = vmul.f32 %v853, %v855
    %v857 = vlaneseq
    %v858 = vshrl.u32 %v857, 7
    %v859 = vsub.s32 0, %v858
    %v860 = vrot.slane %v762, %v859
    %v861 = vmul.f32 %v856, %v860
    %v862 = vlaneseq
    %v863 = vshrl.u32 %v862, 7
    %v864 = vsub.s32 1, %v863
    %v865 = vrot.slane %v762, %v864
    %v866 = vadd.f32 %v861, %v865
    %v867 = vmul.f32 %v866, 0.5
    %v868 = vtanh.pop %v867
    %v869 = vadd.f32 %v868, 1.0
    %v870 = vmul.f32 %v869, 0.5
    %s871 = scalar_lea.vmem [#allocation2], 384
    %v872 = vld [vmem:[%s871] sm:$0xff]
    %v873 = vld [vmem:[%s871 + $0x8] sm:$0xff]
    %v874 = vld [vmem:[%s871 + $0x10] sm:$0xff]
    %v875 = vld [vmem:[%s871 + $0x18] sm:$0xff]
    %v876 = vld [vmem:[%s871 + $0x20] sm:$0xff]
    %v877 = vld [vmem:[%s871 + $0x28] sm:$0xff]
    %v878 = vld [vmem:[%s871 + $0x30] sm:$0xff]
    %v879 = vld [vmem:[%s871 + $0x38] sm:$0xff]
    %v880 = vld [vmem:[%s871 + $0x40] sm:$0xff]
    %v881 = vld [vmem:[%s871 + $0x48] sm:$0xff]
    %v882 = vld [vmem:[%s871 + $0x50] sm:$0xff]
    %v883 = vld [vmem:[%s871 + $0x58] sm:$0xff]
    %v884 = vld [vmem:[%s871 + $0x60] sm:$0xff]
    %v885 = vld [vmem:[%s871 + $0x68] sm:$0xff]
    %v886 = vld [vmem:[%s871 + $0x70] sm:$0xff]
    %v887 = vld [vmem:[%s871 + $0x78] sm:$0xff]
    %s888 = scalar_lea.vmem [#allocation4], 6
    %v889 = vld [vmem:[%s888] sm:$0x3]
    %890 = vmatprep.subr.mxu0 0.0
    %891 = vmatpush1.msra.mxu0 %v872
    %892 = vmatprep.subr.mxu0 0.0
    %893 = vmatpush1.msra.mxu0 %v873
    %894 = vmatprep.subr.mxu0 0.0
    %895 = vmatpush1.msra.mxu0 %v874
    %896 = vmatprep.subr.mxu0 0.0
    %897 = vmatpush1.msra.mxu0 %v875
    %898 = vmatprep.subr.mxu0 0.0
    %899 = vmatpush1.msra.mxu0 %v876
    %900 = vmatprep.subr.mxu0 0.0
    %901 = vmatpush1.msra.mxu0 %v877
    %902 = vmatprep.subr.mxu0 0.0
    %903 = vmatpush1.msra.mxu0 %v878
    %904 = vmatprep.subr.mxu0 0.0
    %905 = vmatpush1.msra.mxu0 %v879
    %906 = vmatprep.subr.mxu0 0.0
    %907 = vmatpush1.msra.mxu0 %v880
    %908 = vmatprep.subr.mxu0 0.0
    %909 = vmatpush1.msra.mxu0 %v881
    %910 = vmatprep.subr.mxu0 0.0
    %911 = vmatpush1.msra.mxu0 %v882
    %912 = vmatprep.subr.mxu0 0.0
    %913 = vmatpush1.msra.mxu0 %v883
    %914 = vmatprep.subr.mxu0 0.0
    %915 = vmatpush1.msra.mxu0 %v884
    %916 = vmatprep.subr.mxu0 0.0
    %917 = vmatpush1.msra.mxu0 %v885
    %918 = vmatprep.subr.mxu0 0.0
    %919 = vmatpush1.msra.mxu0 %v886
    %920 = vmatprep.subr.mxu0 0.0
    %921 = vmatpush1.msra.mxu0 %v887
    %922 = vmatprep.subr.mxu0 0.0
    %923 = vmatpush1.msra.mxu0 0.0
    %924 = vmatprep.subr.mxu0 0.0
    %925 = vmatpush1.msra.mxu0 0.0
    %926 = vmatprep.subr.mxu0 0.0
    %927 = vmatpush1.msra.mxu0 0.0
    %928 = vmatprep.subr.mxu0 0.0
    %929 = vmatpush1.msra.mxu0 0.0
    %930 = vmatprep.subr.mxu0 0.0
    %931 = vmatpush1.msra.mxu0 0.0
    %932 = vmatprep.subr.mxu0 0.0
    %933 = vmatpush1.msra.mxu0 0.0
    %934 = vmatprep.subr.mxu0 0.0
    %935 = vmatpush1.msra.mxu0 0.0
    %936 = vmatprep.subr.mxu0 0.0
    %937 = vmatpush1.msra.mxu0 0.0
    %938 = vmatprep.subr.mxu0 0.0
    %939 = vmatpush1.msra.mxu0 0.0
    %940 = vmatprep.subr.mxu0 0.0
    %941 = vmatpush1.msra.mxu0 0.0
    %942 = vmatprep.subr.mxu0 0.0
    %943 = vmatpush1.msra.mxu0 0.0
    %944 = vmatprep.subr.mxu0 0.0
    %945 = vmatpush1.msra.mxu0 0.0
    %946 = vmatprep.subr.mxu0 0.0
    %947 = vmatpush1.msra.mxu0 0.0
    %948 = vmatprep.subr.mxu0 0.0
    %949 = vmatpush1.msra.mxu0 0.0
    %950 = vmatprep.subr.mxu0 0.0
    %951 = vmatpush1.msra.mxu0 0.0
    %952 = vmatprep.subr.mxu0 0.0
    %953 = vmatpush1.msra.mxu0 0.0
    %954 = vmatprep.mubr.f32.mxu0 0.0
    %955 = vmatmul.mubr.f32.gmra.mrb[0].mxu0 %v743
    %v956 = vpop.f32.mrb[0].mxu0
    %v957 = vadd.f32 0.0, %v956
    %v958 = vpop.f32.mrb[0].mxu0
    %959 = vdwg.mxu0
    %v960 = vsel %vm196, %v957, 0.0
    %v961 = vrot.slane %v960, 4
    %v962 = vadd.f32 %v960, %v961
    %v963 = vrot.slane %v962, 2
    %v964 = vadd.f32 %v962, %v963
    %v965 = vrot.slane %v964, 1
    %v966 = vadd.f32 %v964, %v965
    %v967 = vmul.f32 %v966, %v204
    %v968 = vmul.f32 %v957, %v957
    %v969 = vsel %vm196, %v968, 0.0
    %v970 = vrot.slane %v969, 4
    %v971 = vadd.f32 %v969, %v970
    %v972 = vrot.slane %v971, 2
    %v973 = vadd.f32 %v971, %v972
    %v974 = vrot.slane %v973, 1
    %v975 = vadd.f32 %v973, %v974
    %v976 = vmul.f32 %v975, %v204
    %v977 = vmul.f32 %v967, %v967
    %v978 = vsub.f32 %v976, %v977
    %v979 = vmax.f32 %v978, 0.0
    %v980 = vsub.f32 %v957, %v967
    %v981 = vadd.f32 %v979, 1e-05
    %v982 = vrsqrt.pop %v981
    %v983 = vmul.f32 %v980, %v982
    %v984 = vlaneseq
    %v985 = vshrl.u32 %v984, 7
    %v986 = vsub.s32 0, %v985
    %v987 = vrot.slane %v889, %v986
    %v988 = vmul.f32 %v983, %v987
    %v989 = vlaneseq
    %v990 = vshrl.u32 %v989, 7
    %v991 = vsub.s32 1, %v990
    %v992 = vrot.slane %v889, %v991
    %v993 = vadd.f32 %v988, %v992
    %v994 = vmul.f32 %v993, 0.5
    %v995 = vtanh.pop %v994
    %v996 = vadd.f32 %v995, 1.0
    %v997 = vmul.f32 %v996, 0.5
    %s998 = scalar_lea.vmem [#allocation2], 896
    %v999 = vld [vmem:[%s998] sm:$0xff]
    %v1000 = vld [vmem:[%s998 + $0x8] sm:$0xff]
    %v1001 = vld [vmem:[%s998 + $0x10] sm:$0xff]
    %v1002 = vld [vmem:[%s998 + $0x18] sm:$0xff]
    %v1003 = vld [vmem:[%s998 + $0x20] sm:$0xff]
    %v1004 = vld [vmem:[%s998 + $0x28] sm:$0xff]
    %v1005 = vld [vmem:[%s998 + $0x30] sm:$0xff]
    %v1006 = vld [vmem:[%s998 + $0x38] sm:$0xff]
    %v1007 = vld [vmem:[%s998 + $0x40] sm:$0xff]
    %v1008 = vld [vmem:[%s998 + $0x48] sm:$0xff]
    %v1009 = vld [vmem:[%s998 + $0x50] sm:$0xff]
    %v1010 = vld [vmem:[%s998 + $0x58] sm:$0xff]
    %v1011 = vld [vmem:[%s998 + $0x60] sm:$0xff]
    %v1012 = vld [vmem:[%s998 + $0x68] sm:$0xff]
    %v1013 = vld [vmem:[%s998 + $0x70] sm:$0xff]
    %v1014 = vld [vmem:[%s998 + $0x78] sm:$0xff]
    %s1015 = scalar_lea.vmem [#allocation4], 14
    %v1016 = vld [vmem:[%s1015] sm:$0x3]
    %1017 = vmatprep.subr.mxu0 0.0
    %1018 = vmatpush1.msra.mxu0 %v999
    %1019 = vmatprep.subr.mxu0 0.0
    %1020 = vmatpush1.msra.mxu0 %v1000
    %1021 = vmatprep.subr.mxu0 0.0
    %1022 = vmatpush1.msra.mxu0 %v1001
    %1023 = vmatprep.subr.mxu0 0.0
    %1024 = vmatpush1.msra.mxu0 %v1002
    %1025 = vmatprep.subr.mxu0 0.0
    %1026 = vmatpush1.msra.mxu0 %v1003
    %1027 = vmatprep.subr.mxu0 0.0
    %1028 = vmatpush1.msra.mxu0 %v1004
    %1029 = vmatprep.subr.mxu0 0.0
    %1030 = vmatpush1.msra.mxu0 %v1005
    %1031 = vmatprep.subr.mxu0 0.0
    %1032 = vmatpush1.msra.mxu0 %v1006
    %1033 = vmatprep.subr.mxu0 0.0
    %1034 = vmatpush1.msra.mxu0 %v1007
    %1035 = vmatprep.subr.mxu0 0.0
    %1036 = vmatpush1.msra.mxu0 %v1008
    %1037 = vmatprep.subr.mxu0 0.0
    %1038 = vmatpush1.msra.mxu0 %v1009
    %1039 = vmatprep.subr.mxu0 0.0
    %1040 = vmatpush1.msra.mxu0 %v1010
    %1041 = vmatprep.subr.mxu0 0.0
    %1042 = vmatpush1.msra.mxu0 %v1011
    %1043 = vmatprep.subr.mxu0 0.0
    %1044 = vmatpush1.msra.mxu0 %v1012
    %1045 = vmatprep.subr.mxu0 0.0
    %1046 = vmatpush1.msra.mxu0 %v1013
    %1047 = vmatprep.subr.mxu0 0.0
    %1048 = vmatpush1.msra.mxu0 %v1014
    %1049 = vmatprep.subr.mxu0 0.0
    %1050 = vmatpush1.msra.mxu0 0.0
    %1051 = vmatprep.subr.mxu0 0.0
    %1052 = vmatpush1.msra.mxu0 0.0
    %1053 = vmatprep.subr.mxu0 0.0
    %1054 = vmatpush1.msra.mxu0 0.0
    %1055 = vmatprep.subr.mxu0 0.0
    %1056 = vmatpush1.msra.mxu0 0.0
    %1057 = vmatprep.subr.mxu0 0.0
    %1058 = vmatpush1.msra.mxu0 0.0
    %1059 = vmatprep.subr.mxu0 0.0
    %1060 = vmatpush1.msra.mxu0 0.0
    %1061 = vmatprep.subr.mxu0 0.0
    %1062 = vmatpush1.msra.mxu0 0.0
    %1063 = vmatprep.subr.mxu0 0.0
    %1064 = vmatpush1.msra.mxu0 0.0
    %1065 = vmatprep.subr.mxu0 0.0
    %1066 = vmatpush1.msra.mxu0 0.0
    %1067 = vmatprep.subr.mxu0 0.0
    %1068 = vmatpush1.msra.mxu0 0.0
    %1069 = vmatprep.subr.mxu0 0.0
    %1070 = vmatpush1.msra.mxu0 0.0
    %1071 = vmatprep.subr.mxu0 0.0
    %1072 = vmatpush1.msra.mxu0 0.0
    %1073 = vmatprep.subr.mxu0 0.0
    %1074 = vmatpush1.msra.mxu0 0.0
    %1075 = vmatprep.subr.mxu0 0.0
    %1076 = vmatpush1.msra.mxu0 0.0
    %1077 = vmatprep.subr.mxu0 0.0
    %1078 = vmatpush1.msra.mxu0 0.0
    %1079 = vmatprep.subr.mxu0 0.0
    %1080 = vmatpush1.msra.mxu0 0.0
    %1081 = vmatprep.mubr.f32.mxu0 0.0
    %1082 = vmatmul.mubr.f32.gmra.mrb[0].mxu0 %v870
    %v1083 = vpop.f32.mrb[0].mxu0
    %v1084 = vadd.f32 0.0, %v1083
    %v1085 = vpop.f32.mrb[0].mxu0
    %1086 = vdwg.mxu0
    %v1087 = vsel %vm196, %v1084, 0.0
    %v1088 = vrot.slane %v1087, 4
    %v1089 = vadd.f32 %v1087, %v1088
    %v1090 = vrot.slane %v1089, 2
    %v1091 = vadd.f32 %v1089, %v1090
    %v1092 = vrot.slane %v1091, 1
    %v1093 = vadd.f32 %v1091, %v1092
    %v1094 = vmul.f32 %v1093, %v204
    %v1095 = vmul.f32 %v1084, %v1084
    %v1096 = vsel %vm196, %v1095, 0.0
    %v1097 = vrot.slane %v1096, 4
    %v1098 = vadd.f32 %v1096, %v1097
    %v1099 = vrot.slane %v1098, 2
    %v1100 = vadd.f32 %v1098, %v1099
    %v1101 = vrot.slane %v1100, 1
    %v1102 = vadd.f32 %v1100, %v1101
    %v1103 = vmul.f32 %v1102, %v204
    %v1104 = vmul.f32 %v1094, %v1094
    %v1105 = vsub.f32 %v1103, %v1104
    %v1106 = vmax.f32 %v1105, 0.0
    %v1107 = vsub.f32 %v1084, %v1094
    %v1108 = vadd.f32 %v1106, 1e-05
    %v1109 = vrsqrt.pop %v1108
    %v1110 = vmul.f32 %v1107, %v1109
    %v1111 = vlaneseq
    %v1112 = vshrl.u32 %v1111, 7
    %v1113 = vsub.s32 0, %v1112
    %v1114 = vrot.slane %v1016, %v1113
    %v1115 = vmul.f32 %v1110, %v1114
    %v1116 = vlaneseq
    %v1117 = vshrl.u32 %v1116, 7
    %v1118 = vsub.s32 1, %v1117
    %v1119 = vrot.slane %v1016, %v1118
    %v1120 = vadd.f32 %v1115, %v1119
    %v1121 = vmul.f32 %v1120, 0.5
    %v1122 = vtanh.pop %v1121
    %v1123 = vadd.f32 %v1122, 1.0
    %v1124 = vmul.f32 %v1123, 0.5
    %v1125 = vld [vmem:[#allocation6] sm:$0xff]
    %v1126 = vld [vmem:[#allocation6 + $0x8] sm:$0xff]
    %v1127 = vld [vmem:[#allocation6 + $0x10] sm:$0xff]
    %v1128 = vld [vmem:[#allocation6 + $0x18] sm:$0xff]
    %v1129 = vld [vmem:[#allocation6 + $0x20] sm:$0xff]
    %v1130 = vld [vmem:[#allocation6 + $0x28] sm:$0xff]
    %v1131 = vld [vmem:[#allocation6 + $0x30] sm:$0xff]
    %v1132 = vld [vmem:[#allocation6 + $0x38] sm:$0xff]
    %v1133 = vld [vmem:[#allocation6 + $0x40] sm:$0xff]
    %v1134 = vld [vmem:[#allocation6 + $0x48] sm:$0xff]
    %v1135 = vld [vmem:[#allocation6 + $0x50] sm:$0xff]
    %v1136 = vld [vmem:[#allocation6 + $0x58] sm:$0xff]
    %v1137 = vld [vmem:[#allocation6 + $0x60] sm:$0xff]
    %v1138 = vld [vmem:[#allocation6 + $0x68] sm:$0xff]
    %v1139 = vld [vmem:[#allocation6 + $0x70] sm:$0xff]
    %v1140 = vld [vmem:[#allocation6 + $0x78] sm:$0xff]
    %v1141 = vld [vmem:[#allocation6 + $0x80] sm:$0xff]
    %v1142 = vld [vmem:[#allocation6 + $0x88] sm:$0xff]
    %v1143 = vld [vmem:[#allocation6 + $0x90] sm:$0xff]
    %v1144 = vld [vmem:[#allocation6 + $0x98] sm:$0xff]
    %v1145 = vld [vmem:[#allocation6 + $0xa0] sm:$0xff]
    %v1146 = vld [vmem:[#allocation6 + $0xa8] sm:$0xff]
    %v1147 = vld [vmem:[#allocation6 + $0xb0] sm:$0xff]
    %v1148 = vld [vmem:[#allocation6 + $0xb8] sm:$0xff]
    %v1149 = vld [vmem:[#allocation6 + $0xc0] sm:$0xff]
    %v1150 = vld [vmem:[#allocation6 + $0xc8] sm:$0xff]
    %v1151 = vld [vmem:[#allocation6 + $0xd0] sm:$0xff]
    %v1152 = vld [vmem:[#allocation6 + $0xd8] sm:$0xff]
    %v1153 = vld [vmem:[#allocation6 + $0xe0] sm:$0xff]
    %v1154 = vld [vmem:[#allocation6 + $0xe8] sm:$0xff]
    %v1155 = vld [vmem:[#allocation6 + $0xf0] sm:$0xff]
    %v1156 = vld [vmem:[#allocation6 + $0xf8] sm:$0xff]
    %v1157 = vld [vmem:[#allocation6 + $0x100] sm:$0xff]
    %v1158 = vld [vmem:[#allocation6 + $0x108] sm:$0xff]
    %v1159 = vld [vmem:[#allocation6 + $0x110] sm:$0xff]
    %v1160 = vld [vmem:[#allocation6 + $0x118] sm:$0xff]
    %v1161 = vld [vmem:[#allocation6 + $0x120] sm:$0xff]
    %v1162 = vld [vmem:[#allocation6 + $0x128] sm:$0xff]
    %v1163 = vld [vmem:[#allocation6 + $0x130] sm:$0xff]
    %v1164 = vld [vmem:[#allocation6 + $0x138] sm:$0xff]
    %v1165 = vld [vmem:[#allocation6 + $0x140] sm:$0xff]
    %v1166 = vld [vmem:[#allocation6 + $0x148] sm:$0xff]
    %v1167 = vld [vmem:[#allocation6 + $0x150] sm:$0xff]
    %v1168 = vld [vmem:[#allocation6 + $0x158] sm:$0xff]
    %v1169 = vld [vmem:[#allocation6 + $0x160] sm:$0xff]
    %v1170 = vld [vmem:[#allocation6 + $0x168] sm:$0xff]
    %v1171 = vld [vmem:[#allocation6 + $0x170] sm:$0xff]
    %v1172 = vld [vmem:[#allocation6 + $0x178] sm:$0xff]
    %v1173 = vld [vmem:[#allocation6 + $0x180] sm:$0xff]
    %v1174 = vld [vmem:[#allocation6 + $0x188] sm:$0xff]
    %v1175 = vld [vmem:[#allocation6 + $0x190] sm:$0xff]
    %v1176 = vld [vmem:[#allocation6 + $0x198] sm:$0xff]
    %v1177 = vld [vmem:[#allocation6 + $0x1a0] sm:$0xff]
    %v1178 = vld [vmem:[#allocation6 + $0x1a8] sm:$0xff]
    %v1179 = vld [vmem:[#allocation6 + $0x1b0] sm:$0xff]
    %v1180 = vld [vmem:[#allocation6 + $0x1b8] sm:$0xff]
    %v1181 = vld [vmem:[#allocation6 + $0x1c0] sm:$0xff]
    %v1182 = vld [vmem:[#allocation6 + $0x1c8] sm:$0xff]
    %v1183 = vld [vmem:[#allocation6 + $0x1d0] sm:$0xff]
    %v1184 = vld [vmem:[#allocation6 + $0x1d8] sm:$0xff]
    %v1185 = vld [vmem:[#allocation6 + $0x1e0] sm:$0xff]
    %v1186 = vld [vmem:[#allocation6 + $0x1e8] sm:$0xff]
    %v1187 = vld [vmem:[#allocation6 + $0x1f0] sm:$0xff]
    %v1188 = vld [vmem:[#allocation6 + $0x1f8] sm:$0xff]
    %v1189 = vld [vmem:[#allocation6 + $0x200] sm:$0xff]
    %v1190 = vld [vmem:[#allocation6 + $0x208] sm:$0xff]
    %v1191 = vld [vmem:[#allocation6 + $0x210] sm:$0xff]
    %v1192 = vld [vmem:[#allocation6 + $0x218] sm:$0xff]
    %v1193 = vld [vmem:[#allocation6 + $0x220] sm:$0xff]
    %v1194 = vld [vmem:[#allocation6 + $0x228] sm:$0xff]
    %v1195 = vld [vmem:[#allocation6 + $0x230] sm:$0xff]
    %v1196 = vld [vmem:[#allocation6 + $0x238] sm:$0xff]
    %vm1197 = vcmask 64512
    %v1199 = vsel %vm1197, %v1124, 0
    %1201 = vmatprep.subr.mxu0 %v1190
    %1202 = vmatpush1.msra.mxu0 %v1189
    %1203 = vmatprep.subr.mxu0 0.0
    %1204 = vmatpush1.msra.mxu0 0.0
    %1205 = vmatprep.subr.mxu0 0.0
    %1206 = vmatpush1.msra.mxu0 0.0
    %1207 = vmatprep.subr.mxu0 0.0
    %1208 = vmatpush1.msra.mxu0 0.0
    %1209 = vmatprep.subr.mxu0 0.0
    %1210 = vmatpush1.msra.mxu0 0.0
    %1211 = vmatprep.subr.mxu0 0.0
    %1212 = vmatpush1.msra.mxu0 0.0
    %1213 = vmatprep.subr.mxu0 0.0
    %1214 = vmatpush1.msra.mxu0 0.0
    %1215 = vmatprep.subr.mxu0 0.0
    %1216 = vmatpush1.msra.mxu0 0.0
    %1217 = vmatprep.subr.mxu0 0.0
    %1218 = vmatpush1.msra.mxu0 0.0
    %1219 = vmatprep.subr.mxu0 0.0
    %1220 = vmatpush1.msra.mxu0 0.0
    %1221 = vmatprep.subr.mxu0 0.0
    %1222 = vmatpush1.msra.mxu0 0.0
    %1223 = vmatprep.subr.mxu0 0.0
    %1224 = vmatpush1.msra.mxu0 0.0
    %1225 = vmatprep.subr.mxu0 0.0
    %1226 = vmatpush1.msra.mxu0 0.0
    %1227 = vmatprep.subr.mxu0 0.0
    %1228 = vmatpush1.msra.mxu0 0.0
    %1229 = vmatprep.subr.mxu0 0.0
    %1230 = vmatpush1.msra.mxu0 0.0
    %1231 = vmatprep.subr.mxu0 0.0
    %1232 = vmatpush1.msra.mxu0 0.0
    %1233 = vmatprep.subr.mxu0 0.0
    %1234 = vmatpush1.msra.mxu0 0.0
    %1235 = vmatprep.subr.mxu0 0.0
    %1236 = vmatpush1.msra.mxu0 0.0
    %1237 = vmatprep.subr.mxu0 0.0
    %1238 = vmatpush1.msra.mxu0 0.0
    %1239 = vmatprep.subr.mxu0 0.0
    %1240 = vmatpush1.msra.mxu0 0.0
    %1241 = vmatprep.subr.mxu0 0.0
    %1242 = vmatpush1.msra.mxu0 0.0
    %1243 = vmatprep.subr.mxu0 0.0
    %1244 = vmatpush1.msra.mxu0 0.0
    %1245 = vmatprep.subr.mxu0 0.0
    %1246 = vmatpush1.msra.mxu0 0.0
    %1247 = vmatprep.subr.mxu0 0.0
    %1248 = vmatpush1.msra.mxu0 0.0
    %1249 = vmatprep.subr.mxu0 0.0
    %1250 = vmatpush1.msra.mxu0 0.0
    %1251 = vmatprep.subr.mxu0 0.0
    %1252 = vmatpush1.msra.mxu0 0.0
    %1253 = vmatprep.subr.mxu0 0.0
    %1254 = vmatpush1.msra.mxu0 0.0
    %1255 = vmatprep.subr.mxu0 0.0
    %1256 = vmatpush1.msra.mxu0 0.0
    %1257 = vmatprep.subr.mxu0 0.0
    %1258 = vmatpush1.msra.mxu0 0.0
    %1259 = vmatprep.subr.mxu0 0.0
    %1260 = vmatpush1.msra.mxu0 0.0
    %1261 = vmatprep.subr.mxu0 0.0
    %1262 = vmatpush1.msra.mxu0 0.0
    %1263 = vmatprep.subr.mxu0 0.0
    %1264 = vmatpush1.msra.mxu0 0.0
    %1265 = vmatprep.mubr.f32.mxu0 0.0
    %1266 = vmatmul.mubr.f32.gmra.mrb[0].mxu0 %v1199
    %v1267 = vpop.f32.mrb[0].mxu0
    %v1268 = vadd.f32 0.0, %v1267
    %v1269 = vpop.f32.mrb[0].mxu0
    %v1270 = vadd.f32 0.0, %v1269
    %1271 = vdwg.mxu0
    %1272 = vmatprep.subr.mxu0 %v1192
    %1273 = vmatpush1.msra.mxu0 %v1191
    %1274 = vmatprep.subr.mxu0 0.0
    %1275 = vmatpush1.msra.mxu0 0.0
    %1276 = vmatprep.subr.mxu0 0.0
    %1277 = vmatpush1.msra.mxu0 0.0
    %1278 = vmatprep.subr.mxu0 0.0
    %1279 = vmatpush1.msra.mxu0 0.0
    %1280 = vmatprep.subr.mxu0 0.0
    %1281 = vmatpush1.msra.mxu0 0.0
    %1282 = vmatprep.subr.mxu0 0.0
    %1283 = vmatpush1.msra.mxu0 0.0
    %1284 = vmatprep.subr.mxu0 0.0
    %1285 = vmatpush1.msra.mxu0 0.0
    %1286 = vmatprep.subr.mxu0 0.0
    %1287 = vmatpush1.msra.mxu0 0.0
    %1288 = vmatprep.subr.mxu0 0.0
    %1289 = vmatpush1.msra.mxu0 0.0
    %1290 = vmatprep.subr.mxu0 0.0
    %1291 = vmatpush1.msra.mxu0 0.0
    %1292 = vmatprep.subr.mxu0 0.0
    %1293 = vmatpush1.msra.mxu0 0.0
    %1294 = vmatprep.subr.mxu0 0.0
    %1295 = vmatpush1.msra.mxu0 0.0
    %1296 = vmatprep.subr.mxu0 0.0
    %1297 = vmatpush1.msra.mxu0 0.0
    %1298 = vmatprep.subr.mxu0 0.0
    %1299 = vmatpush1.msra.mxu0 0.0
    %1300 = vmatprep.subr.mxu0 0.0
    %1301 = vmatpush1.msra.mxu0 0.0
    %1302 = vmatprep.subr.mxu0 0.0
    %1303 = vmatpush1.msra.mxu0 0.0
    %1304 = vmatprep.subr.mxu0 0.0
    %1305 = vmatpush1.msra.mxu0 0.0
    %1306 = vmatprep.subr.mxu0 0.0
    %1307 = vmatpush1.msra.mxu0 0.0
    %1308 = vmatprep.subr.mxu0 0.0
    %1309 = vmatpush1.msra.mxu0 0.0
    %1310 = vmatprep.subr.mxu0 0.0
    %1311 = vmatpush1.msra.mxu0 0.0
    %1312 = vmatprep.subr.mxu0 0.0
    %1313 = vmatpush1.msra.mxu0 0.0
    %1314 = vmatprep.subr.mxu0 0.0
    %1315 = vmatpush1.msra.mxu0 0.0
    %1316 = vmatprep.subr.mxu0 0.0
    %1317 = vmatpush1.msra.mxu0 0.0
    %1318 = vmatprep.subr.mxu0 0.0
    %1319 = vmatpush1.msra.mxu0 0.0
    %1320 = vmatprep.subr.mxu0 0.0
    %1321 = vmatpush1.msra.mxu0 0.0
    %1322 = vmatprep.subr.mxu0 0.0
    %1323 = vmatpush1.msra.mxu0 0.0
    %1324 = vmatprep.subr.mxu0 0.0
    %1325 = vmatpush1.msra.mxu0 0.0
    %1326 = vmatprep.subr.mxu0 0.0
    %1327 = vmatpush1.msra.mxu0 0.0
    %1328 = vmatprep.subr.mxu0 0.0
    %1329 = vmatpush1.msra.mxu0 0.0
    %1330 = vmatprep.subr.mxu0 0.0
    %1331 = vmatpush1.msra.mxu0 0.0
    %1332 = vmatprep.subr.mxu0 0.0
    %1333 = vmatpush1.msra.mxu0 0.0
    %1334 = vmatprep.subr.mxu0 0.0
    %1335 = vmatpush1.msra.mxu0 0.0
    %1336 = vmatprep.mubr.f32.mxu0 0.0
    %1337 = vmatmul.mubr.f32.gmra.mrb[0].mxu0 %v1199
    %v1338 = vpop.f32.mrb[0].mxu0
    %v1339 = vadd.f32 0.0, %v1338
    %v1340 = vpop.f32.mrb[0].mxu0
    %v1341 = vadd.f32 0.0, %v1340
    %1342 = vdwg.mxu0
    %1343 = vmatprep.subr.mxu0 %v1194
    %1344 = vmatpush1.msra.mxu0 %v1193
    %1345 = vmatprep.subr.mxu0 0.0
    %1346 = vmatpush1.msra.mxu0 0.0
    %1347 = vmatprep.subr.mxu0 0.0
    %1348 = vmatpush1.msra.mxu0 0.0
    %1349 = vmatprep.subr.mxu0 0.0
    %1350 = vmatpush1.msra.mxu0 0.0
    %1351 = vmatprep.subr.mxu0 0.0
    %1352 = vmatpush1.msra.mxu0 0.0
    %1353 = vmatprep.subr.mxu0 0.0
    %1354 = vmatpush1.msra.mxu0 0.0
    %1355 = vmatprep.subr.mxu0 0.0
    %1356 = vmatpush1.msra.mxu0 0.0
    %1357 = vmatprep.subr.mxu0 0.0
    %1358 = vmatpush1.msra.mxu0 0.0
    %1359 = vmatprep.subr.mxu0 0.0
    %1360 = vmatpush1.msra.mxu0 0.0
    %1361 = vmatprep.subr.mxu0 0.0
    %1362 = vmatpush1.msra.mxu0 0.0
    %1363 = vmatprep.subr.mxu0 0.0
    %1364 = vmatpush1.msra.mxu0 0.0
    %1365 = vmatprep.subr.mxu0 0.0
    %1366 = vmatpush1.msra.mxu0 0.0
    %1367 = vmatprep.subr.mxu0 0.0
    %1368 = vmatpush1.msra.mxu0 0.0
    %1369 = vmatprep.subr.mxu0 0.0
    %1370 = vmatpush1.msra.mxu0 0.0
    %1371 = vmatprep.subr.mxu0 0.0
    %1372 = vmatpush1.msra.mxu0 0.0
    %1373 = vmatprep.subr.mxu0 0.0
    %1374 = vmatpush1.msra.mxu0 0.0
    %1375 = vmatprep.subr.mxu0 0.0
    %1376 = vmatpush1.msra.mxu0 0.0
    %1377 = vmatprep.subr.mxu0 0.0
    %1378 = vmatpush1.msra.mxu0 0.0
    %1379 = vmatprep.subr.mxu0 0.0
    %1380 = vmatpush1.msra.mxu0 0.0
    %1381 = vmatprep.subr.mxu0 0.0
    %1382 = vmatpush1.msra.mxu0 0.0
    %1383 = vmatprep.subr.mxu0 0.0
    %1384 = vmatpush1.msra.mxu0 0.0
    %1385 = vmatprep.subr.mxu0 0.0
    %1386 = vmatpush1.msra.mxu0 0.0
    %1387 = vmatprep.subr.mxu0 0.0
    %1388 = vmatpush1.msra.mxu0 0.0
    %1389 = vmatprep.subr.mxu0 0.0
    %1390 = vmatpush1.msra.mxu0 0.0
    %1391 = vmatprep.subr.mxu0 0.0
    %1392 = vmatpush1.msra.mxu0 0.0
    %1393 = vmatprep.subr.mxu0 0.0
    %1394 = vmatpush1.msra.mxu0 0.0
    %1395 = vmatprep.subr.mxu0 0.0
    %1396 = vmatpush1.msra.mxu0 0.0
    %1397 = vmatprep.subr.mxu0 0.0
    %1398 = vmatpush1.msra.mxu0 0.0
    %1399 = vmatprep.subr.mxu0 0.0
    %1400 = vmatpush1.msra.mxu0 0.0
    %1401 = vmatprep.subr.mxu0 0.0
    %1402 = vmatpush1.msra.mxu0 0.0
    %1403 = vmatprep.subr.mxu0 0.0
    %1404 = vmatpush1.msra.mxu0 0.0
    %1405 = vmatprep.subr.mxu0 0.0
    %1406 = vmatpush1.msra.mxu0 0.0
    %1407 = vmatprep.mubr.f32.mxu0 0.0
    %1408 = vmatmul.mubr.f32.gmra.mrb[0].mxu0 %v1199
    %v1409 = vpop.f32.mrb[0].mxu0
    %v1410 = vadd.f32 0.0, %v1409
    %v1411 = vpop.f32.mrb[0].mxu0
    %v1412 = vadd.f32 0.0, %v1411
    %1413 = vdwg.mxu0
    %1414 = vmatprep.subr.mxu0 %v1196
    %1415 = vmatpush1.msra.mxu0 %v1195
    %1416 = vmatprep.subr.mxu0 0.0
    %1417 = vmatpush1.msra.mxu0 0.0
    %1418 = vmatprep.subr.mxu0 0.0
    %1419 = vmatpush1.msra.mxu0 0.0
    %1420 = vmatprep.subr.mxu0 0.0
    %1421 = vmatpush1.msra.mxu0 0.0
    %1422 = vmatprep.subr.mxu0 0.0
    %1423 = vmatpush1.msra.mxu0 0.0
    %1424 = vmatprep.subr.mxu0 0.0
    %1425 = vmatpush1.msra.mxu0 0.0
    %1426 = vmatprep.subr.mxu0 0.0
    %1427 = vmatpush1.msra.mxu0 0.0
    %1428 = vmatprep.subr.mxu0 0.0
    %1429 = vmatpush1.msra.mxu0 0.0
    %1430 = vmatprep.subr.mxu0 0.0
    %1431 = vmatpush1.msra.mxu0 0.0
    %1432 = vmatprep.subr.mxu0 0.0
    %1433 = vmatpush1.msra.mxu0 0.0
    %1434 = vmatprep.subr.mxu0 0.0
    %1435 = vmatpush1.msra.mxu0 0.0
    %1436 = vmatprep.subr.mxu0 0.0
    %1437 = vmatpush1.msra.mxu0 0.0
    %1438 = vmatprep.subr.mxu0 0.0
    %1439 = vmatpush1.msra.mxu0 0.0
    %1440 = vmatprep.subr.mxu0 0.0
    %1441 = vmatpush1.msra.mxu0 0.0
    %1442 = vmatprep.subr.mxu0 0.0
    %1443 = vmatpush1.msra.mxu0 0.0
    %1444 = vmatprep.subr.mxu0 0.0
    %1445 = vmatpush1.msra.mxu0 0.0
    %1446 = vmatprep.subr.mxu0 0.0
    %1447 = vmatpush1.msra.mxu0 0.0
    %1448 = vmatprep.subr.mxu0 0.0
    %1449 = vmatpush1.msra.mxu0 0.0
    %1450 = vmatprep.subr.mxu0 0.0
    %1451 = vmatpush1.msra.mxu0 0.0
    %1452 = vmatprep.subr.mxu0 0.0
    %1453 = vmatpush1.msra.mxu0 0.0
    %1454 = vmatprep.subr.mxu0 0.0
    %1455 = vmatpush1.msra.mxu0 0.0
    %1456 = vmatprep.subr.mxu0 0.0
    %1457 = vmatpush1.msra.mxu0 0.0
    %1458 = vmatprep.subr.mxu0 0.0
    %1459 = vmatpush1.msra.mxu0 0.0
    %1460 = vmatprep.subr.mxu0 0.0
    %1461 = vmatpush1.msra.mxu0 0.0
    %1462 = vmatprep.subr.mxu0 0.0
    %1463 = vmatpush1.msra.mxu0 0.0
    %1464 = vmatprep.subr.mxu0 0.0
    %1465 = vmatpush1.msra.mxu0 0.0
    %1466 = vmatprep.subr.mxu0 0.0
    %1467 = vmatpush1.msra.mxu0 0.0
    %1468 = vmatprep.subr.mxu0 0.0
    %1469 = vmatpush1.msra.mxu0 0.0
    %1470 = vmatprep.subr.mxu0 0.0
    %1471 = vmatpush1.msra.mxu0 0.0
    %1472 = vmatprep.subr.mxu0 0.0
    %1473 = vmatpush1.msra.mxu0 0.0
    %1474 = vmatprep.subr.mxu0 0.0
    %1475 = vmatpush1.msra.mxu0 0.0
    %1476 = vmatprep.subr.mxu0 0.0
    %1477 = vmatpush1.msra.mxu0 0.0
    %1478 = vmatprep.mubr.f32.mxu0 0.0
    %1479 = vmatmul.mubr.f32.gmra.mrb[0].mxu0 %v1199
    %v1480 = vpop.f32.mrb[0].mxu0
    %v1481 = vadd.f32 0.0, %v1480
    %v1482 = vpop.f32.mrb[0].mxu0
    %v1483 = vadd.f32 0.0, %v1482
    %1484 = vdwg.mxu0
    %vm1485 = vcmask 523264
    %v1487 = vsel %vm1485, %v997, 0
    %1489 = vmatprep.subr.mxu0 %v1126
    %1490 = vmatpush1.msra.mxu0 %v1125
    %1491 = vmatprep.subr.mxu0 %v1134
    %1492 = vmatpush1.msra.mxu0 %v1133
    %1493 = vmatprep.subr.mxu0 %v1142
    %1494 = vmatpush1.msra.mxu0 %v1141
    %1495 = vmatprep.subr.mxu0 %v1150
    %1496 = vmatpush1.msra.mxu0 %v1149
    %1497 = vmatprep.subr.mxu0 %v1158
    %1498 = vmatpush1.msra.mxu0 %v1157
    %1499 = vmatprep.subr.mxu0 %v1166
    %1500 = vmatpush1.msra.mxu0 %v1165
    %1501 = vmatprep.subr.mxu0 %v1174
    %1502 = vmatpush1.msra.mxu0 %v1173
    %1503 = vmatprep.subr.mxu0 %v1182
    %1504 = vmatpush1.msra.mxu0 %v1181
    %1505 = vmatprep.subr.mxu0 0.0
    %1506 = vmatpush1.msra.mxu0 0.0
    %1507 = vmatprep.subr.mxu0 0.0
    %1508 = vmatpush1.msra.mxu0 0.0
    %1509 = vmatprep.subr.mxu0 0.0
    %1510 = vmatpush1.msra.mxu0 0.0
    %1511 = vmatprep.subr.mxu0 0.0
    %1512 = vmatpush1.msra.mxu0 0.0
    %1513 = vmatprep.subr.mxu0 0.0
    %1514 = vmatpush1.msra.mxu0 0.0
    %1515 = vmatprep.subr.mxu0 0.0
    %1516 = vmatpush1.msra.mxu0 0.0
    %1517 = vmatprep.subr.mxu0 0.0
    %1518 = vmatpush1.msra.mxu0 0.0
    %1519 = vmatprep.subr.mxu0 0.0
    %1520 = vmatpush1.msra.mxu0 0.0
    %1521 = vmatprep.subr.mxu0 0.0
    %1522 = vmatpush1.msra.mxu0 0.0
    %1523 = vmatprep.subr.mxu0 0.0
    %1524 = vmatpush1.msra.mxu0 0.0
    %1525 = vmatprep.subr.mxu0 0.0
    %1526 = vmatpush1.msra.mxu0 0.0
    %1527 = vmatprep.subr.mxu0 0.0
    %1528 = vmatpush1.msra.mxu0 0.0
    %1529 = vmatprep.subr.mxu0 0.0
    %1530 = vmatpush1.msra.mxu0 0.0
    %1531 = vmatprep.subr.mxu0 0.0
    %1532 = vmatpush1.msra.mxu0 0.0
    %1533 = vmatprep.subr.mxu0 0.0
    %1534 = vmatpush1.msra.mxu0 0.0
    %1535 = vmatprep.subr.mxu0 0.0
    %1536 = vmatpush1.msra.mxu0 0.0
    %1537 = vmatprep.subr.mxu0 0.0
    %1538 = vmatpush1.msra.mxu0 0.0
    %1539 = vmatprep.subr.mxu0 0.0
    %1540 = vmatpush1.msra.mxu0 0.0
    %1541 = vmatprep.subr.mxu0 0.0
    %1542 = vmatpush1.msra.mxu0 0.0
    %1543 = vmatprep.subr.mxu0 0.0
    %1544 = vmatpush1.msra.mxu0 0.0
    %1545 = vmatprep.subr.mxu0 0.0
    %1546 = vmatpush1.msra.mxu0 0.0
    %1547 = vmatprep.subr.mxu0 0.0
    %1548 = vmatpush1.msra.mxu0 0.0
    %1549 = vmatprep.subr.mxu0 0.0
    %1550 = vmatpush1.msra.mxu0 0.0
    %1551 = vmatprep.subr.mxu0 0.0
    %1552 = vmatpush1.msra.mxu0 0.0
    %1553 = vmatprep.mubr.f32.mxu0 0.0
    %1554 = vmatmul.mubr.f32.gmra.mrb[0].mxu0 %v1487
    %v1555 = vpop.f32.mrb[0].mxu0
    %v1556 = vadd.f32 %v1268, %v1555
    %v1557 = vpop.f32.mrb[0].mxu0
    %v1558 = vadd.f32 %v1270, %v1557
    %1559 = vdwg.mxu0
    %1560 = vmatprep.subr.mxu0 %v1128
    %1561 = vmatpush1.msra.mxu0 %v1127
    %1562 = vmatprep.subr.mxu0 %v1136
    %1563 = vmatpush1.msra.mxu0 %v1135
    %1564 = vmatprep.subr.mxu0 %v1144
    %1565 = vmatpush1.msra.mxu0 %v1143
    %1566 = vmatprep.subr.mxu0 %v1152
    %1567 = vmatpush1.msra.mxu0 %v1151
    %1568 = vmatprep.subr.mxu0 %v1160
    %1569 = vmatpush1.msra.mxu0 %v1159
    %1570 = vmatprep.subr.mxu0 %v1168
    %1571 = vmatpush1.msra.mxu0 %v1167
    %1572 = vmatprep.subr.mxu0 %v1176
    %1573 = vmatpush1.msra.mxu0 %v1175
    %1574 = vmatprep.subr.mxu0 %v1184
    %1575 = vmatpush1.msra.mxu0 %v1183
    %1576 = vmatprep.subr.mxu0 0.0
    %1577 = vmatpush1.msra.mxu0 0.0
    %1578 = vmatprep.subr.mxu0 0.0
    %1579 = vmatpush1.msra.mxu0 0.0
    %1580 = vmatprep.subr.mxu0 0.0
    %1581 = vmatpush1.msra.mxu0 0.0
    %1582 = vmatprep.subr.mxu0 0.0
    %1583 = vmatpush1.msra.mxu0 0.0
    %1584 = vmatprep.subr.mxu0 0.0
    %1585 = vmatpush1.msra.mxu0 0.0
    %1586 = vmatprep.subr.mxu0 0.0
    %1587 = vmatpush1.msra.mxu0 0.0
    %1588 = vmatprep.subr.mxu0 0.0
    %1589 = vmatpush1.msra.mxu0 0.0
    %1590 = vmatprep.subr.mxu0 0.0
    %1591 = vmatpush1.msra.mxu0 0.0
    %1592 = vmatprep.subr.mxu0 0.0
    %1593 = vmatpush1.msra.mxu0 0.0
    %1594 = vmatprep.subr.mxu0 0.0
    %1595 = vmatpush1.msra.mxu0 0.0
    %1596 = vmatprep.subr.mxu0 0.0
    %1597 = vmatpush1.msra.mxu0 0.0
    %1598 = vmatprep.subr.mxu0 0.0
    %1599 = vmatpush1.msra.mxu0 0.0
    %1600 = vmatprep.subr.mxu0 0.0
    %1601 = vmatpush1.msra.mxu0 0.0
    %1602 = vmatprep.subr.mxu0 0.0
    %1603 = vmatpush1.msra.mxu0 0.0
    %1604 = vmatprep.subr.mxu0 0.0
    %1605 = vmatpush1.msra.mxu0 0.0
    %1606 = vmatprep.subr.mxu0 0.0
    %1607 = vmatpush1.msra.mxu0 0.0
    %1608 = vmatprep.subr.mxu0 0.0
    %1609 = vmatpush1.msra.mxu0 0.0
    %1610 = vmatprep.subr.mxu0 0.0
    %1611 = vmatpush1.msra.mxu0 0.0
    %1612 = vmatprep.subr.mxu0 0.0
    %1613 = vmatpush1.msra.mxu0 0.0
    %1614 = vmatprep.subr.mxu0 0.0
    %1615 = vmatpush1.msra.mxu0 0.0
    %1616 = vmatprep.subr.mxu0 0.0
    %1617 = vmatpush1.msra.mxu0 0.0
    %1618 = vmatprep.subr.mxu0 0.0
    %1619 = vmatpush1.msra.mxu0 0.0
    %1620 = vmatprep.subr.mxu0 0.0
    %1621 = vmatpush1.msra.mxu0 0.0
    %1622 = vmatprep.subr.mxu0 0.0
    %1623 = vmatpush1.msra.mxu0 0.0
    %1624 = vmatprep.mubr.f32.mxu0 0.0
    %1625 = vmatmul.mubr.f32.gmra.mrb[0].mxu0 %v1487
    %v1626 = vpop.f32.mrb[0].mxu0
    %v1627 = vadd.f32 %v1339, %v1626
    %v1628 = vpop.f32.mrb[0].mxu0
    %v1629 = vadd.f32 %v1341, %v1628
    %1630 = vdwg.mxu0
    %1631 = vmatprep.subr.mxu0 %v1130
    %1632 = vmatpush1.msra.mxu0 %v1129
    %1633 = vmatprep.subr.mxu0 %v1138
    %1634 = vmatpush1.msra.mxu0 %v1137
    %1635 = vmatprep.subr.mxu0 %v1146
    %1636 = vmatpush1.msra.mxu0 %v1145
    %1637 = vmatprep.subr.mxu0 %v1154
    %1638 = vmatpush1.msra.mxu0 %v1153
    %1639 = vmatprep.subr.mxu0 %v1162
    %1640 = vmatpush1.msra.mxu0 %v1161
    %1641 = vmatprep.subr.mxu0 %v1170
    %1642 = vmatpush1.msra.mxu0 %v1169
    %1643 = vmatprep.subr.mxu0 %v1178
    %1644 = vmatpush1.msra.mxu0 %v1177
    %1645 = vmatprep.subr.mxu0 %v1186
    %1646 = vmatpush1.msra.mxu0 %v1185
    %1647 = vmatprep.subr.mxu0 0.0
    %1648 = vmatpush1.msra.mxu0 0.0
    %1649 = vmatprep.subr.mxu0 0.0
    %1650 = vmatpush1.msra.mxu0 0.0
    %1651 = vmatprep.subr.mxu0 0.0
    %1652 = vmatpush1.msra.mxu0 0.0
    %1653 = vmatprep.subr.mxu0 0.0
    %1654 = vmatpush1.msra.mxu0 0.0
    %1655 = vmatprep.subr.mxu0 0.0
    %1656 = vmatpush1.msra.mxu0 0.0
    %1657 = vmatprep.subr.mxu0 0.0
    %1658 = vmatpush1.msra.mxu0 0.0
    %1659 = vmatprep.subr.mxu0 0.0
    %1660 = vmatpush1.msra.mxu0 0.0
    %1661 = vmatprep.subr.mxu0 0.0
    %1662 = vmatpush1.msra.mxu0 0.0
    %1663 = vmatprep.subr.mxu0 0.0
    %1664 = vmatpush1.msra.mxu0 0.0
    %1665 = vmatprep.subr.mxu0 0.0
    %1666 = vmatpush1.msra.mxu0 0.0
    %1667 = vmatprep.subr.mxu0 0.0
    %1668 = vmatpush1.msra.mxu0 0.0
    %1669 = vmatprep.subr.mxu0 0.0
    %1670 = vmatpush1.msra.mxu0 0.0
    %1671 = vmatprep.subr.mxu0 0.0
    %1672 = vmatpush1.msra.mxu0 0.0
    %1673 = vmatprep.subr.mxu0 0.0
    %1674 = vmatpush1.msra.mxu0 0.0
    %1675 = vmatprep.subr.mxu0 0.0
    %1676 = vmatpush1.msra.mxu0 0.0
    %1677 = vmatprep.subr.mxu0 0.0
    %1678 = vmatpush1.msra.mxu0 0.0
    %1679 = vmatprep.subr.mxu0 0.0
    %1680 = vmatpush1.msra.mxu0 0.0
    %1681 = vmatprep.subr.mxu0 0.0
    %1682 = vmatpush1.msra.mxu0 0.0
    %1683 = vmatprep.subr.mxu0 0.0
    %1684 = vmatpush1.msra.mxu0 0.0
    %1685 = vmatprep.subr.mxu0 0.0
    %1686 = vmatpush1.msra.mxu0 0.0
    %1687 = vmatprep.subr.mxu0 0.0
    %1688 = vmatpush1.msra.mxu0 0.0
    %1689 = vmatprep.subr.mxu0 0.0
    %1690 = vmatpush1.msra.mxu0 0.0
    %1691 = vmatprep.subr.mxu0 0.0
    %1692 = vmatpush1.msra.mxu0 0.0
    %1693 = vmatprep.subr.mxu0 0.0
    %1694 = vmatpush1.msra.mxu0 0.0
    %1695 = vmatprep.mubr.f32.mxu0 0.0
    %1696 = vmatmul.mubr.f32.gmra.mrb[0].mxu0 %v1487
    %v1697 = vpop.f32.mrb[0].mxu0
    %v1698 = vadd.f32 %v1410, %v1697
    %v1699 = vpop.f32.mrb[0].mxu0
    %v1700 = vadd.f32 %v1412, %v1699
    %1701 = vdwg.mxu0
    %1702 = vmatprep.subr.mxu0 %v1132
    %1703 = vmatpush1.msra.mxu0 %v1131
    %1704 = vmatprep.subr.mxu0 %v1140
    %1705 = vmatpush1.msra.mxu0 %v1139
    %1706 = vmatprep.subr.mxu0 %v1148
    %1707 = vmatpush1.msra.mxu0 %v1147
    %1708 = vmatprep.subr.mxu0 %v1156
    %1709 = vmatpush1.msra.mxu0 %v1155
    %1710 = vmatprep.subr.mxu0 %v1164
    %1711 = vmatpush1.msra.mxu0 %v1163
    %1712 = vmatprep.subr.mxu0 %v1172
    %1713 = vmatpush1.msra.mxu0 %v1171
    %1714 = vmatprep.subr.mxu0 %v1180
    %1715 = vmatpush1.msra.mxu0 %v1179
    %1716 = vmatprep.subr.mxu0 %v1188
    %1717 = vmatpush1.msra.mxu0 %v1187
    %1718 = vmatprep.subr.mxu0 0.0
    %1719 = vmatpush1.msra.mxu0 0.0
    %1720 = vmatprep.subr.mxu0 0.0
    %1721 = vmatpush1.msra.mxu0 0.0
    %1722 = vmatprep.subr.mxu0 0.0
    %1723 = vmatpush1.msra.mxu0 0.0
    %1724 = vmatprep.subr.mxu0 0.0
    %1725 = vmatpush1.msra.mxu0 0.0
    %1726 = vmatprep.subr.mxu0 0.0
    %1727 = vmatpush1.msra.mxu0 0.0
    %1728 = vmatprep.subr.mxu0 0.0
    %1729 = vmatpush1.msra.mxu0 0.0
    %1730 = vmatprep.subr.mxu0 0.0
    %1731 = vmatpush1.msra.mxu0 0.0
    %1732 = vmatprep.subr.mxu0 0.0
    %1733 = vmatpush1.msra.mxu0 0.0
    %1734 = vmatprep.subr.mxu0 0.0
    %1735 = vmatpush1.msra.mxu0 0.0
    %1736 = vmatprep.subr.mxu0 0.0
    %1737 = vmatpush1.msra.mxu0 0.0
    %1738 = vmatprep.subr.mxu0 0.0
    %1739 = vmatpush1.msra.mxu0 0.0
    %1740 = vmatprep.subr.mxu0 0.0
    %1741 = vmatpush1.msra.mxu0 0.0
    %1742 = vmatprep.subr.mxu0 0.0
    %1743 = vmatpush1.msra.mxu0 0.0
    %1744 = vmatprep.subr.mxu0 0.0
    %1745 = vmatpush1.msra.mxu0 0.0
    %1746 = vmatprep.subr.mxu0 0.0
    %1747 = vmatpush1.msra.mxu0 0.0
    %1748 = vmatprep.subr.mxu0 0.0
    %1749 = vmatpush1.msra.mxu0 0.0
    %1750 = vmatprep.subr.mxu0 0.0
    %1751 = vmatpush1.msra.mxu0 0.0
    %1752 = vmatprep.subr.mxu0 0.0
    %1753 = vmatpush1.msra.mxu0 0.0
    %1754 = vmatprep.subr.mxu0 0.0
    %1755 = vmatpush1.msra.mxu0 0.0
    %1756 = vmatprep.subr.mxu0 0.0
    %1757 = vmatpush1.msra.mxu0 0.0
    %1758 = vmatprep.subr.mxu0 0.0
    %1759 = vmatpush1.msra.mxu0 0.0
    %1760 = vmatprep.subr.mxu0 0.0
    %1761 = vmatpush1.msra.mxu0 0.0
    %1762 = vmatprep.subr.mxu0 0.0
    %1763 = vmatpush1.msra.mxu0 0.0
    %1764 = vmatprep.subr.mxu0 0.0
    %1765 = vmatpush1.msra.mxu0 0.0
    %1766 = vmatprep.mubr.f32.mxu0 0.0
    %1767 = vmatmul.mubr.f32.gmra.mrb[0].mxu0 %v1487
    %v1768 = vpop.f32.mrb[0].mxu0
    %v1769 = vadd.f32 %v1481, %v1768
    %v1770 = vpop.f32.mrb[0].mxu0
    %v1771 = vadd.f32 %v1483, %v1770
    %1772 = vdwg.mxu0
    %v1773 = vld [vmem:[#allocation7] sm:$0xff]
    %v1775 = vlaneseq
    %v1776 = vshrl.u32 %v1775, 7
    %v1777 = vsub.s32 0, %v1776
    %v1778 = vrot.slane %v1773, %v1777
    %v1779 = vlaneseq
    %v1780 = vshrl.u32 %v1779, 7
    %v1781 = vsub.s32 1, %v1780
    %v1782 = vrot.slane %v1773, %v1781
    %v1783 = vlaneseq
    %v1784 = vshrl.u32 %v1783, 7
    %v1785 = vsub.s32 2, %v1784
    %v1786 = vrot.slane %v1773, %v1785
    %v1787 = vlaneseq
    %v1788 = vshrl.u32 %v1787, 7
    %v1789 = vsub.s32 3, %v1788
    %v1790 = vrot.slane %v1773, %v1789
    %v1791 = vlaneseq
    %v1792 = vshrl.u32 %v1791, 7
    %v1793 = vsub.s32 4, %v1792
    %v1794 = vrot.slane %v1773, %v1793
    %v1795 = vlaneseq
    %v1796 = vshrl.u32 %v1795, 7
    %v1797 = vsub.s32 5, %v1796
    %v1798 = vrot.slane %v1773, %v1797
    %v1799 = vlaneseq
    %v1800 = vshrl.u32 %v1799, 7
    %v1801 = vsub.s32 6, %v1800
    %v1802 = vrot.slane %v1773, %v1801
    %v1803 = vlaneseq
    %v1804 = vshrl.u32 %v1803, 7
    %v1805 = vsub.s32 7, %v1804
    %v1806 = vrot.slane %v1773, %v1805
    %v1815 = vadd.f32 %v1556, %v1778
    %v1816 = vadd.f32 %v1558, %v1782
    %v1817 = vadd.f32 %v1627, %v1786
    %v1818 = vadd.f32 %v1629, %v1790
    %v1819 = vadd.f32 %v1698, %v1794
    %v1820 = vadd.f32 %v1700, %v1798
    %v1821 = vadd.f32 %v1769, %v1802
    %v1822 = vadd.f32 %v1771, %v1806
    %vm1823 = vcmp.gt.f32.partialorder %v1815, 0.0
    %vm1824 = vcmp.gt.f32.partialorder %v1816, 0.0
    %vm1825 = vcmp.gt.f32.partialorder %v1817, 0.0
    %vm1826 = vcmp.gt.f32.partialorder %v1818, 0.0
    %vm1827 = vcmp.gt.f32.partialorder %v1819, 0.0
    %vm1828 = vcmp.gt.f32.partialorder %v1820, 0.0
    %vm1829 = vcmp.gt.f32.partialorder %v1821, 0.0
    %vm1830 = vcmp.gt.f32.partialorder %v1822, 0.0
    %v1831 = vmul.f32 %v1815, 0.2
    %v1832 = vmul.f32 %v1816, 0.2
    %v1833 = vmul.f32 %v1817, 0.2
    %v1834 = vmul.f32 %v1818, 0.2
    %v1835 = vmul.f32 %v1819, 0.2
    %v1836 = vmul.f32 %v1820, 0.2
    %v1837 = vmul.f32 %v1821, 0.2
    %v1838 = vmul.f32 %v1822, 0.2
    %v1839 = vsel %vm1823, %v1815, %v1831
    %v1840 = vsel %vm1824, %v1816, %v1832
    %v1841 = vsel %vm1825, %v1817, %v1833
    %v1842 = vsel %vm1826, %v1818, %v1834
    %v1843 = vsel %vm1827, %v1819, %v1835
    %v1844 = vsel %vm1828, %v1820, %v1836
    %v1845 = vsel %vm1829, %v1821, %v1837
    %v1846 = vsel %vm1830, %v1822, %v1838
    %v1847 = vld [vmem:[#allocation10] sm:$0x77]
    %v1848 = vld [vmem:[#allocation10 + $0x8] sm:$0x77]
    %v1849 = vld [vmem:[#allocation9] sm:$0xff]
    %v1850 = vld [vmem:[#allocation9 + $0x8] sm:$0xff]
    %v1851 = vld [vmem:[#allocation9 + $0x10] sm:$0xff]
    %v1852 = vld [vmem:[#allocation9 + $0x18] sm:$0xff]
    %v1853 = vld [vmem:[#allocation9 + $0x20] sm:$0xff]
    %v1854 = vld [vmem:[#allocation9 + $0x28] sm:$0xff]
    %v1855 = vld [vmem:[#allocation9 + $0x30] sm:$0xff]
    %v1856 = vld [vmem:[#allocation9 + $0x38] sm:$0xff]
    %v1857 = vld [vmem:[#allocation9 + $0x40] sm:$0xff]
    %v1858 = vld [vmem:[#allocation9 + $0x48] sm:$0xff]
    %v1859 = vld [vmem:[#allocation9 + $0x50] sm:$0xff]
    %v1860 = vld [vmem:[#allocation9 + $0x58] sm:$0xff]
    %v1861 = vld [vmem:[#allocation9 + $0x60] sm:$0xff]
    %v1862 = vld [vmem:[#allocation9 + $0x68] sm:$0xff]
    %v1863 = vld [vmem:[#allocation9 + $0x70] sm:$0xff]
    %v1864 = vld [vmem:[#allocation9 + $0x78] sm:$0xff]
    %v1865 = vld [vmem:[#allocation9 + $0x80] sm:$0xff]
    %v1866 = vld [vmem:[#allocation9 + $0x88] sm:$0xff]
    %v1867 = vld [vmem:[#allocation9 + $0x90] sm:$0xff]
    %v1868 = vld [vmem:[#allocation9 + $0x98] sm:$0xff]
    %v1869 = vld [vmem:[#allocation9 + $0xa0] sm:$0xff]
    %v1870 = vld [vmem:[#allocation9 + $0xa8] sm:$0xff]
    %v1871 = vld [vmem:[#allocation9 + $0xb0] sm:$0xff]
    %v1872 = vld [vmem:[#allocation9 + $0xb8] sm:$0xff]
    %v1873 = vld [vmem:[#allocation9 + $0xc0] sm:$0xff]
    %v1874 = vld [vmem:[#allocation9 + $0xc8] sm:$0xff]
    %v1875 = vld [vmem:[#allocation9 + $0xd0] sm:$0xff]
    %v1876 = vld [vmem:[#allocation9 + $0xd8] sm:$0xff]
    %v1877 = vld [vmem:[#allocation9 + $0xe0] sm:$0xff]
    %v1878 = vld [vmem:[#allocation9 + $0xe8] sm:$0xff]
    %v1879 = vld [vmem:[#allocation9 + $0xf0] sm:$0xff]
    %v1880 = vld [vmem:[#allocation9 + $0xf8] sm:$0xff]
    %v1881 = vld [vmem:[#allocation9 + $0x100] sm:$0xff]
    %v1882 = vld [vmem:[#allocation9 + $0x108] sm:$0xff]
    %v1883 = vld [vmem:[#allocation9 + $0x110] sm:$0xff]
    %v1884 = vld [vmem:[#allocation9 + $0x118] sm:$0xff]
    %v1885 = vld [vmem:[#allocation9 + $0x120] sm:$0xff]
    %v1886 = vld [vmem:[#allocation9 + $0x128] sm:$0xff]
    %v1887 = vld [vmem:[#allocation9 + $0x130] sm:$0xff]
    %v1888 = vld [vmem:[#allocation9 + $0x138] sm:$0xff]
    %v1889 = vld [vmem:[#allocation9 + $0x140] sm:$0xff]
    %v1890 = vld [vmem:[#allocation9 + $0x148] sm:$0xff]
    %v1891 = vld [vmem:[#allocation9 + $0x150] sm:$0xff]
    %v1892 = vld [vmem:[#allocation9 + $0x158] sm:$0xff]
    %v1893 = vld [vmem:[#allocation9 + $0x160] sm:$0xff]
    %v1894 = vld [vmem:[#allocation9 + $0x168] sm:$0xff]
    %v1895 = vld [vmem:[#allocation9 + $0x170] sm:$0xff]
    %v1896 = vld [vmem:[#allocation9 + $0x178] sm:$0xff]
    %v1897 = vld [vmem:[#allocation9 + $0x180] sm:$0xff]
    %v1898 = vld [vmem:[#allocation9 + $0x188] sm:$0xff]
    %v1899 = vld [vmem:[#allocation9 + $0x190] sm:$0xff]
    %v1900 = vld [vmem:[#allocation9 + $0x198] sm:$0xff]
    %v1901 = vld [vmem:[#allocation9 + $0x1a0] sm:$0xff]
    %v1902 = vld [vmem:[#allocation9 + $0x1a8] sm:$0xff]
    %v1903 = vld [vmem:[#allocation9 + $0x1b0] sm:$0xff]
    %v1904 = vld [vmem:[#allocation9 + $0x1b8] sm:$0xff]
    %v1905 = vld [vmem:[#allocation9 + $0x1c0] sm:$0xff]
    %v1906 = vld [vmem:[#allocation9 + $0x1c8] sm:$0xff]
    %v1907 = vld [vmem:[#allocation9 + $0x1d0] sm:$0xff]
    %v1908 = vld [vmem:[#allocation9 + $0x1d8] sm:$0xff]
    %v1909 = vld [vmem:[#allocation9 + $0x1e0] sm:$0xff]
    %v1910 = vld [vmem:[#allocation9 + $0x1e8] sm:$0xff]
    %v1911 = vld [vmem:[#allocation9 + $0x1f0] sm:$0xff]
    %v1912 = vld [vmem:[#allocation9 + $0x1f8] sm:$0xff]
    %v1913 = vld [vmem:[#allocation9 + $0x200] sm:$0xff]
    %v1914 = vld [vmem:[#allocation9 + $0x208] sm:$0xff]
    %v1915 = vld [vmem:[#allocation9 + $0x210] sm:$0xff]
    %v1916 = vld [vmem:[#allocation9 + $0x218] sm:$0xff]
    %v1917 = vld [vmem:[#allocation9 + $0x220] sm:$0xff]
    %v1918 = vld [vmem:[#allocation9 + $0x228] sm:$0xff]
    %v1919 = vld [vmem:[#allocation9 + $0x230] sm:$0xff]
    %v1920 = vld [vmem:[#allocation9 + $0x238] sm:$0xff]
    %v1921 = vld [vmem:[#allocation9 + $0x240] sm:$0xff]
    %v1922 = vld [vmem:[#allocation9 + $0x248] sm:$0xff]
    %v1923 = vld [vmem:[#allocation9 + $0x250] sm:$0xff]
    %v1924 = vld [vmem:[#allocation9 + $0x258] sm:$0xff]
    %v1925 = vld [vmem:[#allocation9 + $0x260] sm:$0xff]
    %v1926 = vld [vmem:[#allocation9 + $0x268] sm:$0xff]
    %v1927 = vld [vmem:[#allocation9 + $0x270] sm:$0xff]
    %v1928 = vld [vmem:[#allocation9 + $0x278] sm:$0xff]
    %v1929 = vld [vmem:[#allocation9 + $0x280] sm:$0xff]
    %v1930 = vld [vmem:[#allocation9 + $0x288] sm:$0xff]
    %v1931 = vld [vmem:[#allocation9 + $0x290] sm:$0xff]
    %v1932 = vld [vmem:[#allocation9 + $0x298] sm:$0xff]
    %v1933 = vld [vmem:[#allocation9 + $0x2a0] sm:$0xff]
    %v1934 = vld [vmem:[#allocation9 + $0x2a8] sm:$0xff]
    %v1935 = vld [vmem:[#allocation9 + $0x2b0] sm:$0xff]
    %v1936 = vld [vmem:[#allocation9 + $0x2b8] sm:$0xff]
    %v1937 = vld [vmem:[#allocation9 + $0x2c0] sm:$0xff]
    %v1938 = vld [vmem:[#allocation9 + $0x2c8] sm:$0xff]
    %v1939 = vld [vmem:[#allocation9 + $0x2d0] sm:$0xff]
    %v1940 = vld [vmem:[#allocation9 + $0x2d8] sm:$0xff]
    %v1941 = vld [vmem:[#allocation9 + $0x2e0] sm:$0xff]
    %v1942 = vld [vmem:[#allocation9 + $0x2e8] sm:$0xff]
    %v1943 = vld [vmem:[#allocation9 + $0x2f0] sm:$0xff]
    %v1944 = vld [vmem:[#allocation9 + $0x2f8] sm:$0xff]
    %v1945 = vld [vmem:[#allocation9 + $0x300] sm:$0xff]
    %v1946 = vld [vmem:[#allocation9 + $0x308] sm:$0xff]
    %v1947 = vld [vmem:[#allocation9 + $0x310] sm:$0xff]
    %v1948 = vld [vmem:[#allocation9 + $0x318] sm:$0xff]
    %v1949 = vld [vmem:[#allocation9 + $0x320] sm:$0xff]
    %v1950 = vld [vmem:[#allocation9 + $0x328] sm:$0xff]
    %v1951 = vld [vmem:[#allocation9 + $0x330] sm:$0xff]
    %v1952 = vld [vmem:[#allocation9 + $0x338] sm:$0xff]
    %v1953 = vld [vmem:[#allocation9 + $0x340] sm:$0xff]
    %v1954 = vld [vmem:[#allocation9 + $0x348] sm:$0xff]
    %v1955 = vld [vmem:[#allocation9 + $0x350] sm:$0xff]
    %v1956 = vld [vmem:[#allocation9 + $0x358] sm:$0xff]
    %v1957 = vld [vmem:[#allocation9 + $0x360] sm:$0xff]
    %v1958 = vld [vmem:[#allocation9 + $0x368] sm:$0xff]
    %v1959 = vld [vmem:[#allocation9 + $0x370] sm:$0xff]
    %v1960 = vld [vmem:[#allocation9 + $0x378] sm:$0xff]
    %v1961 = vld [vmem:[#allocation9 + $0x380] sm:$0xff]
    %v1962 = vld [vmem:[#allocation9 + $0x388] sm:$0xff]
    %v1963 = vld [vmem:[#allocation9 + $0x390] sm:$0xff]
    %v1964 = vld [vmem:[#allocation9 + $0x398] sm:$0xff]
    %v1965 = vld [vmem:[#allocation9 + $0x3a0] sm:$0xff]
    %v1966 = vld [vmem:[#allocation9 + $0x3a8] sm:$0xff]
    %v1967 = vld [vmem:[#allocation9 + $0x3b0] sm:$0xff]
    %v1968 = vld [vmem:[#allocation9 + $0x3b8] sm:$0xff]
    %v1969 = vld [vmem:[#allocation9 + $0x3c0] sm:$0xff]
    %v1970 = vld [vmem:[#allocation9 + $0x3c8] sm:$0xff]
    %v1971 = vld [vmem:[#allocation9 + $0x3d0] sm:$0xff]
    %v1972 = vld [vmem:[#allocation9 + $0x3d8] sm:$0xff]
    %v1973 = vld [vmem:[#allocation9 + $0x3e0] sm:$0xff]
    %v1974 = vld [vmem:[#allocation9 + $0x3e8] sm:$0xff]
    %v1975 = vld [vmem:[#allocation9 + $0x3f0] sm:$0xff]
    %v1976 = vld [vmem:[#allocation9 + $0x3f8] sm:$0xff]
    %v1977 = vld [vmem:[#allocation9 + $0x400] sm:$0xff]
    %v1978 = vld [vmem:[#allocation9 + $0x408] sm:$0xff]
    %v1979 = vld [vmem:[#allocation9 + $0x410] sm:$0xff]
    %v1980 = vld [vmem:[#allocation9 + $0x418] sm:$0xff]
    %v1981 = vld [vmem:[#allocation9 + $0x420] sm:$0xff]
    %v1982 = vld [vmem:[#allocation9 + $0x428] sm:$0xff]
    %v1983 = vld [vmem:[#allocation9 + $0x430] sm:$0xff]
    %v1984 = vld [vmem:[#allocation9 + $0x438] sm:$0xff]
    %v1985 = vld [vmem:[#allocation9 + $0x440] sm:$0xff]
    %v1986 = vld [vmem:[#allocation9 + $0x448] sm:$0xff]
    %v1987 = vld [vmem:[#allocation9 + $0x450] sm:$0xff]
    %v1988 = vld [vmem:[#allocation9 + $0x458] sm:$0xff]
    %v1989 = vld [vmem:[#allocation9 + $0x460] sm:$0xff]
    %v1990 = vld [vmem:[#allocation9 + $0x468] sm:$0xff]
    %v1991 = vld [vmem:[#allocation9 + $0x470] sm:$0xff]
    %v1992 = vld [vmem:[#allocation9 + $0x478] sm:$0xff]
    %v1993 = vld [vmem:[#allocation9 + $0x480] sm:$0xff]
    %v1994 = vld [vmem:[#allocation9 + $0x488] sm:$0xff]
    %v1995 = vld [vmem:[#allocation9 + $0x490] sm:$0xff]
    %v1996 = vld [vmem:[#allocation9 + $0x498] sm:$0xff]
    %v1997 = vld [vmem:[#allocation9 + $0x4a0] sm:$0xff]
    %v1998 = vld [vmem:[#allocation9 + $0x4a8] sm:$0xff]
    %v1999 = vld [vmem:[#allocation9 + $0x4b0] sm:$0xff]
    %v2000 = vld [vmem:[#allocation9 + $0x4b8] sm:$0xff]
    %v2001 = vld [vmem:[#allocation9 + $0x4c0] sm:$0xff]
    %v2002 = vld [vmem:[#allocation9 + $0x4c8] sm:$0xff]
    %v2003 = vld [vmem:[#allocation9 + $0x4d0] sm:$0xff]
    %v2004 = vld [vmem:[#allocation9 + $0x4d8] sm:$0xff]
    %v2005 = vld [vmem:[#allocation9 + $0x4e0] sm:$0xff]
    %v2006 = vld [vmem:[#allocation9 + $0x4e8] sm:$0xff]
    %v2007 = vld [vmem:[#allocation9 + $0x4f0] sm:$0xff]
    %v2008 = vld [vmem:[#allocation9 + $0x4f8] sm:$0xff]
    %v2009 = vld [vmem:[#allocation9 + $0x500] sm:$0xff]
    %v2010 = vld [vmem:[#allocation9 + $0x508] sm:$0xff]
    %v2011 = vld [vmem:[#allocation9 + $0x510] sm:$0xff]
    %v2012 = vld [vmem:[#allocation9 + $0x518] sm:$0xff]
    %v2013 = vld [vmem:[#allocation9 + $0x520] sm:$0xff]
    %v2014 = vld [vmem:[#allocation9 + $0x528] sm:$0xff]
    %v2015 = vld [vmem:[#allocation9 + $0x530] sm:$0xff]
    %v2016 = vld [vmem:[#allocation9 + $0x538] sm:$0xff]
    %v2017 = vld [vmem:[#allocation9 + $0x540] sm:$0xff]
    %v2018 = vld [vmem:[#allocation9 + $0x548] sm:$0xff]
    %v2019 = vld [vmem:[#allocation9 + $0x550] sm:$0xff]
    %v2020 = vld [vmem:[#allocation9 + $0x558] sm:$0xff]
    %v2021 = vld [vmem:[#allocation9 + $0x560] sm:$0xff]
    %v2022 = vld [vmem:[#allocation9 + $0x568] sm:$0xff]
    %v2023 = vld [vmem:[#allocation9 + $0x570] sm:$0xff]
    %v2024 = vld [vmem:[#allocation9 + $0x578] sm:$0xff]
    %v2025 = vld [vmem:[#allocation9 + $0x580] sm:$0xff]
    %v2026 = vld [vmem:[#allocation9 + $0x588] sm:$0xff]
    %v2027 = vld [vmem:[#allocation9 + $0x590] sm:$0xff]
    %v2028 = vld [vmem:[#allocation9 + $0x598] sm:$0xff]
    %v2029 = vld [vmem:[#allocation9 + $0x5a0] sm:$0xff]
    %v2030 = vld [vmem:[#allocation9 + $0x5a8] sm:$0xff]
    %v2031 = vld [vmem:[#allocation9 + $0x5b0] sm:$0xff]
    %v2032 = vld [vmem:[#allocation9 + $0x5b8] sm:$0xff]
    %v2033 = vld [vmem:[#allocation9 + $0x5c0] sm:$0xff]
    %v2034 = vld [vmem:[#allocation9 + $0x5c8] sm:$0xff]
    %v2035 = vld [vmem:[#allocation9 + $0x5d0] sm:$0xff]
    %v2036 = vld [vmem:[#allocation9 + $0x5d8] sm:$0xff]
    %v2037 = vld [vmem:[#allocation9 + $0x5e0] sm:$0xff]
    %v2038 = vld [vmem:[#allocation9 + $0x5e8] sm:$0xff]
    %v2039 = vld [vmem:[#allocation9 + $0x5f0] sm:$0xff]
    %v2040 = vld [vmem:[#allocation9 + $0x5f8] sm:$0xff]
    %v2041 = vld [vmem:[#allocation9 + $0x600] sm:$0xff]
    %v2042 = vld [vmem:[#allocation9 + $0x608] sm:$0xff]
    %v2043 = vld [vmem:[#allocation9 + $0x610] sm:$0xff]
    %v2044 = vld [vmem:[#allocation9 + $0x618] sm:$0xff]
    %v2045 = vld [vmem:[#allocation9 + $0x620] sm:$0xff]
    %v2046 = vld [vmem:[#allocation9 + $0x628] sm:$0xff]
    %v2047 = vld [vmem:[#allocation9 + $0x630] sm:$0xff]
    %v2048 = vld [vmem:[#allocation9 + $0x638] sm:$0xff]
    %v2049 = vld [vmem:[#allocation9 + $0x640] sm:$0xff]
    %v2050 = vld [vmem:[#allocation9 + $0x648] sm:$0xff]
    %v2051 = vld [vmem:[#allocation9 + $0x650] sm:$0xff]
    %v2052 = vld [vmem:[#allocation9 + $0x658] sm:$0xff]
    %v2053 = vld [vmem:[#allocation9 + $0x660] sm:$0xff]
    %v2054 = vld [vmem:[#allocation9 + $0x668] sm:$0xff]
    %v2055 = vld [vmem:[#allocation9 + $0x670] sm:$0xff]
    %v2056 = vld [vmem:[#allocation9 + $0x678] sm:$0xff]
    %v2057 = vld [vmem:[#allocation9 + $0x680] sm:$0xff]
    %v2058 = vld [vmem:[#allocation9 + $0x688] sm:$0xff]
    %v2059 = vld [vmem:[#allocation9 + $0x690] sm:$0xff]
    %v2060 = vld [vmem:[#allocation9 + $0x698] sm:$0xff]
    %v2061 = vld [vmem:[#allocation9 + $0x6a0] sm:$0xff]
    %v2062 = vld [vmem:[#allocation9 + $0x6a8] sm:$0xff]
    %v2063 = vld [vmem:[#allocation9 + $0x6b0] sm:$0xff]
    %v2064 = vld [vmem:[#allocation9 + $0x6b8] sm:$0xff]
    %v2065 = vld [vmem:[#allocation9 + $0x6c0] sm:$0xff]
    %v2066 = vld [vmem:[#allocation9 + $0x6c8] sm:$0xff]
    %v2067 = vld [vmem:[#allocation9 + $0x6d0] sm:$0xff]
    %v2068 = vld [vmem:[#allocation9 + $0x6d8] sm:$0xff]
    %v2069 = vld [vmem:[#allocation9 + $0x6e0] sm:$0xff]
    %v2070 = vld [vmem:[#allocation9 + $0x6e8] sm:$0xff]
    %v2071 = vld [vmem:[#allocation9 + $0x6f0] sm:$0xff]
    %v2072 = vld [vmem:[#allocation9 + $0x6f8] sm:$0xff]
    %v2073 = vld [vmem:[#allocation9 + $0x700] sm:$0xff]
    %v2074 = vld [vmem:[#allocation9 + $0x708] sm:$0xff]
    %v2075 = vld [vmem:[#allocation9 + $0x710] sm:$0xff]
    %v2076 = vld [vmem:[#allocation9 + $0x718] sm:$0xff]
    %v2077 = vld [vmem:[#allocation9 + $0x720] sm:$0xff]
    %v2078 = vld [vmem:[#allocation9 + $0x728] sm:$0xff]
    %v2079 = vld [vmem:[#allocation9 + $0x730] sm:$0xff]
    %v2080 = vld [vmem:[#allocation9 + $0x738] sm:$0xff]
    %v2081 = vld [vmem:[#allocation9 + $0x740] sm:$0xff]
    %v2082 = vld [vmem:[#allocation9 + $0x748] sm:$0xff]
    %v2083 = vld [vmem:[#allocation9 + $0x750] sm:$0xff]
    %v2084 = vld [vmem:[#allocation9 + $0x758] sm:$0xff]
    %v2085 = vld [vmem:[#allocation9 + $0x760] sm:$0xff]
    %v2086 = vld [vmem:[#allocation9 + $0x768] sm:$0xff]
    %v2087 = vld [vmem:[#allocation9 + $0x770] sm:$0xff]
    %v2088 = vld [vmem:[#allocation9 + $0x778] sm:$0xff]
    %v2089 = vld [vmem:[#allocation9 + $0x780] sm:$0xff]
    %v2090 = vld [vmem:[#allocation9 + $0x788] sm:$0xff]
    %v2091 = vld [vmem:[#allocation9 + $0x790] sm:$0xff]
    %v2092 = vld [vmem:[#allocation9 + $0x798] sm:$0xff]
    %v2093 = vld [vmem:[#allocation9 + $0x7a0] sm:$0xff]
    %v2094 = vld [vmem:[#allocation9 + $0x7a8] sm:$0xff]
    %v2095 = vld [vmem:[#allocation9 + $0x7b0] sm:$0xff]
    %v2096 = vld [vmem:[#allocation9 + $0x7b8] sm:$0xff]
    %v2097 = vld [vmem:[#allocation9 + $0x7c0] sm:$0xff]
    %v2098 = vld [vmem:[#allocation9 + $0x7c8] sm:$0xff]
    %v2099 = vld [vmem:[#allocation9 + $0x7d0] sm:$0xff]
    %v2100 = vld [vmem:[#allocation9 + $0x7d8] sm:$0xff]
    %v2101 = vld [vmem:[#allocation9 + $0x7e0] sm:$0xff]
    %v2102 = vld [vmem:[#allocation9 + $0x7e8] sm:$0xff]
    %v2103 = vld [vmem:[#allocation9 + $0x7f0] sm:$0xff]
    %v2104 = vld [vmem:[#allocation9 + $0x7f8] sm:$0xff]
    %v2105 = vld [vmem:[#allocation9 + $0x800] sm:$0xff]
    %v2106 = vld [vmem:[#allocation9 + $0x808] sm:$0xff]
    %v2107 = vld [vmem:[#allocation9 + $0x810] sm:$0xff]
    %v2108 = vld [vmem:[#allocation9 + $0x818] sm:$0xff]
    %v2109 = vld [vmem:[#allocation9 + $0x820] sm:$0xff]
    %v2110 = vld [vmem:[#allocation9 + $0x828] sm:$0xff]
    %v2111 = vld [vmem:[#allocation9 + $0x830] sm:$0xff]
    %v2112 = vld [vmem:[#allocation9 + $0x838] sm:$0xff]
    %v2113 = vld [vmem:[#allocation9 + $0x840] sm:$0xff]
    %v2114 = vld [vmem:[#allocation9 + $0x848] sm:$0xff]
    %v2115 = vld [vmem:[#allocation9 + $0x850] sm:$0xff]
    %v2116 = vld [vmem:[#allocation9 + $0x858] sm:$0xff]
    %v2117 = vld [vmem:[#allocation9 + $0x860] sm:$0xff]
    %v2118 = vld [vmem:[#allocation9 + $0x868] sm:$0xff]
    %v2119 = vld [vmem:[#allocation9 + $0x870] sm:$0xff]
    %v2120 = vld [vmem:[#allocation9 + $0x878] sm:$0xff]
    %v2121 = vld [vmem:[#allocation9 + $0x880] sm:$0xff]
    %v2122 = vld [vmem:[#allocation9 + $0x888] sm:$0xff]
    %v2123 = vld [vmem:[#allocation9 + $0x890] sm:$0xff]
    %v2124 = vld [vmem:[#allocation9 + $0x898] sm:$0xff]
    %v2125 = vld [vmem:[#allocation9 + $0x8a0] sm:$0xff]
    %v2126 = vld [vmem:[#allocation9 + $0x8a8] sm:$0xff]
    %v2127 = vld [vmem:[#allocation9 + $0x8b0] sm:$0xff]
    %v2128 = vld [vmem:[#allocation9 + $0x8b8] sm:$0xff]
    %v2129 = vld [vmem:[#allocation9 + $0x8c0] sm:$0xff]
    %v2130 = vld [vmem:[#allocation9 + $0x8c8] sm:$0xff]
    %v2131 = vld [vmem:[#allocation9 + $0x8d0] sm:$0xff]
    %v2132 = vld [vmem:[#allocation9 + $0x8d8] sm:$0xff]
    %v2133 = vld [vmem:[#allocation9 + $0x8e0] sm:$0xff]
    %v2134 = vld [vmem:[#allocation9 + $0x8e8] sm:$0xff]
    %v2135 = vld [vmem:[#allocation9 + $0x8f0] sm:$0xff]
    %v2136 = vld [vmem:[#allocation9 + $0x8f8] sm:$0xff]
    %v2137 = vld [vmem:[#allocation9 + $0x900] sm:$0xff]
    %v2138 = vld [vmem:[#allocation9 + $0x908] sm:$0xff]
    %v2139 = vld [vmem:[#allocation9 + $0x910] sm:$0xff]
    %v2140 = vld [vmem:[#allocation9 + $0x918] sm:$0xff]
    %v2141 = vld [vmem:[#allocation9 + $0x920] sm:$0xff]
    %v2142 = vld [vmem:[#allocation9 + $0x928] sm:$0xff]
    %v2143 = vld [vmem:[#allocation9 + $0x930] sm:$0xff]
    %v2144 = vld [vmem:[#allocation9 + $0x938] sm:$0xff]
    %v2145 = vld [vmem:[#allocation9 + $0x940] sm:$0xff]
    %v2146 = vld [vmem:[#allocation9 + $0x948] sm:$0xff]
    %v2147 = vld [vmem:[#allocation9 + $0x950] sm:$0xff]
    %v2148 = vld [vmem:[#allocation9 + $0x958] sm:$0xff]
    %v2149 = vld [vmem:[#allocation9 + $0x960] sm:$0xff]
    %v2150 = vld [vmem:[#allocation9 + $0x968] sm:$0xff]
    %v2151 = vld [vmem:[#allocation9 + $0x970] sm:$0xff]
    %v2152 = vld [vmem:[#allocation9 + $0x978] sm:$0xff]
    %v2153 = vld [vmem:[#allocation9 + $0x980] sm:$0xff]
    %v2154 = vld [vmem:[#allocation9 + $0x988] sm:$0xff]
    %v2155 = vld [vmem:[#allocation9 + $0x990] sm:$0xff]
    %v2156 = vld [vmem:[#allocation9 + $0x998] sm:$0xff]
    %v2157 = vld [vmem:[#allocation9 + $0x9a0] sm:$0xff]
    %v2158 = vld [vmem:[#allocation9 + $0x9a8] sm:$0xff]
    %v2159 = vld [vmem:[#allocation9 + $0x9b0] sm:$0xff]
    %v2160 = vld [vmem:[#allocation9 + $0x9b8] sm:$0xff]
    %v2161 = vld [vmem:[#allocation9 + $0x9c0] sm:$0xff]
    %v2162 = vld [vmem:[#allocation9 + $0x9c8] sm:$0xff]
    %v2163 = vld [vmem:[#allocation9 + $0x9d0] sm:$0xff]
    %v2164 = vld [vmem:[#allocation9 + $0x9d8] sm:$0xff]
    %v2165 = vld [vmem:[#allocation9 + $0x9e0] sm:$0xff]
    %v2166 = vld [vmem:[#allocation9 + $0x9e8] sm:$0xff]
    %v2167 = vld [vmem:[#allocation9 + $0x9f0] sm:$0xff]
    %v2168 = vld [vmem:[#allocation9 + $0x9f8] sm:$0xff]
    %v2169 = vld [vmem:[#allocation9 + $0xa00] sm:$0xff]
    %v2170 = vld [vmem:[#allocation9 + $0xa08] sm:$0xff]
    %v2171 = vld [vmem:[#allocation9 + $0xa10] sm:$0xff]
    %v2172 = vld [vmem:[#allocation9 + $0xa18] sm:$0xff]
    %v2173 = vld [vmem:[#allocation9 + $0xa20] sm:$0xff]
    %v2174 = vld [vmem:[#allocation9 + $0xa28] sm:$0xff]
    %v2175 = vld [vmem:[#allocation9 + $0xa30] sm:$0xff]
    %v2176 = vld [vmem:[#allocation9 + $0xa38] sm:$0xff]
    %v2177 = vld [vmem:[#allocation9 + $0xa40] sm:$0xff]
    %v2178 = vld [vmem:[#allocation9 + $0xa48] sm:$0xff]
    %v2179 = vld [vmem:[#allocation9 + $0xa50] sm:$0xff]
    %v2180 = vld [vmem:[#allocation9 + $0xa58] sm:$0xff]
    %v2181 = vld [vmem:[#allocation9 + $0xa60] sm:$0xff]
    %v2182 = vld [vmem:[#allocation9 + $0xa68] sm:$0xff]
    %v2183 = vld [vmem:[#allocation9 + $0xa70] sm:$0xff]
    %v2184 = vld [vmem:[#allocation9 + $0xa78] sm:$0xff]
    %v2185 = vld [vmem:[#allocation9 + $0xa80] sm:$0xff]
    %v2186 = vld [vmem:[#allocation9 + $0xa88] sm:$0xff]
    %v2187 = vld [vmem:[#allocation9 + $0xa90] sm:$0xff]
    %v2188 = vld [vmem:[#allocation9 + $0xa98] sm:$0xff]
    %v2189 = vld [vmem:[#allocation9 + $0xaa0] sm:$0xff]
    %v2190 = vld [vmem:[#allocation9 + $0xaa8] sm:$0xff]
    %v2191 = vld [vmem:[#allocation9 + $0xab0] sm:$0xff]
    %v2192 = vld [vmem:[#allocation9 + $0xab8] sm:$0xff]
    %v2193 = vld [vmem:[#allocation9 + $0xac0] sm:$0xff]
    %v2194 = vld [vmem:[#allocation9 + $0xac8] sm:$0xff]
    %v2195 = vld [vmem:[#allocation9 + $0xad0] sm:$0xff]
    %v2196 = vld [vmem:[#allocation9 + $0xad8] sm:$0xff]
    %v2197 = vld [vmem:[#allocation9 + $0xae0] sm:$0xff]
    %v2198 = vld [vmem:[#allocation9 + $0xae8] sm:$0xff]
    %v2199 = vld [vmem:[#allocation9 + $0xaf0] sm:$0xff]
    %v2200 = vld [vmem:[#allocation9 + $0xaf8] sm:$0xff]
    %v2201 = vld [vmem:[#allocation9 + $0xb00] sm:$0xff]
    %v2202 = vld [vmem:[#allocation9 + $0xb08] sm:$0xff]
    %v2203 = vld [vmem:[#allocation9 + $0xb10] sm:$0xff]
    %v2204 = vld [vmem:[#allocation9 + $0xb18] sm:$0xff]
    %v2205 = vld [vmem:[#allocation9 + $0xb20] sm:$0xff]
    %v2206 = vld [vmem:[#allocation9 + $0xb28] sm:$0xff]
    %v2207 = vld [vmem:[#allocation9 + $0xb30] sm:$0xff]
    %v2208 = vld [vmem:[#allocation9 + $0xb38] sm:$0xff]
    %v2209 = vld [vmem:[#allocation9 + $0xb40] sm:$0xff]
    %v2210 = vld [vmem:[#allocation9 + $0xb48] sm:$0xff]
    %v2211 = vld [vmem:[#allocation9 + $0xb50] sm:$0xff]
    %v2212 = vld [vmem:[#allocation9 + $0xb58] sm:$0xff]
    %v2213 = vld [vmem:[#allocation9 + $0xb60] sm:$0xff]
    %v2214 = vld [vmem:[#allocation9 + $0xb68] sm:$0xff]
    %v2215 = vld [vmem:[#allocation9 + $0xb70] sm:$0xff]
    %v2216 = vld [vmem:[#allocation9 + $0xb78] sm:$0xff]
    %v2217 = vld [vmem:[#allocation9 + $0xb80] sm:$0xff]
    %v2218 = vld [vmem:[#allocation9 + $0xb88] sm:$0xff]
    %v2219 = vld [vmem:[#allocation9 + $0xb90] sm:$0xff]
    %v2220 = vld [vmem:[#allocation9 + $0xb98] sm:$0xff]
    %v2221 = vld [vmem:[#allocation9 + $0xba0] sm:$0xff]
    %v2222 = vld [vmem:[#allocation9 + $0xba8] sm:$0xff]
    %v2223 = vld [vmem:[#allocation9 + $0xbb0] sm:$0xff]
    %v2224 = vld [vmem:[#allocation9 + $0xbb8] sm:$0xff]
    %v2225 = vld [vmem:[#allocation9 + $0xbc0] sm:$0xff]
    %v2226 = vld [vmem:[#allocation9 + $0xbc8] sm:$0xff]
    %v2227 = vld [vmem:[#allocation9 + $0xbd0] sm:$0xff]
    %v2228 = vld [vmem:[#allocation9 + $0xbd8] sm:$0xff]
    %v2229 = vld [vmem:[#allocation9 + $0xbe0] sm:$0xff]
    %v2230 = vld [vmem:[#allocation9 + $0xbe8] sm:$0xff]
    %v2231 = vld [vmem:[#allocation9 + $0xbf0] sm:$0xff]
    %v2232 = vld [vmem:[#allocation9 + $0xbf8] sm:$0xff]
    %v2233 = vld [vmem:[#allocation9 + $0xc00] sm:$0xff]
    %v2234 = vld [vmem:[#allocation9 + $0xc08] sm:$0xff]
    %v2235 = vld [vmem:[#allocation9 + $0xc10] sm:$0xff]
    %v2236 = vld [vmem:[#allocation9 + $0xc18] sm:$0xff]
    %v2237 = vld [vmem:[#allocation9 + $0xc20] sm:$0xff]
    %v2238 = vld [vmem:[#allocation9 + $0xc28] sm:$0xff]
    %v2239 = vld [vmem:[#allocation9 + $0xc30] sm:$0xff]
    %v2240 = vld [vmem:[#allocation9 + $0xc38] sm:$0xff]
    %v2241 = vld [vmem:[#allocation9 + $0xc40] sm:$0xff]
    %v2242 = vld [vmem:[#allocation9 + $0xc48] sm:$0xff]
    %v2243 = vld [vmem:[#allocation9 + $0xc50] sm:$0xff]
    %v2244 = vld [vmem:[#allocation9 + $0xc58] sm:$0xff]
    %v2245 = vld [vmem:[#allocation9 + $0xc60] sm:$0xff]
    %v2246 = vld [vmem:[#allocation9 + $0xc68] sm:$0xff]
    %v2247 = vld [vmem:[#allocation9 + $0xc70] sm:$0xff]
    %v2248 = vld [vmem:[#allocation9 + $0xc78] sm:$0xff]
    %v2249 = vld [vmem:[#allocation9 + $0xc80] sm:$0xff]
    %v2250 = vld [vmem:[#allocation9 + $0xc88] sm:$0xff]
    %v2251 = vld [vmem:[#allocation9 + $0xc90] sm:$0xff]
    %v2252 = vld [vmem:[#allocation9 + $0xc98] sm:$0xff]
    %v2253 = vld [vmem:[#allocation9 + $0xca0] sm:$0xff]
    %v2254 = vld [vmem:[#allocation9 + $0xca8] sm:$0xff]
    %v2255 = vld [vmem:[#allocation9 + $0xcb0] sm:$0xff]
    %v2256 = vld [vmem:[#allocation9 + $0xcb8] sm:$0xff]
    %v2257 = vld [vmem:[#allocation9 + $0xcc0] sm:$0xff]
    %v2258 = vld [vmem:[#allocation9 + $0xcc8] sm:$0xff]
    %v2259 = vld [vmem:[#allocation9 + $0xcd0] sm:$0xff]
    %v2260 = vld [vmem:[#allocation9 + $0xcd8] sm:$0xff]
    %v2261 = vld [vmem:[#allocation9 + $0xce0] sm:$0xff]
    %v2262 = vld [vmem:[#allocation9 + $0xce8] sm:$0xff]
    %v2263 = vld [vmem:[#allocation9 + $0xcf0] sm:$0xff]
    %v2264 = vld [vmem:[#allocation9 + $0xcf8] sm:$0xff]
    %v2265 = vld [vmem:[#allocation9 + $0xd00] sm:$0xff]
    %v2266 = vld [vmem:[#allocation9 + $0xd08] sm:$0xff]
    %v2267 = vld [vmem:[#allocation9 + $0xd10] sm:$0xff]
    %v2268 = vld [vmem:[#allocation9 + $0xd18] sm:$0xff]
    %v2269 = vld [vmem:[#allocation9 + $0xd20] sm:$0xff]
    %v2270 = vld [vmem:[#allocation9 + $0xd28] sm:$0xff]
    %v2271 = vld [vmem:[#allocation9 + $0xd30] sm:$0xff]
    %v2272 = vld [vmem:[#allocation9 + $0xd38] sm:$0xff]
    %v2273 = vld [vmem:[#allocation9 + $0xd40] sm:$0xff]
    %v2274 = vld [vmem:[#allocation9 + $0xd48] sm:$0xff]
    %v2275 = vld [vmem:[#allocation9 + $0xd50] sm:$0xff]
    %v2276 = vld [vmem:[#allocation9 + $0xd58] sm:$0xff]
    %v2277 = vld [vmem:[#allocation9 + $0xd60] sm:$0xff]
    %v2278 = vld [vmem:[#allocation9 + $0xd68] sm:$0xff]
    %v2279 = vld [vmem:[#allocation9 + $0xd70] sm:$0xff]
    %v2280 = vld [vmem:[#allocation9 + $0xd78] sm:$0xff]
    %v2281 = vld [vmem:[#allocation9 + $0xd80] sm:$0xff]
    %v2282 = vld [vmem:[#allocation9 + $0xd88] sm:$0xff]
    %v2283 = vld [vmem:[#allocation9 + $0xd90] sm:$0xff]
    %v2284 = vld [vmem:[#allocation9 + $0xd98] sm:$0xff]
    %v2285 = vld [vmem:[#allocation9 + $0xda0] sm:$0xff]
    %v2286 = vld [vmem:[#allocation9 + $0xda8] sm:$0xff]
    %v2287 = vld [vmem:[#allocation9 + $0xdb0] sm:$0xff]
    %v2288 = vld [vmem:[#allocation9 + $0xdb8] sm:$0xff]
    %v2289 = vld [vmem:[#allocation9 + $0xdc0] sm:$0xff]
    %v2290 = vld [vmem:[#allocation9 + $0xdc8] sm:$0xff]
    %v2291 = vld [vmem:[#allocation9 + $0xdd0] sm:$0xff]
    %v2292 = vld [vmem:[#allocation9 + $0xdd8] sm:$0xff]
    %v2293 = vld [vmem:[#allocation9 + $0xde0] sm:$0xff]
    %v2294 = vld [vmem:[#allocation9 + $0xde8] sm:$0xff]
    %v2295 = vld [vmem:[#allocation9 + $0xdf0] sm:$0xff]
    %v2296 = vld [vmem:[#allocation9 + $0xdf8] sm:$0xff]
    %v2297 = vld [vmem:[#allocation9 + $0xe00] sm:$0xff]
    %v2298 = vld [vmem:[#allocation9 + $0xe08] sm:$0xff]
    %v2299 = vld [vmem:[#allocation9 + $0xe10] sm:$0xff]
    %v2300 = vld [vmem:[#allocation9 + $0xe18] sm:$0xff]
    %v2301 = vld [vmem:[#allocation9 + $0xe20] sm:$0xff]
    %v2302 = vld [vmem:[#allocation9 + $0xe28] sm:$0xff]
    %v2303 = vld [vmem:[#allocation9 + $0xe30] sm:$0xff]
    %v2304 = vld [vmem:[#allocation9 + $0xe38] sm:$0xff]
    %v2305 = vld [vmem:[#allocation9 + $0xe40] sm:$0xff]
    %v2306 = vld [vmem:[#allocation9 + $0xe48] sm:$0xff]
    %v2307 = vld [vmem:[#allocation9 + $0xe50] sm:$0xff]
    %v2308 = vld [vmem:[#allocation9 + $0xe58] sm:$0xff]
    %v2309 = vld [vmem:[#allocation9 + $0xe60] sm:$0xff]
    %v2310 = vld [vmem:[#allocation9 + $0xe68] sm:$0xff]
    %v2311 = vld [vmem:[#allocation9 + $0xe70] sm:$0xff]
    %v2312 = vld [vmem:[#allocation9 + $0xe78] sm:$0xff]
    %v2313 = vld [vmem:[#allocation9 + $0xe80] sm:$0xff]
    %v2314 = vld [vmem:[#allocation9 + $0xe88] sm:$0xff]
    %v2315 = vld [vmem:[#allocation9 + $0xe90] sm:$0xff]
    %v2316 = vld [vmem:[#allocation9 + $0xe98] sm:$0xff]
    %v2317 = vld [vmem:[#allocation9 + $0xea0] sm:$0xff]
    %v2318 = vld [vmem:[#allocation9 + $0xea8] sm:$0xff]
    %v2319 = vld [vmem:[#allocation9 + $0xeb0] sm:$0xff]
    %v2320 = vld [vmem:[#allocation9 + $0xeb8] sm:$0xff]
    %v2321 = vld [vmem:[#allocation9 + $0xec0] sm:$0xff]
    %v2322 = vld [vmem:[#allocation9 + $0xec8] sm:$0xff]
    %v2323 = vld [vmem:[#allocation9 + $0xed0] sm:$0xff]
    %v2324 = vld [vmem:[#allocation9 + $0xed8] sm:$0xff]
    %v2325 = vld [vmem:[#allocation9 + $0xee0] sm:$0xff]
    %v2326 = vld [vmem:[#allocation9 + $0xee8] sm:$0xff]
    %v2327 = vld [vmem:[#allocation9 + $0xef0] sm:$0xff]
    %v2328 = vld [vmem:[#allocation9 + $0xef8] sm:$0xff]
    %v2329 = vld [vmem:[#allocation9 + $0xf00] sm:$0xff]
    %v2330 = vld [vmem:[#allocation9 + $0xf08] sm:$0xff]
    %v2331 = vld [vmem:[#allocation9 + $0xf10] sm:$0xff]
    %v2332 = vld [vmem:[#allocation9 + $0xf18] sm:$0xff]
    %v2333 = vld [vmem:[#allocation9 + $0xf20] sm:$0xff]
    %v2334 = vld [vmem:[#allocation9 + $0xf28] sm:$0xff]
    %v2335 = vld [vmem:[#allocation9 + $0xf30] sm:$0xff]
    %v2336 = vld [vmem:[#allocation9 + $0xf38] sm:$0xff]
    %v2337 = vld [vmem:[#allocation9 + $0xf40] sm:$0xff]
    %v2338 = vld [vmem:[#allocation9 + $0xf48] sm:$0xff]
    %v2339 = vld [vmem:[#allocation9 + $0xf50] sm:$0xff]
    %v2340 = vld [vmem:[#allocation9 + $0xf58] sm:$0xff]
    %v2341 = vld [vmem:[#allocation9 + $0xf60] sm:$0xff]
    %v2342 = vld [vmem:[#allocation9 + $0xf68] sm:$0xff]
    %v2343 = vld [vmem:[#allocation9 + $0xf70] sm:$0xff]
    %v2344 = vld [vmem:[#allocation9 + $0xf78] sm:$0xff]
    %v2345 = vld [vmem:[#allocation9 + $0xf80] sm:$0xff]
    %v2346 = vld [vmem:[#allocation9 + $0xf88] sm:$0xff]
    %v2347 = vld [vmem:[#allocation9 + $0xf90] sm:$0xff]
    %v2348 = vld [vmem:[#allocation9 + $0xf98] sm:$0xff]
    %v2349 = vld [vmem:[#allocation9 + $0xfa0] sm:$0xff]
    %v2350 = vld [vmem:[#allocation9 + $0xfa8] sm:$0xff]
    %v2351 = vld [vmem:[#allocation9 + $0xfb0] sm:$0xff]
    %v2352 = vld [vmem:[#allocation9 + $0xfb8] sm:$0xff]
    %v2353 = vld [vmem:[#allocation9 + $0xfc0] sm:$0xff]
    %v2354 = vld [vmem:[#allocation9 + $0xfc8] sm:$0xff]
    %v2355 = vld [vmem:[#allocation9 + $0xfd0] sm:$0xff]
    %v2356 = vld [vmem:[#allocation9 + $0xfd8] sm:$0xff]
    %v2357 = vld [vmem:[#allocation9 + $0xfe0] sm:$0xff]
    %v2358 = vld [vmem:[#allocation9 + $0xfe8] sm:$0xff]
    %v2359 = vld [vmem:[#allocation9 + $0xff0] sm:$0xff]
    %v2360 = vld [vmem:[#allocation9 + $0xff8] sm:$0xff]
    %v2363 = vlaneseq
    %v2364 = vshrl.u32 %v2363, 7
    %v2365 = vsub.s32 0, %v2364
    %v2366 = vrot.slane %v1847, %v2365
    %v2367 = vlaneseq
    %v2368 = vshrl.u32 %v2367, 7
    %v2369 = vsub.s32 4, %v2368
    %v2370 = vrot.slane %v1847, %v2369
    %v2371 = vlaneseq
    %v2372 = vshrl.u32 %v2371, 7
    %v2373 = vsub.s32 0, %v2372
    %v2374 = vrot.slane %v1848, %v2373
    %v2375 = vlaneseq
    %v2376 = vshrl.u32 %v2375, 7
    %v2377 = vsub.s32 4, %v2376
    %v2378 = vrot.slane %v1848, %v2377
    %v2383 = vlaneseq
    %v2384 = vshrl.u32 %v2383, 7
    %v2385 = vsub.s32 0, %v2384
    %v2386 = vrot.slane %v2366, %v2385
    %v2387 = vlaneseq
    %v2388 = vshrl.u32 %v2387, 7
    %v2389 = vsub.s32 0, %v2388
    %v2390 = vrot.slane %v2370, %v2389
    %v2391 = vlaneseq
    %v2392 = vshrl.u32 %v2391, 7
    %v2393 = vsub.s32 0, %v2392
    %v2394 = vrot.slane %v2374, %v2393
    %v2395 = vlaneseq
    %v2396 = vshrl.u32 %v2395, 7
    %v2397 = vsub.s32 0, %v2396
    %v2398 = vrot.slane %v2378, %v2397
    %2399 = vmatprep.subr.mxu0 %v1850
    %2400 = vmatpush1.msra.mxu0 %v1849
    %2401 = vmatprep.subr.mxu0 %v1854
    %2402 = vmatpush1.msra.mxu0 %v1853
    %2403 = vmatprep.subr.mxu0 %v1858
    %2404 = vmatpush1.msra.mxu0 %v1857
    %2405 = vmatprep.subr.mxu0 %v1862
    %2406 = vmatpush1.msra.mxu0 %v1861
    %2407 = vmatprep.subr.mxu0 %v1866
    %2408 = vmatpush1.msra.mxu0 %v1865
    %2409 = vmatprep.subr.mxu0 %v1870
    %2410 = vmatpush1.msra.mxu0 %v1869
    %2411 = vmatprep.subr.mxu0 %v1874
    %2412 = vmatpush1.msra.mxu0 %v1873
    %2413 = vmatprep.subr.mxu0 %v1878
    %2414 = vmatpush1.msra.mxu0 %v1877
    %2415 = vmatprep.subr.mxu0 %v1882
    %2416 = vmatpush1.msra.mxu0 %v1881
    %2417 = vmatprep.subr.mxu0 %v1886
    %2418 = vmatpush1.msra.mxu0 %v1885
    %2419 = vmatprep.subr.mxu0 %v1890
    %2420 = vmatpush1.msra.mxu0 %v1889
    %2421 = vmatprep.subr.mxu0 %v1894
    %2422 = vmatpush1.msra.mxu0 %v1893
    %2423 = vmatprep.subr.mxu0 %v1898
    %2424 = vmatpush1.msra.mxu0 %v1897
    %2425 = vmatprep.subr.mxu0 %v1902
    %2426 = vmatpush1.msra.mxu0 %v1901
    %2427 = vmatprep.subr.mxu0 %v1906
    %2428 = vmatpush1.msra.mxu0 %v1905
    %2429 = vmatprep.subr.mxu0 %v1910
    %2430 = vmatpush1.msra.mxu0 %v1909
    %2431 = vmatprep.subr.mxu0 %v1914
    %2432 = vmatpush1.msra.mxu0 %v1913
    %2433 = vmatprep.subr.mxu0 %v1918
    %2434 = vmatpush1.msra.mxu0 %v1917
    %2435 = vmatprep.subr.mxu0 %v1922
    %2436 = vmatpush1.msra.mxu0 %v1921
    %2437 = vmatprep.subr.mxu0 %v1926
    %2438 = vmatpush1.msra.mxu0 %v1925
    %2439 = vmatprep.subr.mxu0 %v1930
    %2440 = vmatpush1.msra.mxu0 %v1929
    %2441 = vmatprep.subr.mxu0 %v1934
    %2442 = vmatpush1.msra.mxu0 %v1933
    %2443 = vmatprep.subr.mxu0 %v1938
    %2444 = vmatpush1.msra.mxu0 %v1937
    %2445 = vmatprep.subr.mxu0 %v1942
    %2446 = vmatpush1.msra.mxu0 %v1941
    %2447 = vmatprep.subr.mxu0 %v1946
    %2448 = vmatpush1.msra.mxu0 %v1945
    %2449 = vmatprep.subr.mxu0 %v1950
    %2450 = vmatpush1.msra.mxu0 %v1949
    %2451 = vmatprep.subr.mxu0 %v1954
    %2452 = vmatpush1.msra.mxu0 %v1953
    %2453 = vmatprep.subr.mxu0 %v1958
    %2454 = vmatpush1.msra.mxu0 %v1957
    %2455 = vmatprep.subr.mxu0 %v1962
    %2456 = vmatpush1.msra.mxu0 %v1961
    %2457 = vmatprep.subr.mxu0 %v1966
    %2458 = vmatpush1.msra.mxu0 %v1965
    %2459 = vmatprep.subr.mxu0 %v1970
    %2460 = vmatpush1.msra.mxu0 %v1969
    %2461 = vmatprep.subr.mxu0 %v1974
    %2462 = vmatpush1.msra.mxu0 %v1973
    %2463 = vmatprep.mubr.f32.mxu0 %v1840
    %2464 = vmatmul.mubr.f32.gmra.mrb[0].mxu0 %v1839
    %v2465 = vpop.f32.mrb[0].mxu0
    %v2466 = vadd.f32 %v2386, %v2465
    %v2467 = vpop.f32.mrb[0].mxu0
    %v2468 = vadd.f32 %v2390, %v2467
    %2469 = vdwg.mxu0
    %2470 = vmatprep.subr.mxu0 %v1978
    %2471 = vmatpush1.msra.mxu0 %v1977
    %2472 = vmatprep.subr.mxu0 %v1982
    %2473 = vmatpush1.msra.mxu0 %v1981
    %2474 = vmatprep.subr.mxu0 %v1986
    %2475 = vmatpush1.msra.mxu0 %v1985
    %2476 = vmatprep.subr.mxu0 %v1990
    %2477 = vmatpush1.msra.mxu0 %v1989
    %2478 = vmatprep.subr.mxu0 %v1994
    %2479 = vmatpush1.msra.mxu0 %v1993
    %2480 = vmatprep.subr.mxu0 %v1998
    %2481 = vmatpush1.msra.mxu0 %v1997
    %2482 = vmatprep.subr.mxu0 %v2002
    %2483 = vmatpush1.msra.mxu0 %v2001
    %2484 = vmatprep.subr.mxu0 %v2006
    %2485 = vmatpush1.msra.mxu0 %v2005
    %2486 = vmatprep.subr.mxu0 %v2010
    %2487 = vmatpush1.msra.mxu0 %v2009
    %2488 = vmatprep.subr.mxu0 %v2014
    %2489 = vmatpush1.msra.mxu0 %v2013
    %2490 = vmatprep.subr.mxu0 %v2018
    %2491 = vmatpush1.msra.mxu0 %v2017
    %2492 = vmatprep.subr.mxu0 %v2022
    %2493 = vmatpush1.msra.mxu0 %v2021
    %2494 = vmatprep.subr.mxu0 %v2026
    %2495 = vmatpush1.msra.mxu0 %v2025
    %2496 = vmatprep.subr.mxu0 %v2030
    %2497 = vmatpush1.msra.mxu0 %v2029
    %2498 = vmatprep.subr.mxu0 %v2034
    %2499 = vmatpush1.msra.mxu0 %v2033
    %2500 = vmatprep.subr.mxu0 %v2038
    %2501 = vmatpush1.msra.mxu0 %v2037
    %2502 = vmatprep.subr.mxu0 %v2042
    %2503 = vmatpush1.msra.mxu0 %v2041
    %2504 = vmatprep.subr.mxu0 %v2046
    %2505 = vmatpush1.msra.mxu0 %v2045
    %2506 = vmatprep.subr.mxu0 %v2050
    %2507 = vmatpush1.msra.mxu0 %v2049
    %2508 = vmatprep.subr.mxu0 %v2054
    %2509 = vmatpush1.msra.mxu0 %v2053
    %2510 = vmatprep.subr.mxu0 %v2058
    %2511 = vmatpush1.msra.mxu0 %v2057
    %2512 = vmatprep.subr.mxu0 %v2062
    %2513 = vmatpush1.msra.mxu0 %v2061
    %2514 = vmatprep.subr.mxu0 %v2066
    %2515 = vmatpush1.msra.mxu0 %v2065
    %2516 = vmatprep.subr.mxu0 %v2070
    %2517 = vmatpush1.msra.mxu0 %v2069
    %2518 = vmatprep.subr.mxu0 %v2074
    %2519 = vmatpush1.msra.mxu0 %v2073
    %2520 = vmatprep.subr.mxu0 %v2078
    %2521 = vmatpush1.msra.mxu0 %v2077
    %2522 = vmatprep.subr.mxu0 %v2082
    %2523 = vmatpush1.msra.mxu0 %v2081
    %2524 = vmatprep.subr.mxu0 %v2086
    %2525 = vmatpush1.msra.mxu0 %v2085
    %2526 = vmatprep.subr.mxu0 %v2090
    %2527 = vmatpush1.msra.mxu0 %v2089
    %2528 = vmatprep.subr.mxu0 %v2094
    %2529 = vmatpush1.msra.mxu0 %v2093
    %2530 = vmatprep.subr.mxu0 %v2098
    %2531 = vmatpush1.msra.mxu0 %v2097
    %2532 = vmatprep.subr.mxu0 %v2102
    %2533 = vmatpush1.msra.mxu0 %v2101
    %2534 = vmatprep.mubr.f32.mxu0 %v1842
    %2535 = vmatmul.mubr.f32.gmra.mrb[0].mxu0 %v1841
    %v2536 = vpop.f32.mrb[0].mxu0
    %v2537 = vadd.f32 %v2466, %v2536
    %v2538 = vpop.f32.mrb[0].mxu0
    %v2539 = vadd.f32 %v2468, %v2538
    %2540 = vdwg.mxu0
    %2541 = vmatprep.subr.mxu0 %v2106
    %2542 = vmatpush1.msra.mxu0 %v2105
    %2543 = vmatprep.subr.mxu0 %v2110
    %2544 = vmatpush1.msra.mxu0 %v2109
    %2545 = vmatprep.subr.mxu0 %v2114
    %2546 = vmatpush1.msra.mxu0 %v2113
    %2547 = vmatprep.subr.mxu0 %v2118
    %2548 = vmatpush1.msra.mxu0 %v2117
    %2549 = vmatprep.subr.mxu0 %v2122
    %2550 = vmatpush1.msra.mxu0 %v2121
    %2551 = vmatprep.subr.mxu0 %v2126
    %2552 = vmatpush1.msra.mxu0 %v2125
    %2553 = vmatprep.subr.mxu0 %v2130
    %2554 = vmatpush1.msra.mxu0 %v2129
    %2555 = vmatprep.subr.mxu0 %v2134
    %2556 = vmatpush1.msra.mxu0 %v2133
    %2557 = vmatprep.subr.mxu0 %v2138
    %2558 = vmatpush1.msra.mxu0 %v2137
    %2559 = vmatprep.subr.mxu0 %v2142
    %2560 = vmatpush1.msra.mxu0 %v2141
    %2561 = vmatprep.subr.mxu0 %v2146
    %2562 = vmatpush1.msra.mxu0 %v2145
    %2563 = vmatprep.subr.mxu0 %v2150
    %2564 = vmatpush1.msra.mxu0 %v2149
    %2565 = vmatprep.subr.mxu0 %v2154
    %2566 = vmatpush1.msra.mxu0 %v2153
    %2567 = vmatprep.subr.mxu0 %v2158
    %2568 = vmatpush1.msra.mxu0 %v2157
    %2569 = vmatprep.subr.mxu0 %v2162
    %2570 = vmatpush1.msra.mxu0 %v2161
    %2571 = vmatprep.subr.mxu0 %v2166
    %2572 = vmatpush1.msra.mxu0 %v2165
    %2573 = vmatprep.subr.mxu0 %v2170
    %2574 = vmatpush1.msra.mxu0 %v2169
    %2575 = vmatprep.subr.mxu0 %v2174
    %2576 = vmatpush1.msra.mxu0 %v2173
    %2577 = vmatprep.subr.mxu0 %v2178
    %2578 = vmatpush1.msra.mxu0 %v2177
    %2579 = vmatprep.subr.mxu0 %v2182
    %2580 = vmatpush1.msra.mxu0 %v2181
    %2581 = vmatprep.subr.mxu0 %v2186
    %2582 = vmatpush1.msra.mxu0 %v2185
    %2583 = vmatprep.subr.mxu0 %v2190
    %2584 = vmatpush1.msra.mxu0 %v2189
    %2585 = vmatprep.subr.mxu0 %v2194
    %2586 = vmatpush1.msra.mxu0 %v2193
    %2587 = vmatprep.subr.mxu0 %v2198
    %2588 = vmatpush1.msra.mxu0 %v2197
    %2589 = vmatprep.subr.mxu0 %v2202
    %2590 = vmatpush1.msra.mxu0 %v2201
    %2591 = vmatprep.subr.mxu0 %v2206
    %2592 = vmatpush1.msra.mxu0 %v2205
    %2593 = vmatprep.subr.mxu0 %v2210
    %2594 = vmatpush1.msra.mxu0 %v2209
    %2595 = vmatprep.subr.mxu0 %v2214
    %2596 = vmatpush1.msra.mxu0 %v2213
    %2597 = vmatprep.subr.mxu0 %v2218
    %2598 = vmatpush1.msra.mxu0 %v2217
    %2599 = vmatprep.subr.mxu0 %v2222
    %2600 = vmatpush1.msra.mxu0 %v2221
    %2601 = vmatprep.subr.mxu0 %v2226
    %2602 = vmatpush1.msra.mxu0 %v2225
    %2603 = vmatprep.subr.mxu0 %v2230
    %2604 = vmatpush1.msra.mxu0 %v2229
    %2605 = vmatprep.mubr.f32.mxu0 %v1844
    %2606 = vmatmul.mubr.f32.gmra.mrb[0].mxu0 %v1843
    %v2607 = vpop.f32.mrb[0].mxu0
    %v2608 = vadd.f32 %v2537, %v2607
    %v2609 = vpop.f32.mrb[0].mxu0
    %v2610 = vadd.f32 %v2539, %v2609
    %2611 = vdwg.mxu0
    %2612 = vmatprep.subr.mxu0 %v2234
    %2613 = vmatpush1.msra.mxu0 %v2233
    %2614 = vmatprep.subr.mxu0 %v2238
    %2615 = vmatpush1.msra.mxu0 %v2237
    %2616 = vmatprep.subr.mxu0 %v2242
    %2617 = vmatpush1.msra.mxu0 %v2241
    %2618 = vmatprep.subr.mxu0 %v2246
    %2619 = vmatpush1.msra.mxu0 %v2245
    %2620 = vmatprep.subr.mxu0 %v2250
    %2621 = vmatpush1.msra.mxu0 %v2249
    %2622 = vmatprep.subr.mxu0 %v2254
    %2623 = vmatpush1.msra.mxu0 %v2253
    %2624 = vmatprep.subr.mxu0 %v2258
    %2625 = vmatpush1.msra.mxu0 %v2257
    %2626 = vmatprep.subr.mxu0 %v2262
    %2627 = vmatpush1.msra.mxu0 %v2261
    %2628 = vmatprep.subr.mxu0 %v2266
    %2629 = vmatpush1.msra.mxu0 %v2265
    %2630 = vmatprep.subr.mxu0 %v2270
    %2631 = vmatpush1.msra.mxu0 %v2269
    %2632 = vmatprep.subr.mxu0 %v2274
    %2633 = vmatpush1.msra.mxu0 %v2273
    %2634 = vmatprep.subr.mxu0 %v2278
    %2635 = vmatpush1.msra.mxu0 %v2277
    %2636 = vmatprep.subr.mxu0 %v2282
    %2637 = vmatpush1.msra.mxu0 %v2281
    %2638 = vmatprep.subr.mxu0 %v2286
    %2639 = vmatpush1.msra.mxu0 %v2285
    %2640 = vmatprep.subr.mxu0 %v2290
    %2641 = vmatpush1.msra.mxu0 %v2289
    %2642 = vmatprep.subr.mxu0 %v2294
    %2643 = vmatpush1.msra.mxu0 %v2293
    %2644 = vmatprep.subr.mxu0 %v2298
    %2645 = vmatpush1.msra.mxu0 %v2297
    %2646 = vmatprep.subr.mxu0 %v2302
    %2647 = vmatpush1.msra.mxu0 %v2301
    %2648 = vmatprep.subr.mxu0 %v2306
    %2649 = vmatpush1.msra.mxu0 %v2305
    %2650 = vmatprep.subr.mxu0 %v2310
    %2651 = vmatpush1.msra.mxu0 %v2309
    %2652 = vmatprep.subr.mxu0 %v2314
    %2653 = vmatpush1.msra.mxu0 %v2313
    %2654 = vmatprep.subr.mxu0 %v2318
    %2655 = vmatpush1.msra.mxu0 %v2317
    %2656 = vmatprep.subr.mxu0 %v2322
    %2657 = vmatpush1.msra.mxu0 %v2321
    %2658 = vmatprep.subr.mxu0 %v2326
    %2659 = vmatpush1.msra.mxu0 %v2325
    %2660 = vmatprep.subr.mxu0 %v2330
    %2661 = vmatpush1.msra.mxu0 %v2329
    %2662 = vmatprep.subr.mxu0 %v2334
    %2663 = vmatpush1.msra.mxu0 %v2333
    %2664 = vmatprep.subr.mxu0 %v2338
    %2665 = vmatpush1.msra.mxu0 %v2337
    %2666 = vmatprep.subr.mxu0 %v2342
    %2667 = vmatpush1.msra.mxu0 %v2341
    %2668 = vmatprep.subr.mxu0 %v2346
    %2669 = vmatpush1.msra.mxu0 %v2345
    %2670 = vmatprep.subr.mxu0 %v2350
    %2671 = vmatpush1.msra.mxu0 %v2349
    %2672 = vmatprep.subr.mxu0 %v2354
    %2673 = vmatpush1.msra.mxu0 %v2353
    %2674 = vmatprep.subr.mxu0 %v2358
    %2675 = vmatpush1.msra.mxu0 %v2357
    %2676 = vmatprep.mubr.f32.mxu0 %v1846
    %2677 = vmatmul.mubr.f32.gmra.mrb[0].mxu0 %v1845
    %v2678 = vpop.f32.mrb[0].mxu0
    %v2679 = vadd.f32 %v2608, %v2678
    %v2680 = vpop.f32.mrb[0].mxu0
    %v2681 = vadd.f32 %v2610, %v2680
    %2682 = vdwg.mxu0
    %2683 = vmatprep.subr.mxu0 %v1852
    %2684 = vmatpush1.msra.mxu0 %v1851
    %2685 = vmatprep.subr.mxu0 %v1856
    %2686 = vmatpush1.msra.mxu0 %v1855
    %2687 = vmatprep.subr.mxu0 %v1860
    %2688 = vmatpush1.msra.mxu0 %v1859
    %2689 = vmatprep.subr.mxu0 %v1864
    %2690 = vmatpush1.msra.mxu0 %v1863
    %2691 = vmatprep.subr.mxu0 %v1868
    %2692 = vmatpush1.msra.mxu0 %v1867
    %2693 = vmatprep.subr.mxu0 %v1872
    %2694 = vmatpush1.msra.mxu0 %v1871
    %2695 = vmatprep.subr.mxu0 %v1876
    %2696 = vmatpush1.msra.mxu0 %v1875
    %2697 = vmatprep.subr.mxu0 %v1880
    %2698 = vmatpush1.msra.mxu0 %v1879
    %2699 = vmatprep.subr.mxu0 %v1884
    %2700 = vmatpush1.msra.mxu0 %v1883
    %2701 = vmatprep.subr.mxu0 %v1888
    %2702 = vmatpush1.msra.mxu0 %v1887
    %2703 = vmatprep.subr.mxu0 %v1892
    %2704 = vmatpush1.msra.mxu0 %v1891
    %2705 = vmatprep.subr.mxu0 %v1896
    %2706 = vmatpush1.msra.mxu0 %v1895
    %2707 = vmatprep.subr.mxu0 %v1900
    %2708 = vmatpush1.msra.mxu0 %v1899
    %2709 = vmatprep.subr.mxu0 %v1904
    %2710 = vmatpush1.msra.mxu0 %v1903
    %2711 = vmatprep.subr.mxu0 %v1908
    %2712 = vmatpush1.msra.mxu0 %v1907
    %2713 = vmatprep.subr.mxu0 %v1912
    %2714 = vmatpush1.msra.mxu0 %v1911
    %2715 = vmatprep.subr.mxu0 %v1916
    %2716 = vmatpush1.msra.mxu0 %v1915
    %2717 = vmatprep.subr.mxu0 %v1920
    %2718 = vmatpush1.msra.mxu0 %v1919
    %2719 = vmatprep.subr.mxu0 %v1924
    %2720 = vmatpush1.msra.mxu0 %v1923
    %2721 = vmatprep.subr.mxu0 %v1928
    %2722 = vmatpush1.msra.mxu0 %v1927
    %2723 = vmatprep.subr.mxu0 %v1932
    %2724 = vmatpush1.msra.mxu0 %v1931
    %2725 = vmatprep.subr.mxu0 %v1936
    %2726 = vmatpush1.msra.mxu0 %v1935
    %2727 = vmatprep.subr.mxu0 %v1940
    %2728 = vmatpush1.msra.mxu0 %v1939
    %2729 = vmatprep.subr.mxu0 %v1944
    %2730 = vmatpush1.msra.mxu0 %v1943
    %2731 = vmatprep.subr.mxu0 %v1948
    %2732 = vmatpush1.msra.mxu0 %v1947
    %2733 = vmatprep.subr.mxu0 %v1952
    %2734 = vmatpush1.msra.mxu0 %v1951
    %2735 = vmatprep.subr.mxu0 %v1956
    %2736 = vmatpush1.msra.mxu0 %v1955
    %2737 = vmatprep.subr.mxu0 %v1960
    %2738 = vmatpush1.msra.mxu0 %v1959
    %2739 = vmatprep.subr.mxu0 %v1964
    %2740 = vmatpush1.msra.mxu0 %v1963
    %2741 = vmatprep.subr.mxu0 %v1968
    %2742 = vmatpush1.msra.mxu0 %v1967
    %2743 = vmatprep.subr.mxu0 %v1972
    %2744 = vmatpush1.msra.mxu0 %v1971
    %2745 = vmatprep.subr.mxu0 %v1976
    %2746 = vmatpush1.msra.mxu0 %v1975
    %2747 = vmatprep.mubr.f32.mxu0 %v1840
    %2748 = vmatmul.mubr.f32.gmra.mrb[0].mxu0 %v1839
    %v2749 = vpop.f32.mrb[0].mxu0
    %v2750 = vadd.f32 %v2394, %v2749
    %v2751 = vpop.f32.mrb[0].mxu0
    %v2752 = vadd.f32 %v2398, %v2751
    %2753 = vdwg.mxu0
    %2754 = vmatprep.subr.mxu0 %v1980
    %2755 = vmatpush1.msra.mxu0 %v1979
    %2756 = vmatprep.subr.mxu0 %v1984
    %2757 = vmatpush1.msra.mxu0 %v1983
    %2758 = vmatprep.subr.mxu0 %v1988
    %2759 = vmatpush1.msra.mxu0 %v1987
    %2760 = vmatprep.subr.mxu0 %v1992
    %2761 = vmatpush1.msra.mxu0 %v1991
    %2762 = vmatprep.subr.mxu0 %v1996
    %2763 = vmatpush1.msra.mxu0 %v1995
    %2764 = vmatprep.subr.mxu0 %v2000
    %2765 = vmatpush1.msra.mxu0 %v1999
    %2766 = vmatprep.subr.mxu0 %v2004
    %2767 = vmatpush1.msra.mxu0 %v2003
    %2768 = vmatprep.subr.mxu0 %v2008
    %2769 = vmatpush1.msra.mxu0 %v2007
    %2770 = vmatprep.subr.mxu0 %v2012
    %2771 = vmatpush1.msra.mxu0 %v2011
    %2772 = vmatprep.subr.mxu0 %v2016
    %2773 = vmatpush1.msra.mxu0 %v2015
    %2774 = vmatprep.subr.mxu0 %v2020
    %2775 = vmatpush1.msra.mxu0 %v2019
    %2776 = vmatprep.subr.mxu0 %v2024
    %2777 = vmatpush1.msra.mxu0 %v2023
    %2778 = vmatprep.subr.mxu0 %v2028
    %2779 = vmatpush1.msra.mxu0 %v2027
    %2780 = vmatprep.subr.mxu0 %v2032
    %2781 = vmatpush1.msra.mxu0 %v2031
    %2782 = vmatprep.subr.mxu0 %v2036
    %2783 = vmatpush1.msra.mxu0 %v2035
    %2784 = vmatprep.subr.mxu0 %v2040
    %2785 = vmatpush1.msra.mxu0 %v2039
    %2786 = vmatprep.subr.mxu0 %v2044
    %2787 = vmatpush1.msra.mxu0 %v2043
    %2788 = vmatprep.subr.mxu0 %v2048
    %2789 = vmatpush1.msra.mxu0 %v2047
    %2790 = vmatprep.subr.mxu0 %v2052
    %2791 = vmatpush1.msra.mxu0 %v2051
    %2792 = vmatprep.subr.mxu0 %v2056
    %2793 = vmatpush1.msra.mxu0 %v2055
    %2794 = vmatprep.subr.mxu0 %v2060
    %2795 = vmatpush1.msra.mxu0 %v2059
    %2796 = vmatprep.subr.mxu0 %v2064
    %2797 = vmatpush1.msra.mxu0 %v2063
    %2798 = vmatprep.subr.mxu0 %v2068
    %2799 = vmatpush1.msra.mxu0 %v2067
    %2800 = vmatprep.subr.mxu0 %v2072
    %2801 = vmatpush1.msra.mxu0 %v2071
    %2802 = vmatprep.subr.mxu0 %v2076
    %2803 = vmatpush1.msra.mxu0 %v2075
    %2804 = vmatprep.subr.mxu0 %v2080
    %2805 = vmatpush1.msra.mxu0 %v2079
    %2806 = vmatprep.subr.mxu0 %v2084
    %2807 = vmatpush1.msra.mxu0 %v2083
    %2808 = vmatprep.subr.mxu0 %v2088
    %2809 = vmatpush1.msra.mxu0 %v2087
    %2810 = vmatprep.subr.mxu0 %v2092
    %2811 = vmatpush1.msra.mxu0 %v2091
    %2812 = vmatprep.subr.mxu0 %v2096
    %2813 = vmatpush1.msra.mxu0 %v2095
    %2814 = vmatprep.subr.mxu0 %v2100
    %2815 = vmatpush1.msra.mxu0 %v2099
    %2816 = vmatprep.subr.mxu0 %v2104
    %2817 = vmatpush1.msra.mxu0 %v2103
    %2818 = vmatprep.mubr.f32.mxu0 %v1842
    %2819 = vmatmul.mubr.f32.gmra.mrb[0].mxu0 %v1841
    %v2820 = vpop.f32.mrb[0].mxu0
    %v2821 = vadd.f32 %v2750, %v2820
    %v2822 = vpop.f32.mrb[0].mxu0
    %v2823 = vadd.f32 %v2752, %v2822
    %2824 = vdwg.mxu0
    %2825 = vmatprep.subr.mxu0 %v2108
    %2826 = vmatpush1.msra.mxu0 %v2107
    %2827 = vmatprep.subr.mxu0 %v2112
    %2828 = vmatpush1.msra.mxu0 %v2111
    %2829 = vmatprep.subr.mxu0 %v2116
    %2830 = vmatpush1.msra.mxu0 %v2115
    %2831 = vmatprep.subr.mxu0 %v2120
    %2832 = vmatpush1.msra.mxu0 %v2119
    %2833 = vmatprep.subr.mxu0 %v2124
    %2834 = vmatpush1.msra.mxu0 %v2123
    %2835 = vmatprep.subr.mxu0 %v2128
    %2836 = vmatpush1.msra.mxu0 %v2127
    %2837 = vmatprep.subr.mxu0 %v2132
    %2838 = vmatpush1.msra.mxu0 %v2131
    %2839 = vmatprep.subr.mxu0 %v2136
    %2840 = vmatpush1.msra.mxu0 %v2135
    %2841 = vmatprep.subr.mxu0 %v2140
    %2842 = vmatpush1.msra.mxu0 %v2139
    %2843 = vmatprep.subr.mxu0 %v2144
    %2844 = vmatpush1.msra.mxu0 %v2143
    %2845 = vmatprep.subr.mxu0 %v2148
    %2846 = vmatpush1.msra.mxu0 %v2147
    %2847 = vmatprep.subr.mxu0 %v2152
    %2848 = vmatpush1.msra.mxu0 %v2151
    %2849 = vmatprep.subr.mxu0 %v2156
    %2850 = vmatpush1.msra.mxu0 %v2155
    %2851 = vmatprep.subr.mxu0 %v2160
    %2852 = vmatpush1.msra.mxu0 %v2159
    %2853 = vmatprep.subr.mxu0 %v2164
    %2854 = vmatpush1.msra.mxu0 %v2163
    %2855 = vmatprep.subr.mxu0 %v2168
    %2856 = vmatpush1.msra.mxu0 %v2167
    %2857 = vmatprep.subr.mxu0 %v2172
    %2858 = vmatpush1.msra.mxu0 %v2171
    %2859 = vmatprep.subr.mxu0 %v2176
    %2860 = vmatpush1.msra.mxu0 %v2175
    %2861 = vmatprep.subr.mxu0 %v2180
    %2862 = vmatpush1.msra.mxu0 %v2179
    %2863 = vmatprep.subr.mxu0 %v2184
    %2864 = vmatpush1.msra.mxu0 %v2183
    %2865 = vmatprep.subr.mxu0 %v2188
    %2866 = vmatpush1.msra.mxu0 %v2187
    %2867 = vmatprep.subr.mxu0 %v2192
    %2868 = vmatpush1.msra.mxu0 %v2191
    %2869 = vmatprep.subr.mxu0 %v2196
    %2870 = vmatpush1.msra.mxu0 %v2195
    %2871 = vmatprep.subr.mxu0 %v2200
    %2872 = vmatpush1.msra.mxu0 %v2199
    %2873 = vmatprep.subr.mxu0 %v2204
    %2874 = vmatpush1.msra.mxu0 %v2203
    %2875 = vmatprep.subr.mxu0 %v2208
    %2876 = vmatpush1.msra.mxu0 %v2207
    %2877 = vmatprep.subr.mxu0 %v2212
    %2878 = vmatpush1.msra.mxu0 %v2211
    %2879 = vmatprep.subr.mxu0 %v2216
    %2880 = vmatpush1.msra.mxu0 %v2215
    %2881 = vmatprep.subr.mxu0 %v2220
    %2882 = vmatpush1.msra.mxu0 %v2219
    %2883 = vmatprep.subr.mxu0 %v2224
    %2884 = vmatpush1.msra.mxu0 %v2223
    %2885 = vmatprep.subr.mxu0 %v2228
    %2886 = vmatpush1.msra.mxu0 %v2227
    %2887 = vmatprep.subr.mxu0 %v2232
    %2888 = vmatpush1.msra.mxu0 %v2231
    %2889 = vmatprep.mubr.f32.mxu0 %v1844
    %2890 = vmatmul.mubr.f32.gmra.mrb[0].mxu0 %v1843
    %v2891 = vpop.f32.mrb[0].mxu0
    %v2892 = vadd.f32 %v2821, %v2891
    %v2893 = vpop.f32.mrb[0].mxu0
    %v2894 = vadd.f32 %v2823, %v2893
    %2895 = vdwg.mxu0
    %2896 = vmatprep.subr.mxu0 %v2236
    %2897 = vmatpush1.msra.mxu0 %v2235
    %2898 = vmatprep.subr.mxu0 %v2240
    %2899 = vmatpush1.msra.mxu0 %v2239
    %2900 = vmatprep.subr.mxu0 %v2244
    %2901 = vmatpush1.msra.mxu0 %v2243
    %2902 = vmatprep.subr.mxu0 %v2248
    %2903 = vmatpush1.msra.mxu0 %v2247
    %2904 = vmatprep.subr.mxu0 %v2252
    %2905 = vmatpush1.msra.mxu0 %v2251
    %2906 = vmatprep.subr.mxu0 %v2256
    %2907 = vmatpush1.msra.mxu0 %v2255
    %2908 = vmatprep.subr.mxu0 %v2260
    %2909 = vmatpush1.msra.mxu0 %v2259
    %2910 = vmatprep.subr.mxu0 %v2264
    %2911 = vmatpush1.msra.mxu0 %v2263
    %2912 = vmatprep.subr.mxu0 %v2268
    %2913 = vmatpush1.msra.mxu0 %v2267
    %2914 = vmatprep.subr.mxu0 %v2272
    %2915 = vmatpush1.msra.mxu0 %v2271
    %2916 = vmatprep.subr.mxu0 %v2276
    %2917 = vmatpush1.msra.mxu0 %v2275
    %2918 = vmatprep.subr.mxu0 %v2280
    %2919 = vmatpush1.msra.mxu0 %v2279
    %2920 = vmatprep.subr.mxu0 %v2284
    %2921 = vmatpush1.msra.mxu0 %v2283
    %2922 = vmatprep.subr.mxu0 %v2288
    %2923 = vmatpush1.msra.mxu0 %v2287
    %2924 = vmatprep.subr.mxu0 %v2292
    %2925 = vmatpush1.msra.mxu0 %v2291
    %2926 = vmatprep.subr.mxu0 %v2296
    %2927 = vmatpush1.msra.mxu0 %v2295
    %2928 = vmatprep.subr.mxu0 %v2300
    %2929 = vmatpush1.msra.mxu0 %v2299
    %2930 = vmatprep.subr.mxu0 %v2304
    %2931 = vmatpush1.msra.mxu0 %v2303
    %2932 = vmatprep.subr.mxu0 %v2308
    %2933 = vmatpush1.msra.mxu0 %v2307
    %2934 = vmatprep.subr.mxu0 %v2312
    %2935 = vmatpush1.msra.mxu0 %v2311
    %2936 = vmatprep.subr.mxu0 %v2316
    %2937 = vmatpush1.msra.mxu0 %v2315
    %2938 = vmatprep.subr.mxu0 %v2320
    %2939 = vmatpush1.msra.mxu0 %v2319
    %2940 = vmatprep.subr.mxu0 %v2324
    %2941 = vmatpush1.msra.mxu0 %v2323
    %2942 = vmatprep.subr.mxu0 %v2328
    %2943 = vmatpush1.msra.mxu0 %v2327
    %2944 = vmatprep.subr.mxu0 %v2332
    %2945 = vmatpush1.msra.mxu0 %v2331
    %2946 = vmatprep.subr.mxu0 %v2336
    %2947 = vmatpush1.msra.mxu0 %v2335
    %2948 = vmatprep.subr.mxu0 %v2340
    %2949 = vmatpush1.msra.mxu0 %v2339
    %2950 = vmatprep.subr.mxu0 %v2344
    %2951 = vmatpush1.msra.mxu0 %v2343
    %2952 = vmatprep.subr.mxu0 %v2348
    %2953 = vmatpush1.msra.mxu0 %v2347
    %2954 = vmatprep.subr.mxu0 %v2352
    %2955 = vmatpush1.msra.mxu0 %v2351
    %2956 = vmatprep.subr.mxu0 %v2356
    %2957 = vmatpush1.msra.mxu0 %v2355
    %2958 = vmatprep.subr.mxu0 %v2360
    %2959 = vmatpush1.msra.mxu0 %v2359
    %2960 = vmatprep.mubr.f32.mxu0 %v1846
    %2961 = vmatmul.mubr.f32.gmra.mrb[0].mxu0 %v1845
    %v2962 = vpop.f32.mrb[0].mxu0
    %v2963 = vadd.f32 %v2892, %v2962
    %v2964 = vpop.f32.mrb[0].mxu0
    %v2965 = vadd.f32 %v2894, %v2964
    %2966 = vdwg.mxu0
    %vm2967 = vcmp.gt.f32.partialorder %v2679, 0.0
    %vm2968 = vcmp.gt.f32.partialorder %v2681, 0.0
    %vm2969 = vcmp.gt.f32.partialorder %v2963, 0.0
    %vm2970 = vcmp.gt.f32.partialorder %v2965, 0.0
    %v2971 = vmul.f32 %v2679, 0.2
    %v2972 = vmul.f32 %v2681, 0.2
    %v2973 = vmul.f32 %v2963, 0.2
    %v2974 = vmul.f32 %v2965, 0.2
    %v2975 = vsel %vm2967, %v2679, %v2971
    %v2976 = vsel %vm2968, %v2681, %v2972
    %v2977 = vsel %vm2969, %v2963, %v2973
    %v2978 = vsel %vm2970, %v2965, %v2974
    %v2979 = vlaneseq
    %v2980 = vshrl.u32 %v2979, 7
    %v2981 = vsub.s32 1, %v2980
    %v2982 = vrot.slane %v1847, %v2981
    %v2983 = vlaneseq
    %v2984 = vshrl.u32 %v2983, 7
    %v2985 = vsub.s32 5, %v2984
    %v2986 = vrot.slane %v1847, %v2985
    %v2987 = vlaneseq
    %v2988 = vshrl.u32 %v2987, 7
    %v2989 = vsub.s32 1, %v2988
    %v2990 = vrot.slane %v1848, %v2989
    %v2991 = vlaneseq
    %v2992 = vshrl.u32 %v2991, 7
    %v2993 = vsub.s32 5, %v2992
    %v2994 = vrot.slane %v1848, %v2993
    %v2999 = vlaneseq
    %v3000 = vshrl.u32 %v2999, 7
    %v3001 = vsub.s32 1, %v3000
    %v3002 = vrot.slane %v2982, %v3001
    %v3003 = vlaneseq
    %v3004 = vshrl.u32 %v3003, 7
    %v3005 = vsub.s32 1, %v3004
    %v3006 = vrot.slane %v2986, %v3005
    %v3007 = vlaneseq
    %v3008 = vshrl.u32 %v3007, 7
    %v3009 = vsub.s32 1, %v3008
    %v3010 = vrot.slane %v2990, %v3009
    %v3011 = vlaneseq
    %v3012 = vshrl.u32 %v3011, 7
    %v3013 = vsub.s32 1, %v3012
    %v3014 = vrot.slane %v2994, %v3013
    %v3015 = vmul.f32 %v2975, %v3002
    %v3016 = vmul.f32 %v2976, %v3006
    %v3017 = vmul.f32 %v2977, %v3010
    %v3018 = vmul.f32 %v2978, %v3014
    %v3019 = vsel %vm196, %v3015, 0.0
    %v3020 = vsel %vm196, %v3016, 0.0
    %v3021 = vadd.f32 %v3019, %v3020
    %v3022 = vsel %vm196, %v3017, 0.0
    %v3023 = vadd.f32 %v3021, %v3022
    %v3024 = vsel %vm196, %v3018, 0.0
    %v3025 = vadd.f32 %v3023, %v3024
    %3026 = vadd.xlane.f32.xlu0 %v3025
    %v3027 = vpop.xlane.xlu0 %3026
    %v3028 = vlaneseq
    %v3029 = vshrl.u32 %v3028, 7
    %v3030 = vsub.s32 2, %v3029
    %v3031 = vrot.slane %v1847, %v3030
    %v3032 = vadd.f32 %v3027, %v3031
    %vm3033 = vcmask 1024
    %3034 = vst.msk [vmem:[%s8] sm:$0x3] %vm3033, %v3032
    // Predicated region
    $region58: #{multimodal_gan_forward.1} parent=1 // pred_check
      _
    $region59: #{multimodal_gan_forward.1} parent=1 // pred_check_branch
      %3036 = sbr.rel (0) target = $region61
    $region60: #{multimodal_gan_forward.1} parent=1 // pred_region
      _
    $region61: #{multimodal_gan_forward.1} parent=1 // pred_fallthru
      _
    // Predicated region
    $region62: #{multimodal_gan_forward.1} parent=1 // pred_check
      _
    $region63: #{multimodal_gan_forward.1} parent=1 // pred_check_branch
      %3038 = sbr.rel (0) target = $region65
    $region64: #{multimodal_gan_forward.1} parent=1 // pred_region
      _
    $region65: #{multimodal_gan_forward.1} parent=1 // pred_fallthru
      _
    %3039 = vsyncpa [#allocation3], 1
    %3040 = vsyncpa [#allocation5], 1
    %3041 = vsyncpa [#allocation8], 1
    %3042 = vsyncpa [#allocation11], 1

</llo_original>
